<compile_context>
chip_gen: v7x
topology: tpu7x:2x2x1
jax: 0.10.0
libtpu: 0.0.40
codegen_flags: <defaults>
</compile_context>

<pallas_src>
import math

import jax
import jax.numpy as jnp
import numpy as np
from jax.experimental import pallas as pl
from jax.experimental.pallas import tpu as pltpu


def _cdiv(a: int, b: int) -> int:
    return -(-a // b)


def _make_resample_kernel(bn, bk, p, q, scale, num_zeros):
    """Banded windowed-sinc resample kernel.

    Grid step (j, k): output tile j (bn lane-dense output samples) accumulates
    the contribution of the k-th bk-wide input block of its band.  The filter
    tile is generated in-kernel; d = num * (scale / p) with `num` an exact
    int32 phase numerator, so the sinc argument stays accurate for arbitrarily
    long signals.
    """
    pi = math.pi
    d_small = 1e-6
    cos_k = pi / float(num_zeros)
    d_scale = float(scale) / float(p)

    def kernel(start_ref, base_ref, x_ref, o_ref, acc_ref):
        j = pl.program_id(0)
        k = pl.program_id(1)

        @pl.when(k == 0)
        def _init():
            acc_ref[...] = jnp.zeros_like(acc_ref)

        rows = jax.lax.broadcasted_iota(jnp.int32, (bk, bn), 0)   # input sample in block
        cols = jax.lax.broadcasted_iota(jnp.int32, (bk, bn), 1)   # output sample in tile

        # Exact integer numerator of (t_out - t_in) * p (input-sample units).
        num = (base_ref[j] - k * (bk * p)) + cols * q - rows * p
        d = num.astype(jnp.float32) * d_scale                     # windowed-sinc argument
        ad = jnp.abs(d)
        pid = pi * d
        small = ad < d_small
        sinc = jnp.where(small, 1.0, jnp.sin(pid) / jnp.where(small, 1.0, pid))
        win = jnp.where(ad < float(num_zeros),
                        0.5 * (1.0 + jnp.cos(cos_k * d)), 0.0)
        w = (scale * sinc) * win                                  # (bk, bn) filter tile

        # TODO(synk): for large batch a polyphase frame-gather layout would fill
        # the MXU M dim; at small batch the kernel is bound by the VPU/EUP
        # filter synthesis, which pipelines against the streaming DMAs anyway.
        acc_ref[...] += jnp.dot(x_ref[...], w, preferred_element_type=jnp.float32)

        @pl.when(k == pl.num_programs(1) - 1)
        def _finalize():
            o_ref[...] = acc_ref[...].astype(o_ref.dtype)

    return kernel


class Resample:
    """resampy.resample(x, orig_freq, new_freq, axis=-1) for x of shape (B, T)."""

    # TODO(synk): Hann-windowed sinc (num_zeros zero crossings per side) stands
    # in for resampy's precomputed kaiser_best Kaiser taps; same I/O semantics.

    def __init__(self, orig_freq: int, new_freq: int, *,
                 num_zeros: int = 16, bn: int = 128, bk: int = 128):
        assert orig_freq > 0 and new_freq > 0
        assert bn % 128 == 0 and bk % 128 == 0, "keep tiles lane-dense"
        self.orig_freq = int(orig_freq)
        self.new_freq = int(new_freq)
        self.num_zeros = int(num_zeros)
        self.bn = int(bn)                       # output samples per tile (lanes)
        self.bk = int(bk)                       # input samples per band block (matmul K)
        g = math.gcd(self.orig_freq, self.new_freq)
        self.p = self.new_freq // g             # upsample factor
        self.q = self.orig_freq // g            # downsample factor
        self.scale = min(1.0, self.new_freq / self.orig_freq)
        self.half_width = self.num_zeros / self.scale  # filter half support (input samples)

    def __call__(self, x):
        x = x.astype(jnp.float32)
        B, T = x.shape
        n_out = int(T * self.new_freq / self.orig_freq)   # resampy output length
        assert n_out >= 1
        bn, bk, p, q = self.bn, self.bk, self.p, self.q
        J = _cdiv(n_out, bn)
        n_out_pad = J * bn

        # ---- static band bookkeeping (host side, exact) ----
        j_idx = np.arange(J, dtype=np.int64)
        t_lo = (j_idx * bn) * (q / p)                     # first output time of tile (input units)
        t_hi = ((j_idx + 1) * bn - 1) * (q / p)           # last  output time of tile
        lo = np.floor(t_lo - self.half_width).astype(np.int64) - 1
        hi = np.ceil(t_hi + self.half_width).astype(np.int64) + 1

        pad_left = int(max(0, -int(lo.min())))
        start_blk = (lo + pad_left) // bk                 # first band block per output tile
        end_blk = (hi + pad_left) // bk
        KB = int((end_blk - start_blk).max()) + 1         # band blocks per output tile (static)
        L_total = max(int(start_blk.max() + KB) * bk,
                      _cdiv(pad_left + T, bk) * bk)
        pad_right = L_total - pad_left - T
        x_pad = jnp.pad(x, ((0, 0), (pad_left, pad_right)))

        # exact int32 phase numerator of (t_out0 - t_in0) * p for each tile
        base_num = j_idx * bn * q - (start_blk * bk - pad_left) * p
        assert int(np.abs(base_num).max()) + KB * bk * p + bn * q < 2**31 - 1
        start_blk_j = jnp.asarray(start_blk, dtype=jnp.int32)
        base_num_j = jnp.asarray(base_num, dtype=jnp.int32)

        kernel = _make_resample_kernel(bn, bk, p, q, self.scale, self.num_zeros)

        grid_spec = pltpu.PrefetchScalarGridSpec(
            num_scalar_prefetch=2,                        # start_blk, base_num -> SMEM
            grid=(J, KB),                                 # (output tiles, band blocks)
            in_specs=[
                pl.BlockSpec((B, bk),
                             lambda j, k, start, base: (0, start[j] + k)),
            ],
            out_specs=pl.BlockSpec((B, bn),
                                   lambda j, k, start, base: (0, j)),
            scratch_shapes=[pltpu.VMEM((B, bn), jnp.float32)],
        )
        y_pad = pl.pallas_call(
            kernel,
            grid_spec=grid_spec,
            out_shape=jax.ShapeDtypeStruct((B, n_out_pad), jnp.float32),
            compiler_params=pltpu.CompilerParams(
                dimension_semantics=("parallel", "arbitrary")),
        )(start_blk_j, base_num_j, x_pad)
        return y_pad[:, :n_out]


if __name__ == "__main__":
    key = jax.random.PRNGKey(0)
    B, T = 2, 512
    x = jax.random.normal(key, (B, T), dtype=jnp.float32)

    for orig_freq, new_freq in ((16000, 24000), (16000, 8000)):   # upsample & downsample
        rs = Resample(orig_freq, new_freq)
        y = rs(x)
        jax.block_until_ready(y)
        n_out = int(T * new_freq / orig_freq)
        assert y.shape == (B, n_out) and y.dtype == jnp.float32

        # dense windowed-sinc reference at toy size (same filter as the kernel)
        ratio = new_freq / orig_freq
        scale = min(1.0, ratio)
        nz = rs.num_zeros
        t_out = jnp.arange(n_out, dtype=jnp.float32) / ratio
        diff = (t_out[None, :] - jnp.arange(T, dtype=jnp.float32)[:, None]) * scale
        win = jnp.where(jnp.abs(diff) < nz,
                        0.5 * (1.0 + jnp.cos(math.pi * diff / nz)), 0.0)
        rmat = scale * jnp.sinc(diff) * win
        y_ref = jnp.dot(x, rmat, precision=jax.lax.Precision.HIGHEST)
        err = float(jnp.max(jnp.abs(y - y_ref)))
        assert err < 0.15, f"resample mismatch ({orig_freq}->{new_freq}): max abs err {err}"

    print("KERNEL_OK")
</pallas_src>

<mosaic_0001>
module attributes {stable_mosaic.version = 11 : i64} {
  func.func @kernel(%arg0: i32, %arg1: i32, %arg2: memref<6xi32, #tpu.memory_space<smem>>, %arg3: memref<6xi32, #tpu.memory_space<smem>>, %arg4: memref<2x128xf32, #tpu.memory_space<vmem>>, %arg5: memref<2x128xf32, #tpu.memory_space<vmem>>, %arg6: memref<2x128xf32, #tpu.memory_space<vmem>>) attributes {dimension_semantics = [#tpu.dimension_semantics<parallel>, #tpu.dimension_semantics<arbitrary>], iteration_bounds = array<i64: 6, 2>, scalar_prefetch = 2 : i64, scratch_operands = 1 : i64, tpu.core_type = #tpu.core_type<tc>, window_params = [{transform_indices = @transform_0, window_bounds = array<i64: 2, 128>}, {transform_indices = @transform_1, window_bounds = array<i64: 2, 128>}]} {
    %c0_i32 = arith.constant 0 : i32
    %0 = arith.cmpi eq, %arg1, %c0_i32 : i32
    %1 = arith.extui %0 : i1 to i32
    %c0_i32_0 = arith.constant 0 : i32
    %2 = arith.cmpi ne, %1, %c0_i32_0 : i32
    scf.if %2 {
      %cst_18 = arith.constant 0.000000e+00 : f32
      %52 = vector.broadcast %cst_18 : f32 to vector<2x128xf32>
      %c0_19 = arith.constant 0 : index
      %c0_20 = arith.constant 0 : index
      %53 = vector.load %arg6[%c0_19, %c0_20] : memref<2x128xf32, #tpu.memory_space<vmem>>, vector<2x128xf32>
      tpu.vector_store %arg6[%c0_19, %c0_20], %52 {strides = array<i32>} : memref<2x128xf32, #tpu.memory_space<vmem>>, vector<2x128xf32>,
    } else {
    }
    %3 = tpu.iota {dimensions = array<i32: 0>} : vector<128x128xi32>
    %4 = tpu.iota {dimensions = array<i32: 1>} : vector<128x128xi32>
    %5 = arith.index_cast %arg0 : i32 to index
    %6 = memref.load %arg3[%5] : memref<6xi32, #tpu.memory_space<smem>>
    %c384_i32 = arith.constant 384 : i32
    %7 = arith.muli %arg1, %c384_i32 : i32
    %8 = arith.subi %6, %7 : i32
    %c2_i32 = arith.constant 2 : i32
    %9 = vector.broadcast %c2_i32 : i32 to vector<128x128xi32>
    %10 = arith.muli %4, %9 : vector<128x128xi32>
    %11 = vector.broadcast %8 : i32 to vector<128x128xi32>
    %12 = arith.addi %11, %10 : vector<128x128xi32>
    %c3_i32 = arith.constant 3 : i32
    %13 = vector.broadcast %c3_i32 : i32 to vector<128x128xi32>
    %14 = arith.muli %3, %13 : vector<128x128xi32>
    %15 = arith.subi %12, %14 : vector<128x128xi32>
    %16 = arith.sitofp %15 : vector<128x128xi32> to vector<128x128xf32>
    %cst = arith.constant 0.333333343 : f32
    %17 = vector.broadcast %cst : f32 to vector<128x128xf32>
    %18 = arith.mulf %16, %17 : vector<128x128xf32>
    %19 = math.absf %18 : vector<128x128xf32>
    %cst_1 = arith.constant 3.14159274 : f32
    %20 = vector.broadcast %cst_1 : f32 to vector<128x128xf32>
    %21 = arith.mulf %20, %18 : vector<128x128xf32>
    %cst_2 = arith.constant 9.99999997E-7 : f32
    %22 = vector.broadcast %cst_2 : f32 to vector<128x128xf32>
    %23 = arith.cmpf olt, %19, %22 : vector<128x128xf32>
    %24 = math.sin %21 : vector<128x128xf32>
    %cst_3 = arith.constant 1.000000e+00 : f32
    %25 = vector.broadcast %cst_3 : f32 to vector<128x128xf32>
    %26 = arith.select %23, %25, %21 : vector<128x128xi1>, vector<128x128xf32>
    %27 = arith.divf %24, %26 : vector<128x128xf32>
    %cst_4 = arith.constant 1.000000e+00 : f32
    %28 = vector.broadcast %cst_4 : f32 to vector<128x128xf32>
    %29 = arith.select %23, %28, %27 : vector<128x128xi1>, vector<128x128xf32>
    %cst_5 = arith.constant 1.600000e+01 : f32
    %30 = vector.broadcast %cst_5 : f32 to vector<128x128xf32>
    %31 = arith.cmpf olt, %19, %30 : vector<128x128xf32>
    %cst_6 = arith.constant 0.196349546 : f32
    %32 = vector.broadcast %cst_6 : f32 to vector<128x128xf32>
    %33 = arith.mulf %32, %18 : vector<128x128xf32>
    %34 = math.cos %33 : vector<128x128xf32>
    %cst_7 = arith.constant 1.000000e+00 : f32
    %35 = vector.broadcast %cst_7 : f32 to vector<128x128xf32>
    %36 = arith.addf %35, %34 : vector<128x128xf32>
    %cst_8 = arith.constant 5.000000e-01 : f32
    %37 = vector.broadcast %cst_8 : f32 to vector<128x128xf32>
    %38 = arith.mulf %37, %36 : vector<128x128xf32>
    %cst_9 = arith.constant 0.000000e+00 : f32
    %39 = vector.broadcast %cst_9 : f32 to vector<128x128xf32>
    %40 = arith.select %31, %38, %39 : vector<128x128xi1>, vector<128x128xf32>
    %cst_10 = arith.constant 1.000000e+00 : f32
    %41 = vector.broadcast %cst_10 : f32 to vector<128x128xf32>
    %42 = arith.mulf %41, %29 : vector<128x128xf32>
    %43 = arith.mulf %42, %40 : vector<128x128xf32>
    %c0 = arith.constant 0 : index
    %c0_11 = arith.constant 0 : index
    %44 = vector.load %arg6[%c0, %c0_11] : memref<2x128xf32, #tpu.memory_space<vmem>>, vector<2x128xf32>
    %c0_12 = arith.constant 0 : index
    %c0_13 = arith.constant 0 : index
    %45 = vector.load %arg4[%c0_12, %c0_13] : memref<2x128xf32, #tpu.memory_space<vmem>>, vector<2x128xf32>
    %cst_14 = arith.constant dense<0.000000e+00> : vector<2x128xf32>
    %46 = tpu.matmul %45, %43, %cst_14 {dimension_numbers = #tpu.dot_dimension_numbers<[1], [0], [0], [1], [0, 0, 1, 1], [], []>} : vector<2x128xf32>, vector<128x128xf32>, vector<2x128xf32> -> vector<2x128xf32>
    %47 = arith.addf %44, %46 : vector<2x128xf32>
    %c0_15 = arith.constant 0 : index
    %c0_16 = arith.constant 0 : index
    %48 = vector.load %arg6[%c0_15, %c0_16] : memref<2x128xf32, #tpu.memory_space<vmem>>, vector<2x128xf32>
    tpu.vector_store %arg6[%c0_15, %c0_16], %47 {strides = array<i32>} : memref<2x128xf32, #tpu.memory_space<vmem>>, vector<2x128xf32>,
    %c1_i32 = arith.constant 1 : i32
    %49 = arith.cmpi eq, %arg1, %c1_i32 : i32
    %50 = arith.extui %49 : i1 to i32
    %c0_i32_17 = arith.constant 0 : i32
    %51 = arith.cmpi ne, %50, %c0_i32_17 : i32
    scf.if %51 {
      %c0_18 = arith.constant 0 : index
      %c0_19 = arith.constant 0 : index
      %52 = vector.load %arg6[%c0_18, %c0_19] : memref<2x128xf32, #tpu.memory_space<vmem>>, vector<2x128xf32>
      %c0_20 = arith.constant 0 : index
      %c0_21 = arith.constant 0 : index
      %53 = vector.load %arg5[%c0_20, %c0_21] : memref<2x128xf32, #tpu.memory_space<vmem>>, vector<2x128xf32>
      tpu.vector_store %arg5[%c0_20, %c0_21], %52 {strides = array<i32>} : memref<2x128xf32, #tpu.memory_space<vmem>>, vector<2x128xf32>,
    } else {
    }
    return
  }
  func.func @transform_0(%arg0: i32, %arg1: i32, %arg2: memref<6xi32, #tpu.memory_space<smem>>, %arg3: memref<6xi32, #tpu.memory_space<smem>>) -> (i32, i32) {
    %0 = arith.index_cast %arg0 : i32 to index
    %1 = memref.load %arg2[%0] : memref<6xi32, #tpu.memory_space<smem>>
    %2 = arith.addi %1, %arg1 : i32
    %c0_i32 = arith.constant 0 : i32
    %c0_i32_0 = arith.constant 0 : i32
    return %c0_i32, %2 : i32, i32
  }
  func.func @transform_1(%arg0: i32, %arg1: i32, %arg2: memref<6xi32, #tpu.memory_space<smem>>, %arg3: memref<6xi32, #tpu.memory_space<smem>>) -> (i32, i32) {
    %c0_i32 = arith.constant 0 : i32
    %c0_i32_0 = arith.constant 0 : i32
    return %c0_i32, %arg0 : i32, i32
  }
}

</mosaic_0001>

<llo_original>
// kernel: tpu_custom_call.1
$region0: #{tpu_custom_call.1}
  #allocation0 [shape = 'u32[]', space=smem, size = 0x4, offset = 0x4, fixed_abs, tag = 'smem constant byte address 0x4 - core index']
  #allocation1 [shape = 'u32[144,128]{1,0:T(1,128)}', space=vmem, size = 0x12000, scoped, tag = 'internal scratch']
  #allocation2 [shape = 'f32[2,128]{1,0:T(2,128)}', space=vmem, size = 0x400, scoped, tag = 'scratch operand']
  #allocation3 [shape = 's32[1]{0}', space=sflag, size = 0x4, scoped, tag = 'scoped memory for tpu_custom_call.1']
  #allocation4 [shape = 'u8[512]{0}', space=smem, size = 0x200, scoped, tag = 'prefetched SMEM operand 0']
  #allocation5 [shape = 'u8[512]{0}', space=smem, size = 0x200, scoped, tag = 'prefetched SMEM operand 1']
  %s0 = inlined_call_operand.hbm [shape: s32[6], index: 0, kind: input, shape index: {}]
  %s1 = inlined_call_operand.vmem [shape: s32[6], index: 1, kind: input, shape index: {}]
  %s2 = inlined_call_operand.hbm [shape: f32[2,640], index: 2, kind: input, shape index: {}]
  %s3 = inlined_call_operand.hbm [shape: f32[2,768], index: 3, kind: output, shape index: {}]
  %s4 = sld [smem:[#allocation0]]
  $region49: #{tpu_custom_call.1} parent=0
    _
  %s6 = ssub.s32 1, %s4
  %s7 = scalar_select 0, %s6, %s4
  %9 = dma.hbm_to_smem %s0, 16, [#allocation4], [#allocation3]
  %s10 = sshll.u32 %s1, 4
  %s11 = int_to_ptr.vmem [resolvable:$true] %s10
  %13 = dma.vmem_to_smem %s11, 16, [#allocation5], [#allocation3]
  %14 = dma.done [#allocation3], 32
  %15 = sfence
  $region1: #{tpu_custom_call.1} parent=0
    #allocation6 [shape = 'u8[2048]{0}', space=vmem, size = 0x800, scoped, tag = 'input window, operand 2']
    #allocation7 [shape = 's32[2]{0}', space=sflag, size = 0x8, scoped, tag = 'scoped memory for tpu_custom_call.1']
    #allocation8 [shape = 's32[2]{0}', space=sflag, size = 0x8, scoped, tag = 'scoped memory for tpu_custom_call.1']
    #allocation9 [shape = 'u8[2048]{0}', space=vmem, size = 0x800, scoped, tag = 'output window, operand 0']
    %16 = vsyncpa [#allocation7], 0
    %s17 = scalar_lea.sflag [#allocation7], 1
    %18 = vsyncpa %s17, 0
    %19 = vsyncpa [#allocation8], 0
    %s20 = scalar_lea.sflag [#allocation8], 1
    %21 = vsyncpa %s20, 0
    loop: start=0, step=1, limit=14
    $region2: #{tpu_custom_call.1} parent=1 // loop_pre_header
      _
    $region3: #{tpu_custom_call.1} parent=1 // loop_header
      %s23 = sphi 0, %s27
      %p24 = scmp.ge.s32.totalorder %s23, 14
      %s30 = sphi 0, %s42
      %s31 = sphi 0, %s38
      %s32 = sphi 0, %s30
      %s33 = sphi 0, %s31
      %s34 = sphi 0, %s32
      %s35 = sphi 0, %s33
      %s49 = sphi 0, %s51
      %s52 = sphi 0, %s49
      %s53 = sphi 0, %s52
      %s69 = sphi 0, %s53
      %s75 = sphi 0, %s77
      %s78 = sphi 0, %s75
      %s79 = sphi 0, %s78
      %s95 = sphi 0, %s79
    $region4: #{tpu_custom_call.1} parent=1 // loop_header_branch
      %26 = sbr.rel (%p24) target = $region8
    $region5: #{tpu_custom_call.1} parent=1 // loop_body
      %s28 = ssub.s32 %s23, 1
      %s29 = ssub.s32 %s23, 2
      %s36 = sadd.s32 1, %s31
      %p37 = scmp.ge.s32.totalorder %s36, 2
      %s38 = scalar_select %p37, 0, %s36
      %s39 = sadd.s32 1, %s30
      %s40 = scalar_select %p37, %s39, %s30
      %p41 = scmp.ge.s32.totalorder %s40, 6
      %s42 = scalar_select %p41, 0, %s40
      %s43 = sld [smem:[#allocation4 + %s30]]
      %s44 = sadd.s32 %s43, %s31
      %s45 = sld [smem:[#allocation4 + %s42]]
      %s46 = sadd.s32 %s45, %s38
      %s47 = ssub.s32 %s44, %s46
      %p48 = scmp.eq.s32.totalorder %s47, 0
      %s50 = sadd.s32 %s49, 1
      %s51 = scalar_select %p48, %s49, %s50
      %p54 = pneg %p48
      %p55 = scmp.eq.s32.totalorder %s23, 11
      %p56 = por %p54, %p55
      %p57 = scmp.ne.s32.totalorder %s49, %s52
      %p58 = scmp.eq.s32.totalorder %s23, 0
      %p59 = por %p57, %p58
      %p60 = scmp.ne.s32.totalorder %s49, %s52
      %p61 = scmp.eq.s32.totalorder %s28, 11
      %p62 = por %p60, %p61
      %p63 = scmp.ne.s32.totalorder %s52, %s53
      %p64 = scmp.eq.s32.totalorder %s28, 0
      %p65 = por %p63, %p64
      %p66 = scmp.ne.s32.totalorder %s52, %s53
      %p67 = scmp.eq.s32.totalorder %s29, 11
      %p68 = por %p66, %p67
      %p70 = scmp.ne.s32.totalorder %s53, %s69
      %p71 = scmp.eq.s32.totalorder %s29, 0
      %p72 = por %p70, %p71
      %s73 = ssub.s32 %s30, %s42
      %p74 = scmp.eq.s32.totalorder %s73, 0
      %s76 = sadd.s32 %s75, 1
      %s77 = scalar_select %p74, %s75, %s76
      %p80 = pneg %p74
      %p81 = scmp.eq.s32.totalorder %s23, 11
      %p82 = por %p80, %p81
      %p83 = scmp.ne.s32.totalorder %s75, %s78
      %p84 = scmp.eq.s32.totalorder %s23, 0
      %p85 = por %p83, %p84
      %p86 = scmp.ne.s32.totalorder %s75, %s78
      %p87 = scmp.eq.s32.totalorder %s28, 11
      %p88 = por %p86, %p87
      %p89 = scmp.ne.s32.totalorder %s78, %s79
      %p90 = scmp.eq.s32.totalorder %s28, 0
      %p91 = por %p89, %p90
      %p92 = scmp.ne.s32.totalorder %s78, %s79
      %p93 = scmp.eq.s32.totalorder %s29, 11
      %p94 = por %p92, %p93
      %p96 = scmp.ne.s32.totalorder %s79, %s95
      %p97 = scmp.eq.s32.totalorder %s29, 0
      %p98 = por %p96, %p97
      %p99 = scmp.le.s32.totalorder 1, %s23
      %p100 = scmp.lt.s32.totalorder %s23, 13
      %p101 = pnand %p99, %p100
      %p102 = pneg %p101
      // Predicated region
      $region9: #{tpu_custom_call.1} parent=5 // pred_check
        _
      $region10: #{tpu_custom_call.1} parent=5 // pred_check_branch
        %104 = sbr.rel (%p101) target = $region12
      $region11: #{tpu_custom_call.1} parent=5 // pred_region
        %s105 = ssub.s32 %s23, 1
      $region12: #{tpu_custom_call.1} parent=5 // pred_fallthru
        _
      %p106 = scmp.lt.s32.totalorder %s23, 12
      // Predicated region
      $region13: #{tpu_custom_call.1} parent=5 // pred_check
        %p107 = pneg %p106
      $region14: #{tpu_custom_call.1} parent=5 // pred_check_branch
        %109 = sbr.rel (%p107) target = $region16
      $region15: #{tpu_custom_call.1} parent=5 // pred_region
        // Predicated region
        $region17: #{tpu_custom_call.1} parent=15 // pred_check
          %p110 = pneg %p59
        $region18: #{tpu_custom_call.1} parent=15 // pred_check_branch
          %112 = sbr.rel (%p110) target = $region20
        $region19: #{tpu_custom_call.1} parent=15 // pred_region
          %s113 = sand.u32 %s49, 1
          %s114 = scalar_lea.sflag [#allocation7], %s113
          %s115 = sand.u32 %s49, 1
          %s116 = smul.addr %s115, 2
          %s117 = scalar_lea.vmem [#allocation6], %s116
          %s118 = sld [smem:[#allocation4 + %s30]]
          %s119 = sadd.s32 %s118, %s31
          %s121 = ssub.s32 32, 32
          %122 = vsyncadd %s114, %s121
          %s123 = smul.addr %s119, 32
          %s124 = scalar_lea.hbm %s2, %s123
          %s126 = sshll.u32 %s117, 4
          %s127 = int_to_ptr.vmem [resolvable:$true] %s126
          %129 = dma.hbm_to_vmem [thread:$0]  %s124, 32, %s127, %s114
        $region20: #{tpu_custom_call.1} parent=15 // pred_fallthru
          _
      $region16: #{tpu_custom_call.1} parent=5 // pred_fallthru
        _
      %p130 = scmp.le.s32.totalorder 1, %s23
      %p131 = scmp.lt.s32.totalorder %s23, 13
      %p132 = pnand %p130, %p131
      %p133 = pneg %p132
      // Predicated region
      $region21: #{tpu_custom_call.1} parent=5 // pred_check
        _
      $region22: #{tpu_custom_call.1} parent=5 // pred_check_branch
        %135 = sbr.rel (%p132) target = $region24
      $region23: #{tpu_custom_call.1} parent=5 // pred_region
        %s136 = ssub.s32 %s23, 1
        %s137 = sand.u32 %s52, 1
        %s138 = scalar_lea.sflag [#allocation7], %s137
        %s139 = sand.u32 %s52, 1
        %s140 = smul.addr %s139, 2
        %s141 = scalar_lea.vmem [#allocation6], %s140
        // Predicated region
        $region25: #{tpu_custom_call.1} parent=23 // pred_check
          %p142 = pneg %p65
        $region26: #{tpu_custom_call.1} parent=23 // pred_check_branch
          %144 = sbr.rel (%p142) target = $region28
        $region27: #{tpu_custom_call.1} parent=23 // pred_region
          %145 = dma.done %s138, 32
        $region28: #{tpu_custom_call.1} parent=23 // pred_fallthru
          _
        %s146 = sand.u32 %s52, 1
        %s147 = scalar_lea.sflag [#allocation7], %s146
        %s148 = sand.u32 %s52, 1
        %s149 = smul.addr %s148, 2
        %s150 = scalar_lea.vmem [#allocation6], %s149
        %p151 = pneg %p65
        %p152 = pneg %p62
        %p153 = pneg %p91
        %p154 = pneg %p88
        %s155 = sand.u32 %s78, 1
        %s156 = scalar_lea.sflag [#allocation8], %s155
        %s157 = sand.u32 %s78, 1
        %s158 = smul.addr %s157, 2
        %s159 = scalar_lea.vmem [#allocation9], %s158
        %s160 = sld [smem:[#allocation4 + %s32]]
        %s161 = sadd.s32 %s160, %s33
        %p162 = scmp.eq.s32.totalorder %s33, 0
        // Predicated region
        $region29: #{tpu_custom_call.1} parent=23 // pred_check
          %p163 = pneg %p162
        $region30: #{tpu_custom_call.1} parent=23 // pred_check_branch
          %165 = sbr.rel (%p163) target = $region32
        $region31: #{tpu_custom_call.1} parent=23 // pred_region
          %166 = vst [vmem:[#allocation2] sm:$0x3] 0.0
        $region32: #{tpu_custom_call.1} parent=23 // pred_fallthru
          _
        %v167 = vlaneseq
        %v168 = vshrl.u32 %v167, 7
        %v169 = vadd.s32 %v168, 8
        %v170 = vadd.s32 %v168, 16
        %v171 = vadd.s32 %v168, 24
        %v172 = vadd.s32 %v168, 32
        %v173 = vadd.s32 %v168, 40
        %v174 = vadd.s32 %v168, 48
        %v175 = vadd.s32 %v168, 56
        %v176 = vadd.s32 %v168, 64
        %v177 = vadd.s32 %v168, 72
        %v178 = vadd.s32 %v168, 80
        %v179 = vadd.s32 %v168, 88
        %v180 = vadd.s32 %v168, 96
        %v181 = vadd.s32 %v168, 104
        %v182 = vadd.s32 %v168, 112
        %v183 = vadd.s32 %v168, 120
        %v184 = vlaneseq
        %v185 = vand.u32 %v184, 127
        %s186 = sld [smem:[#allocation5 + %s32]]
        %s187 = smul.u32 %s33, 384
        %s188 = ssub.s32 %s186, %s187
        %v189 = vmul.u32 %v185, 2
        %v190 = vstv %s188
        %v191 = vadd.s32 %v190, %v189
        %v192 = vmul.u32 %v168, 3
        %v193 = vmul.u32 %v169, 3
        %v194 = vmul.u32 %v170, 3
        %v195 = vmul.u32 %v171, 3
        %v196 = vmul.u32 %v172, 3
        %v197 = vmul.u32 %v173, 3
        %v198 = vmul.u32 %v174, 3
        %v199 = vmul.u32 %v175, 3
        %v200 = vmul.u32 %v176, 3
        %v201 = vmul.u32 %v177, 3
        %v202 = vmul.u32 %v178, 3
        %v203 = vmul.u32 %v179, 3
        %v204 = vmul.u32 %v180, 3
        %v205 = vmul.u32 %v181, 3
        %v206 = vmul.u32 %v182, 3
        %v207 = vmul.u32 %v183, 3
        %v208 = vsub.s32 %v191, %v192
        %v209 = vsub.s32 %v191, %v193
        %v210 = vsub.s32 %v191, %v194
        %v211 = vsub.s32 %v191, %v195
        %v212 = vsub.s32 %v191, %v196
        %v213 = vsub.s32 %v191, %v197
        %v214 = vsub.s32 %v191, %v198
        %v215 = vsub.s32 %v191, %v199
        %v216 = vsub.s32 %v191, %v200
        %v217 = vsub.s32 %v191, %v201
        %v218 = vsub.s32 %v191, %v202
        %v219 = vsub.s32 %v191, %v203
        %v220 = vsub.s32 %v191, %v204
        %v221 = vsub.s32 %v191, %v205
        %v222 = vsub.s32 %v191, %v206
        %v223 = vsub.s32 %v191, %v207
        %v224 = vcvt.s32.f32 %v208
        %v225 = vcvt.s32.f32 %v209
        %v226 = vcvt.s32.f32 %v210
        %v227 = vcvt.s32.f32 %v211
        %v228 = vcvt.s32.f32 %v212
        %v229 = vcvt.s32.f32 %v213
        %v230 = vcvt.s32.f32 %v214
        %v231 = vcvt.s32.f32 %v215
        %v232 = vcvt.s32.f32 %v216
        %v233 = vcvt.s32.f32 %v217
        %v234 = vcvt.s32.f32 %v218
        %v235 = vcvt.s32.f32 %v219
        %v236 = vcvt.s32.f32 %v220
        %v237 = vcvt.s32.f32 %v221
        %v238 = vcvt.s32.f32 %v222
        %v239 = vcvt.s32.f32 %v223
        %v240 = vmul.f32 %v224, 0.33333334
        %v241 = vmul.f32 %v225, 0.33333334
        %v242 = vmul.f32 %v226, 0.33333334
        %v243 = vmul.f32 %v227, 0.33333334
        %v244 = vmul.f32 %v228, 0.33333334
        %v245 = vmul.f32 %v229, 0.33333334
        %v246 = vmul.f32 %v230, 0.33333334
        %v247 = vmul.f32 %v231, 0.33333334
        %v248 = vmul.f32 %v232, 0.33333334
        %v249 = vmul.f32 %v233, 0.33333334
        %v250 = vmul.f32 %v234, 0.33333334
        %v251 = vmul.f32 %v235, 0.33333334
        %v252 = vmul.f32 %v236, 0.33333334
        %v253 = vmul.f32 %v237, 0.33333334
        %v254 = vmul.f32 %v238, 0.33333334
        %v255 = vmul.f32 %v239, 0.33333334
        %v256 = vand.u32 2147483647, %v240
        %v257 = vand.u32 2147483647, %v241
        %v258 = vand.u32 2147483647, %v242
        %v259 = vand.u32 2147483647, %v243
        %v260 = vand.u32 2147483647, %v244
        %v261 = vand.u32 2147483647, %v245
        %v262 = vand.u32 2147483647, %v246
        %v263 = vand.u32 2147483647, %v247
        %v264 = vand.u32 2147483647, %v248
        %v265 = vand.u32 2147483647, %v249
        %v266 = vand.u32 2147483647, %v250
        %v267 = vand.u32 2147483647, %v251
        %v268 = vand.u32 2147483647, %v252
        %v269 = vand.u32 2147483647, %v253
        %v270 = vand.u32 2147483647, %v254
        %v271 = vand.u32 2147483647, %v255
        %v272 = vmul.f32 %v240, 3.1415927
        %v273 = vmul.f32 %v241, 3.1415927
        %v274 = vmul.f32 %v242, 3.1415927
        %v275 = vmul.f32 %v243, 3.1415927
        %v276 = vmul.f32 %v244, 3.1415927
        %v277 = vmul.f32 %v245, 3.1415927
        %v278 = vmul.f32 %v246, 3.1415927
        %v279 = vmul.f32 %v247, 3.1415927
        %v280 = vmul.f32 %v248, 3.1415927
        %v281 = vmul.f32 %v249, 3.1415927
        %v282 = vmul.f32 %v250, 3.1415927
        %v283 = vmul.f32 %v251, 3.1415927
        %v284 = vmul.f32 %v252, 3.1415927
        %v285 = vmul.f32 %v253, 3.1415927
        %v286 = vmul.f32 %v254, 3.1415927
        %v287 = vmul.f32 %v255, 3.1415927
        %vm288 = vcmp.lt.f32.partialorder %v256, 1e-06
        %vm289 = vcmp.lt.f32.partialorder %v257, 1e-06
        %vm290 = vcmp.lt.f32.partialorder %v258, 1e-06
        %vm291 = vcmp.lt.f32.partialorder %v259, 1e-06
        %vm292 = vcmp.lt.f32.partialorder %v260, 1e-06
        %vm293 = vcmp.lt.f32.partialorder %v261, 1e-06
        %vm294 = vcmp.lt.f32.partialorder %v262, 1e-06
        %vm295 = vcmp.lt.f32.partialorder %v263, 1e-06
        %vm296 = vcmp.lt.f32.partialorder %v264, 1e-06
        %vm297 = vcmp.lt.f32.partialorder %v265, 1e-06
        %vm298 = vcmp.lt.f32.partialorder %v266, 1e-06
        %vm299 = vcmp.lt.f32.partialorder %v267, 1e-06
        %vm300 = vcmp.lt.f32.partialorder %v268, 1e-06
        %vm301 = vcmp.lt.f32.partialorder %v269, 1e-06
        %vm302 = vcmp.lt.f32.partialorder %v270, 1e-06
        %vm303 = vcmp.lt.f32.partialorder %v271, 1e-06
        %v304 = vand.u32 2147483647, %v272
        %vm305 = vcmp.le.f32.partialorder %v304, 0.7853982
        %vm306 = vcmp.lt.s32.totalorder %v272, 0
        %v307 = vand.u32 %v272, 2139095040
        %v308 = vshrl.u32 %v307, 23
        %v309 = vsub.s32 %v308, 127
        %v310 = vand.u32 2147483647, %v272
        %v311 = vand.u32 %v310, 8388607
        %v312 = vor.u32 %v311, 8388608
        %v313 = vsub.s32 0, %v312
        %v314 = vadd.s32 %v309, 1
        %vm315 = vcmp.gt.s32.totalorder %v314, 0
        %v316 = vsel %vm315, %v314, 0
        %v317 = vshrl.u32 %v316, 5
        %v318 = vand.u32 %v316, 31
        %v319 = vsub.s32 32, %v318
        %v320 = vshrl.u32 683565275, %v319
        %v321 = vshll.u32 683565275, %v318
        %v322 = vshrl.u32 2475754826, %v319
        %v323 = vor.u32 %v321, %v322
        %v324 = vshll.u32 2475754826, %v318
        %v325 = vshrl.u32 2131351028, %v319
        %v326 = vor.u32 %v324, %v325
        %v327 = vshll.u32 2131351028, %v318
        %v328 = vshrl.u32 2102212464, %v319
        %v329 = vor.u32 %v327, %v328
        %v330 = vshll.u32 2102212464, %v318
        %v331 = vshrl.u32 920167782, %v319
        %v332 = vor.u32 %v330, %v331
        %v333 = vshll.u32 920167782, %v318
        %v334 = vshrl.u32 1326507024, %v319
        %v335 = vor.u32 %v333, %v334
        %vm336 = vcmp.lt.s32.totalorder %v317, 1
        %vm337 = vcmp.lt.s32.totalorder %v317, 2
        %vm338 = vcmp.lt.s32.totalorder %v317, 3
        %vm339 = vcmp.lt.s32.totalorder %v317, 4
        %v340 = vsel %vm336, %v320, %v323
        %v341 = vsel %vm339, %v329, 2102212464
        %v342 = vsel %vm338, %v326, %v341
        %v343 = vsel %vm337, %v340, %v342
        %v344 = vsel %vm336, %v323, %v326
        %v345 = vsel %vm339, %v332, 920167782
        %v346 = vsel %vm338, %v329, %v345
        %v347 = vsel %vm337, %v344, %v346
        %v348 = vsel %vm336, %v326, %v329
        %v349 = vsel %vm339, %v335, 1326507024
        %v350 = vsel %vm338, %v332, %v349
        %v351 = vsel %vm337, %v348, %v350
        %v352 = vshll.u32 %v312, 8
        %v353 = vmul.u32.u64.compose %v352, %v351
        %v354 = vextract.low.u32 %v353
        %v355 = vextract.high.u32 %v353
        %v356 = vmul.u32.u64.compose %v352, %v347
        %v357 = vextract.low.u32 %v356
        %v358 = vextract.high.u32 %v356
        %v359 = vmul.u32 %v352, %v343
        %v360 = vadd.s32 %v355, %v357
        %vm361 = vc.u32 %v355, %v357
        %v362 = vadd.s32 %v358, 1
        %v363 = vsel %vm361, %v362, %v358
        %v364 = vadd.s32 %v359, %v363
        %v365 = vadd.s32 %v364, 536870912
        %v366 = vshrl.u32 %v365, 30
        %v367 = vshll.u32 %v366, 30
        %v368 = vsub.s32 %v364, %v367
        %vm369 = vcmp.lt.s32.totalorder %v368, 0
        %v370 = vsub.s32 0, %v368
        %v371 = vsel %vm369, %v370, %v368
        %v372 = vclz %v371
        %v373 = vsub.s32 %v372, 2
        %vm374 = vcmp.gt.s32.totalorder 0, %v373
        %v375 = vsel %vm374, 0, %v373
        %v376 = vsub.s32 32, %v375
        %v377 = vshll.u32 %v368, %v375
        %v378 = vshrl.u32 %v360, %v376
        %v379 = vor.u32 %v377, %v378
        %v380 = vsub.s32 4294967266, %v375
        %v381 = vadd.s32 %v380, 127
        %v382 = vshll.u32 %v381, 23
        %v383 = vor.u32 4788187, %v382
        %v384 = vand.u32 2147483647, %v383
        %v386 = vcvt.s32.f32 %v379
        %v387 = vmul.f32 %v386, %v384
        %v388 = vxor.u32 %v387, 2147483648
        %v389 = vsel %vm306, %v388, %v387
        %v390 = vsub.s32 4, %v366
        %v391 = vsel %vm306, %v390, %v366
        %v392 = vsel %vm305, %v272, %v389
        %v393 = vsel %vm305, 0, %v391
        %v394 = vcosq.f32.pop %v392
        %v395 = vsinq.f32.pop %v392
        %vm396 = vweird.f32 %v272
        %v397 = vadd.s32 %v393, 3
        %v398 = vand.u32 %v397, 3
        %vm399 = vcmp.lt.s32.totalorder %v398, 2
        %vm400 = vcmp.eq.s32.totalorder %v398, 0
        %v401 = vxor.u32 %v395, 2147483648
        %v402 = vsel %vm400, %v394, %v401
        %vm403 = vcmp.eq.s32.totalorder %v398, 2
        %v404 = vxor.u32 %v394, 2147483648
        %v405 = vsel %vm403, %v404, %v395
        %v406 = vsel %vm399, %v402, %v405
        %v407 = vsel %vm396, nan, %v406
        %v408 = vand.u32 2147483647, %v273
        %vm409 = vcmp.le.f32.partialorder %v408, 0.7853982
        %vm410 = vcmp.lt.s32.totalorder %v273, 0
        %v411 = vand.u32 %v273, 2139095040
        %v412 = vshrl.u32 %v411, 23
        %v413 = vsub.s32 %v412, 127
        %v414 = vand.u32 2147483647, %v273
        %v415 = vand.u32 %v414, 8388607
        %v416 = vor.u32 %v415, 8388608
        %v417 = vsub.s32 0, %v416
        %v418 = vadd.s32 %v413, 1
        %vm419 = vcmp.gt.s32.totalorder %v418, 0
        %v420 = vsel %vm419, %v418, 0
        %v421 = vshrl.u32 %v420, 5
        %v422 = vand.u32 %v420, 31
        %v423 = vsub.s32 32, %v422
        %v424 = vshrl.u32 683565275, %v423
        %v425 = vshll.u32 683565275, %v422
        %v426 = vshrl.u32 2475754826, %v423
        %v427 = vor.u32 %v425, %v426
        %v428 = vshll.u32 2475754826, %v422
        %v429 = vshrl.u32 2131351028, %v423
        %v430 = vor.u32 %v428, %v429
        %v431 = vshll.u32 2131351028, %v422
        %v432 = vshrl.u32 2102212464, %v423
        %v433 = vor.u32 %v431, %v432
        %v434 = vshll.u32 2102212464, %v422
        %v435 = vshrl.u32 920167782, %v423
        %v436 = vor.u32 %v434, %v435
        %v437 = vshll.u32 920167782, %v422
        %v438 = vshrl.u32 1326507024, %v423
        %v439 = vor.u32 %v437, %v438
        %vm440 = vcmp.lt.s32.totalorder %v421, 1
        %vm441 = vcmp.lt.s32.totalorder %v421, 2
        %vm442 = vcmp.lt.s32.totalorder %v421, 3
        %vm443 = vcmp.lt.s32.totalorder %v421, 4
        %v444 = vsel %vm440, %v424, %v427
        %v445 = vsel %vm443, %v433, 2102212464
        %v446 = vsel %vm442, %v430, %v445
        %v447 = vsel %vm441, %v444, %v446
        %v448 = vsel %vm440, %v427, %v430
        %v449 = vsel %vm443, %v436, 920167782
        %v450 = vsel %vm442, %v433, %v449
        %v451 = vsel %vm441, %v448, %v450
        %v452 = vsel %vm440, %v430, %v433
        %v453 = vsel %vm443, %v439, 1326507024
        %v454 = vsel %vm442, %v436, %v453
        %v455 = vsel %vm441, %v452, %v454
        %v456 = vshll.u32 %v416, 8
        %v457 = vmul.u32.u64.compose %v456, %v455
        %v458 = vextract.low.u32 %v457
        %v459 = vextract.high.u32 %v457
        %v460 = vmul.u32.u64.compose %v456, %v451
        %v461 = vextract.low.u32 %v460
        %v462 = vextract.high.u32 %v460
        %v463 = vmul.u32 %v456, %v447
        %v464 = vadd.s32 %v459, %v461
        %vm465 = vc.u32 %v459, %v461
        %v466 = vadd.s32 %v462, 1
        %v467 = vsel %vm465, %v466, %v462
        %v468 = vadd.s32 %v463, %v467
        %v469 = vadd.s32 %v468, 536870912
        %v470 = vshrl.u32 %v469, 30
        %v471 = vshll.u32 %v470, 30
        %v472 = vsub.s32 %v468, %v471
        %vm473 = vcmp.lt.s32.totalorder %v472, 0
        %v474 = vsub.s32 0, %v472
        %v475 = vsel %vm473, %v474, %v472
        %v476 = vclz %v475
        %v477 = vsub.s32 %v476, 2
        %vm478 = vcmp.gt.s32.totalorder 0, %v477
        %v479 = vsel %vm478, 0, %v477
        %v480 = vsub.s32 32, %v479
        %v481 = vshll.u32 %v472, %v479
        %v482 = vshrl.u32 %v464, %v480
        %v483 = vor.u32 %v481, %v482
        %v484 = vsub.s32 4294967266, %v479
        %v485 = vadd.s32 %v484, 127
        %v486 = vshll.u32 %v485, 23
        %v487 = vor.u32 4788187, %v486
        %v488 = vand.u32 2147483647, %v487
        %v490 = vcvt.s32.f32 %v483
        %v491 = vmul.f32 %v490, %v488
        %v492 = vxor.u32 %v491, 2147483648
        %v493 = vsel %vm410, %v492, %v491
        %v494 = vsub.s32 4, %v470
        %v495 = vsel %vm410, %v494, %v470
        %v496 = vsel %vm409, %v273, %v493
        %v497 = vsel %vm409, 0, %v495
        %v498 = vcosq.f32.pop %v496
        %v499 = vsinq.f32.pop %v496
        %vm500 = vweird.f32 %v273
        %v501 = vadd.s32 %v497, 3
        %v502 = vand.u32 %v501, 3
        %vm503 = vcmp.lt.s32.totalorder %v502, 2
        %vm504 = vcmp.eq.s32.totalorder %v502, 0
        %v505 = vxor.u32 %v499, 2147483648
        %v506 = vsel %vm504, %v498, %v505
        %vm507 = vcmp.eq.s32.totalorder %v502, 2
        %v508 = vxor.u32 %v498, 2147483648
        %v509 = vsel %vm507, %v508, %v499
        %v510 = vsel %vm503, %v506, %v509
        %v511 = vsel %vm500, nan, %v510
        %v512 = vand.u32 2147483647, %v274
        %vm513 = vcmp.le.f32.partialorder %v512, 0.7853982
        %vm514 = vcmp.lt.s32.totalorder %v274, 0
        %v515 = vand.u32 %v274, 2139095040
        %v516 = vshrl.u32 %v515, 23
        %v517 = vsub.s32 %v516, 127
        %v518 = vand.u32 2147483647, %v274
        %v519 = vand.u32 %v518, 8388607
        %v520 = vor.u32 %v519, 8388608
        %v521 = vsub.s32 0, %v520
        %v522 = vadd.s32 %v517, 1
        %vm523 = vcmp.gt.s32.totalorder %v522, 0
        %v524 = vsel %vm523, %v522, 0
        %v525 = vshrl.u32 %v524, 5
        %v526 = vand.u32 %v524, 31
        %v527 = vsub.s32 32, %v526
        %v528 = vshrl.u32 683565275, %v527
        %v529 = vshll.u32 683565275, %v526
        %v530 = vshrl.u32 2475754826, %v527
        %v531 = vor.u32 %v529, %v530
        %v532 = vshll.u32 2475754826, %v526
        %v533 = vshrl.u32 2131351028, %v527
        %v534 = vor.u32 %v532, %v533
        %v535 = vshll.u32 2131351028, %v526
        %v536 = vshrl.u32 2102212464, %v527
        %v537 = vor.u32 %v535, %v536
        %v538 = vshll.u32 2102212464, %v526
        %v539 = vshrl.u32 920167782, %v527
        %v540 = vor.u32 %v538, %v539
        %v541 = vshll.u32 920167782, %v526
        %v542 = vshrl.u32 1326507024, %v527
        %v543 = vor.u32 %v541, %v542
        %vm544 = vcmp.lt.s32.totalorder %v525, 1
        %vm545 = vcmp.lt.s32.totalorder %v525, 2
        %vm546 = vcmp.lt.s32.totalorder %v525, 3
        %vm547 = vcmp.lt.s32.totalorder %v525, 4
        %v548 = vsel %vm544, %v528, %v531
        %v549 = vsel %vm547, %v537, 2102212464
        %v550 = vsel %vm546, %v534, %v549
        %v551 = vsel %vm545, %v548, %v550
        %v552 = vsel %vm544, %v531, %v534
        %v553 = vsel %vm547, %v540, 920167782
        %v554 = vsel %vm546, %v537, %v553
        %v555 = vsel %vm545, %v552, %v554
        %v556 = vsel %vm544, %v534, %v537
        %v557 = vsel %vm547, %v543, 1326507024
        %v558 = vsel %vm546, %v540, %v557
        %v559 = vsel %vm545, %v556, %v558
        %v560 = vshll.u32 %v520, 8
        %v561 = vmul.u32.u64.compose %v560, %v559
        %v562 = vextract.low.u32 %v561
        %v563 = vextract.high.u32 %v561
        %v564 = vmul.u32.u64.compose %v560, %v555
        %v565 = vextract.low.u32 %v564
        %v566 = vextract.high.u32 %v564
        %v567 = vmul.u32 %v560, %v551
        %v568 = vadd.s32 %v563, %v565
        %vm569 = vc.u32 %v563, %v565
        %v570 = vadd.s32 %v566, 1
        %v571 = vsel %vm569, %v570, %v566
        %v572 = vadd.s32 %v567, %v571
        %v573 = vadd.s32 %v572, 536870912
        %v574 = vshrl.u32 %v573, 30
        %v575 = vshll.u32 %v574, 30
        %v576 = vsub.s32 %v572, %v575
        %vm577 = vcmp.lt.s32.totalorder %v576, 0
        %v578 = vsub.s32 0, %v576
        %v579 = vsel %vm577, %v578, %v576
        %v580 = vclz %v579
        %v581 = vsub.s32 %v580, 2
        %vm582 = vcmp.gt.s32.totalorder 0, %v581
        %v583 = vsel %vm582, 0, %v581
        %v584 = vsub.s32 32, %v583
        %v585 = vshll.u32 %v576, %v583
        %v586 = vshrl.u32 %v568, %v584
        %v587 = vor.u32 %v585, %v586
        %v588 = vsub.s32 4294967266, %v583
        %v589 = vadd.s32 %v588, 127
        %v590 = vshll.u32 %v589, 23
        %v591 = vor.u32 4788187, %v590
        %v592 = vand.u32 2147483647, %v591
        %v594 = vcvt.s32.f32 %v587
        %v595 = vmul.f32 %v594, %v592
        %v596 = vxor.u32 %v595, 2147483648
        %v597 = vsel %vm514, %v596, %v595
        %v598 = vsub.s32 4, %v574
        %v599 = vsel %vm514, %v598, %v574
        %v600 = vsel %vm513, %v274, %v597
        %v601 = vsel %vm513, 0, %v599
        %v602 = vcosq.f32.pop %v600
        %v603 = vsinq.f32.pop %v600
        %vm604 = vweird.f32 %v274
        %v605 = vadd.s32 %v601, 3
        %v606 = vand.u32 %v605, 3
        %vm607 = vcmp.lt.s32.totalorder %v606, 2
        %vm608 = vcmp.eq.s32.totalorder %v606, 0
        %v609 = vxor.u32 %v603, 2147483648
        %v610 = vsel %vm608, %v602, %v609
        %vm611 = vcmp.eq.s32.totalorder %v606, 2
        %v612 = vxor.u32 %v602, 2147483648
        %v613 = vsel %vm611, %v612, %v603
        %v614 = vsel %vm607, %v610, %v613
        %v615 = vsel %vm604, nan, %v614
        %v616 = vand.u32 2147483647, %v275
        %vm617 = vcmp.le.f32.partialorder %v616, 0.7853982
        %vm618 = vcmp.lt.s32.totalorder %v275, 0
        %v619 = vand.u32 %v275, 2139095040
        %v620 = vshrl.u32 %v619, 23
        %v621 = vsub.s32 %v620, 127
        %v622 = vand.u32 2147483647, %v275
        %v623 = vand.u32 %v622, 8388607
        %v624 = vor.u32 %v623, 8388608
        %v625 = vsub.s32 0, %v624
        %v626 = vadd.s32 %v621, 1
        %vm627 = vcmp.gt.s32.totalorder %v626, 0
        %v628 = vsel %vm627, %v626, 0
        %v629 = vshrl.u32 %v628, 5
        %v630 = vand.u32 %v628, 31
        %v631 = vsub.s32 32, %v630
        %v632 = vshrl.u32 683565275, %v631
        %v633 = vshll.u32 683565275, %v630
        %v634 = vshrl.u32 2475754826, %v631
        %v635 = vor.u32 %v633, %v634
        %v636 = vshll.u32 2475754826, %v630
        %v637 = vshrl.u32 2131351028, %v631
        %v638 = vor.u32 %v636, %v637
        %v639 = vshll.u32 2131351028, %v630
        %v640 = vshrl.u32 2102212464, %v631
        %v641 = vor.u32 %v639, %v640
        %v642 = vshll.u32 2102212464, %v630
        %v643 = vshrl.u32 920167782, %v631
        %v644 = vor.u32 %v642, %v643
        %v645 = vshll.u32 920167782, %v630
        %v646 = vshrl.u32 1326507024, %v631
        %v647 = vor.u32 %v645, %v646
        %vm648 = vcmp.lt.s32.totalorder %v629, 1
        %vm649 = vcmp.lt.s32.totalorder %v629, 2
        %vm650 = vcmp.lt.s32.totalorder %v629, 3
        %vm651 = vcmp.lt.s32.totalorder %v629, 4
        %v652 = vsel %vm648, %v632, %v635
        %v653 = vsel %vm651, %v641, 2102212464
        %v654 = vsel %vm650, %v638, %v653
        %v655 = vsel %vm649, %v652, %v654
        %v656 = vsel %vm648, %v635, %v638
        %v657 = vsel %vm651, %v644, 920167782
        %v658 = vsel %vm650, %v641, %v657
        %v659 = vsel %vm649, %v656, %v658
        %v660 = vsel %vm648, %v638, %v641
        %v661 = vsel %vm651, %v647, 1326507024
        %v662 = vsel %vm650, %v644, %v661
        %v663 = vsel %vm649, %v660, %v662
        %v664 = vshll.u32 %v624, 8
        %v665 = vmul.u32.u64.compose %v664, %v663
        %v666 = vextract.low.u32 %v665
        %v667 = vextract.high.u32 %v665
        %v668 = vmul.u32.u64.compose %v664, %v659
        %v669 = vextract.low.u32 %v668
        %v670 = vextract.high.u32 %v668
        %v671 = vmul.u32 %v664, %v655
        %v672 = vadd.s32 %v667, %v669
        %vm673 = vc.u32 %v667, %v669
        %v674 = vadd.s32 %v670, 1
        %v675 = vsel %vm673, %v674, %v670
        %v676 = vadd.s32 %v671, %v675
        %v677 = vadd.s32 %v676, 536870912
        %v678 = vshrl.u32 %v677, 30
        %v679 = vshll.u32 %v678, 30
        %v680 = vsub.s32 %v676, %v679
        %vm681 = vcmp.lt.s32.totalorder %v680, 0
        %v682 = vsub.s32 0, %v680
        %v683 = vsel %vm681, %v682, %v680
        %v684 = vclz %v683
        %v685 = vsub.s32 %v684, 2
        %vm686 = vcmp.gt.s32.totalorder 0, %v685
        %v687 = vsel %vm686, 0, %v685
        %v688 = vsub.s32 32, %v687
        %v689 = vshll.u32 %v680, %v687
        %v690 = vshrl.u32 %v672, %v688
        %v691 = vor.u32 %v689, %v690
        %v692 = vsub.s32 4294967266, %v687
        %v693 = vadd.s32 %v692, 127
        %v694 = vshll.u32 %v693, 23
        %v695 = vor.u32 4788187, %v694
        %v696 = vand.u32 2147483647, %v695
        %v698 = vcvt.s32.f32 %v691
        %v699 = vmul.f32 %v698, %v696
        %v700 = vxor.u32 %v699, 2147483648
        %v701 = vsel %vm618, %v700, %v699
        %v702 = vsub.s32 4, %v678
        %v703 = vsel %vm618, %v702, %v678
        %v704 = vsel %vm617, %v275, %v701
        %v705 = vsel %vm617, 0, %v703
        %v706 = vcosq.f32.pop %v704
        %v707 = vsinq.f32.pop %v704
        %vm708 = vweird.f32 %v275
        %v709 = vadd.s32 %v705, 3
        %v710 = vand.u32 %v709, 3
        %vm711 = vcmp.lt.s32.totalorder %v710, 2
        %vm712 = vcmp.eq.s32.totalorder %v710, 0
        %v713 = vxor.u32 %v707, 2147483648
        %v714 = vsel %vm712, %v706, %v713
        %vm715 = vcmp.eq.s32.totalorder %v710, 2
        %v716 = vxor.u32 %v706, 2147483648
        %v717 = vsel %vm715, %v716, %v707
        %v718 = vsel %vm711, %v714, %v717
        %v719 = vsel %vm708, nan, %v718
        %v720 = vand.u32 2147483647, %v276
        %vm721 = vcmp.le.f32.partialorder %v720, 0.7853982
        %vm722 = vcmp.lt.s32.totalorder %v276, 0
        %v723 = vand.u32 %v276, 2139095040
        %v724 = vshrl.u32 %v723, 23
        %v725 = vsub.s32 %v724, 127
        %v726 = vand.u32 2147483647, %v276
        %v727 = vand.u32 %v726, 8388607
        %v728 = vor.u32 %v727, 8388608
        %v729 = vsub.s32 0, %v728
        %v730 = vadd.s32 %v725, 1
        %vm731 = vcmp.gt.s32.totalorder %v730, 0
        %v732 = vsel %vm731, %v730, 0
        %v733 = vshrl.u32 %v732, 5
        %v734 = vand.u32 %v732, 31
        %v735 = vsub.s32 32, %v734
        %v736 = vshrl.u32 683565275, %v735
        %v737 = vshll.u32 683565275, %v734
        %v738 = vshrl.u32 2475754826, %v735
        %v739 = vor.u32 %v737, %v738
        %v740 = vshll.u32 2475754826, %v734
        %v741 = vshrl.u32 2131351028, %v735
        %v742 = vor.u32 %v740, %v741
        %v743 = vshll.u32 2131351028, %v734
        %v744 = vshrl.u32 2102212464, %v735
        %v745 = vor.u32 %v743, %v744
        %v746 = vshll.u32 2102212464, %v734
        %v747 = vshrl.u32 920167782, %v735
        %v748 = vor.u32 %v746, %v747
        %v749 = vshll.u32 920167782, %v734
        %v750 = vshrl.u32 1326507024, %v735
        %v751 = vor.u32 %v749, %v750
        %vm752 = vcmp.lt.s32.totalorder %v733, 1
        %vm753 = vcmp.lt.s32.totalorder %v733, 2
        %vm754 = vcmp.lt.s32.totalorder %v733, 3
        %vm755 = vcmp.lt.s32.totalorder %v733, 4
        %v756 = vsel %vm752, %v736, %v739
        %v757 = vsel %vm755, %v745, 2102212464
        %v758 = vsel %vm754, %v742, %v757
        %v759 = vsel %vm753, %v756, %v758
        %v760 = vsel %vm752, %v739, %v742
        %v761 = vsel %vm755, %v748, 920167782
        %v762 = vsel %vm754, %v745, %v761
        %v763 = vsel %vm753, %v760, %v762
        %v764 = vsel %vm752, %v742, %v745
        %v765 = vsel %vm755, %v751, 1326507024
        %v766 = vsel %vm754, %v748, %v765
        %v767 = vsel %vm753, %v764, %v766
        %v768 = vshll.u32 %v728, 8
        %v769 = vmul.u32.u64.compose %v768, %v767
        %v770 = vextract.low.u32 %v769
        %v771 = vextract.high.u32 %v769
        %v772 = vmul.u32.u64.compose %v768, %v763
        %v773 = vextract.low.u32 %v772
        %v774 = vextract.high.u32 %v772
        %v775 = vmul.u32 %v768, %v759
        %v776 = vadd.s32 %v771, %v773
        %vm777 = vc.u32 %v771, %v773
        %v778 = vadd.s32 %v774, 1
        %v779 = vsel %vm777, %v778, %v774
        %v780 = vadd.s32 %v775, %v779
        %v781 = vadd.s32 %v780, 536870912
        %v782 = vshrl.u32 %v781, 30
        %v783 = vshll.u32 %v782, 30
        %v784 = vsub.s32 %v780, %v783
        %vm785 = vcmp.lt.s32.totalorder %v784, 0
        %v786 = vsub.s32 0, %v784
        %v787 = vsel %vm785, %v786, %v784
        %v788 = vclz %v787
        %v789 = vsub.s32 %v788, 2
        %vm790 = vcmp.gt.s32.totalorder 0, %v789
        %v791 = vsel %vm790, 0, %v789
        %v792 = vsub.s32 32, %v791
        %v793 = vshll.u32 %v784, %v791
        %v794 = vshrl.u32 %v776, %v792
        %v795 = vor.u32 %v793, %v794
        %v796 = vsub.s32 4294967266, %v791
        %v797 = vadd.s32 %v796, 127
        %v798 = vshll.u32 %v797, 23
        %v799 = vor.u32 4788187, %v798
        %v800 = vand.u32 2147483647, %v799
        %v802 = vcvt.s32.f32 %v795
        %v803 = vmul.f32 %v802, %v800
        %v804 = vxor.u32 %v803, 2147483648
        %v805 = vsel %vm722, %v804, %v803
        %v806 = vsub.s32 4, %v782
        %v807 = vsel %vm722, %v806, %v782
        %v808 = vsel %vm721, %v276, %v805
        %v809 = vsel %vm721, 0, %v807
        %v810 = vcosq.f32.pop %v808
        %v811 = vsinq.f32.pop %v808
        %vm812 = vweird.f32 %v276
        %v813 = vadd.s32 %v809, 3
        %v814 = vand.u32 %v813, 3
        %vm815 = vcmp.lt.s32.totalorder %v814, 2
        %vm816 = vcmp.eq.s32.totalorder %v814, 0
        %v817 = vxor.u32 %v811, 2147483648
        %v818 = vsel %vm816, %v810, %v817
        %vm819 = vcmp.eq.s32.totalorder %v814, 2
        %v820 = vxor.u32 %v810, 2147483648
        %v821 = vsel %vm819, %v820, %v811
        %v822 = vsel %vm815, %v818, %v821
        %v823 = vsel %vm812, nan, %v822
        %v824 = vand.u32 2147483647, %v277
        %vm825 = vcmp.le.f32.partialorder %v824, 0.7853982
        %vm826 = vcmp.lt.s32.totalorder %v277, 0
        %v827 = vand.u32 %v277, 2139095040
        %v828 = vshrl.u32 %v827, 23
        %v829 = vsub.s32 %v828, 127
        %v830 = vand.u32 2147483647, %v277
        %v831 = vand.u32 %v830, 8388607
        %v832 = vor.u32 %v831, 8388608
        %v833 = vsub.s32 0, %v832
        %v834 = vadd.s32 %v829, 1
        %vm835 = vcmp.gt.s32.totalorder %v834, 0
        %v836 = vsel %vm835, %v834, 0
        %v837 = vshrl.u32 %v836, 5
        %v838 = vand.u32 %v836, 31
        %v839 = vsub.s32 32, %v838
        %v840 = vshrl.u32 683565275, %v839
        %v841 = vshll.u32 683565275, %v838
        %v842 = vshrl.u32 2475754826, %v839
        %v843 = vor.u32 %v841, %v842
        %v844 = vshll.u32 2475754826, %v838
        %v845 = vshrl.u32 2131351028, %v839
        %v846 = vor.u32 %v844, %v845
        %v847 = vshll.u32 2131351028, %v838
        %v848 = vshrl.u32 2102212464, %v839
        %v849 = vor.u32 %v847, %v848
        %v850 = vshll.u32 2102212464, %v838
        %v851 = vshrl.u32 920167782, %v839
        %v852 = vor.u32 %v850, %v851
        %v853 = vshll.u32 920167782, %v838
        %v854 = vshrl.u32 1326507024, %v839
        %v855 = vor.u32 %v853, %v854
        %vm856 = vcmp.lt.s32.totalorder %v837, 1
        %vm857 = vcmp.lt.s32.totalorder %v837, 2
        %vm858 = vcmp.lt.s32.totalorder %v837, 3
        %vm859 = vcmp.lt.s32.totalorder %v837, 4
        %v860 = vsel %vm856, %v840, %v843
        %v861 = vsel %vm859, %v849, 2102212464
        %v862 = vsel %vm858, %v846, %v861
        %v863 = vsel %vm857, %v860, %v862
        %v864 = vsel %vm856, %v843, %v846
        %v865 = vsel %vm859, %v852, 920167782
        %v866 = vsel %vm858, %v849, %v865
        %v867 = vsel %vm857, %v864, %v866
        %v868 = vsel %vm856, %v846, %v849
        %v869 = vsel %vm859, %v855, 1326507024
        %v870 = vsel %vm858, %v852, %v869
        %v871 = vsel %vm857, %v868, %v870
        %v872 = vshll.u32 %v832, 8
        %v873 = vmul.u32.u64.compose %v872, %v871
        %v874 = vextract.low.u32 %v873
        %v875 = vextract.high.u32 %v873
        %v876 = vmul.u32.u64.compose %v872, %v867
        %v877 = vextract.low.u32 %v876
        %v878 = vextract.high.u32 %v876
        %v879 = vmul.u32 %v872, %v863
        %v880 = vadd.s32 %v875, %v877
        %vm881 = vc.u32 %v875, %v877
        %v882 = vadd.s32 %v878, 1
        %v883 = vsel %vm881, %v882, %v878
        %v884 = vadd.s32 %v879, %v883
        %v885 = vadd.s32 %v884, 536870912
        %v886 = vshrl.u32 %v885, 30
        %v887 = vshll.u32 %v886, 30
        %v888 = vsub.s32 %v884, %v887
        %vm889 = vcmp.lt.s32.totalorder %v888, 0
        %v890 = vsub.s32 0, %v888
        %v891 = vsel %vm889, %v890, %v888
        %v892 = vclz %v891
        %v893 = vsub.s32 %v892, 2
        %vm894 = vcmp.gt.s32.totalorder 0, %v893
        %v895 = vsel %vm894, 0, %v893
        %v896 = vsub.s32 32, %v895
        %v897 = vshll.u32 %v888, %v895
        %v898 = vshrl.u32 %v880, %v896
        %v899 = vor.u32 %v897, %v898
        %v900 = vsub.s32 4294967266, %v895
        %v901 = vadd.s32 %v900, 127
        %v902 = vshll.u32 %v901, 23
        %v903 = vor.u32 4788187, %v902
        %v904 = vand.u32 2147483647, %v903
        %v906 = vcvt.s32.f32 %v899
        %v907 = vmul.f32 %v906, %v904
        %v908 = vxor.u32 %v907, 2147483648
        %v909 = vsel %vm826, %v908, %v907
        %v910 = vsub.s32 4, %v886
        %v911 = vsel %vm826, %v910, %v886
        %v912 = vsel %vm825, %v277, %v909
        %v913 = vsel %vm825, 0, %v911
        %v914 = vcosq.f32.pop %v912
        %v915 = vsinq.f32.pop %v912
        %vm916 = vweird.f32 %v277
        %v917 = vadd.s32 %v913, 3
        %v918 = vand.u32 %v917, 3
        %vm919 = vcmp.lt.s32.totalorder %v918, 2
        %vm920 = vcmp.eq.s32.totalorder %v918, 0
        %v921 = vxor.u32 %v915, 2147483648
        %v922 = vsel %vm920, %v914, %v921
        %vm923 = vcmp.eq.s32.totalorder %v918, 2
        %v924 = vxor.u32 %v914, 2147483648
        %v925 = vsel %vm923, %v924, %v915
        %v926 = vsel %vm919, %v922, %v925
        %v927 = vsel %vm916, nan, %v926
        %v928 = vand.u32 2147483647, %v278
        %vm929 = vcmp.le.f32.partialorder %v928, 0.7853982
        %vm930 = vcmp.lt.s32.totalorder %v278, 0
        %v931 = vand.u32 %v278, 2139095040
        %v932 = vshrl.u32 %v931, 23
        %v933 = vsub.s32 %v932, 127
        %v934 = vand.u32 2147483647, %v278
        %v935 = vand.u32 %v934, 8388607
        %v936 = vor.u32 %v935, 8388608
        %v937 = vsub.s32 0, %v936
        %v938 = vadd.s32 %v933, 1
        %vm939 = vcmp.gt.s32.totalorder %v938, 0
        %v940 = vsel %vm939, %v938, 0
        %v941 = vshrl.u32 %v940, 5
        %v942 = vand.u32 %v940, 31
        %v943 = vsub.s32 32, %v942
        %v944 = vshrl.u32 683565275, %v943
        %v945 = vshll.u32 683565275, %v942
        %v946 = vshrl.u32 2475754826, %v943
        %v947 = vor.u32 %v945, %v946
        %v948 = vshll.u32 2475754826, %v942
        %v949 = vshrl.u32 2131351028, %v943
        %v950 = vor.u32 %v948, %v949
        %v951 = vshll.u32 2131351028, %v942
        %v952 = vshrl.u32 2102212464, %v943
        %v953 = vor.u32 %v951, %v952
        %v954 = vshll.u32 2102212464, %v942
        %v955 = vshrl.u32 920167782, %v943
        %v956 = vor.u32 %v954, %v955
        %v957 = vshll.u32 920167782, %v942
        %v958 = vshrl.u32 1326507024, %v943
        %v959 = vor.u32 %v957, %v958
        %vm960 = vcmp.lt.s32.totalorder %v941, 1
        %vm961 = vcmp.lt.s32.totalorder %v941, 2
        %vm962 = vcmp.lt.s32.totalorder %v941, 3
        %vm963 = vcmp.lt.s32.totalorder %v941, 4
        %v964 = vsel %vm960, %v944, %v947
        %v965 = vsel %vm963, %v953, 2102212464
        %v966 = vsel %vm962, %v950, %v965
        %v967 = vsel %vm961, %v964, %v966
        %v968 = vsel %vm960, %v947, %v950
        %v969 = vsel %vm963, %v956, 920167782
        %v970 = vsel %vm962, %v953, %v969
        %v971 = vsel %vm961, %v968, %v970
        %v972 = vsel %vm960, %v950, %v953
        %v973 = vsel %vm963, %v959, 1326507024
        %v974 = vsel %vm962, %v956, %v973
        %v975 = vsel %vm961, %v972, %v974
        %v976 = vshll.u32 %v936, 8
        %v977 = vmul.u32.u64.compose %v976, %v975
        %v978 = vextract.low.u32 %v977
        %v979 = vextract.high.u32 %v977
        %v980 = vmul.u32.u64.compose %v976, %v971
        %v981 = vextract.low.u32 %v980
        %v982 = vextract.high.u32 %v980
        %v983 = vmul.u32 %v976, %v967
        %v984 = vadd.s32 %v979, %v981
        %vm985 = vc.u32 %v979, %v981
        %v986 = vadd.s32 %v982, 1
        %v987 = vsel %vm985, %v986, %v982
        %v988 = vadd.s32 %v983, %v987
        %v989 = vadd.s32 %v988, 536870912
        %v990 = vshrl.u32 %v989, 30
        %v991 = vshll.u32 %v990, 30
        %v992 = vsub.s32 %v988, %v991
        %vm993 = vcmp.lt.s32.totalorder %v992, 0
        %v994 = vsub.s32 0, %v992
        %v995 = vsel %vm993, %v994, %v992
        %v996 = vclz %v995
        %v997 = vsub.s32 %v996, 2
        %vm998 = vcmp.gt.s32.totalorder 0, %v997
        %v999 = vsel %vm998, 0, %v997
        %v1000 = vsub.s32 32, %v999
        %v1001 = vshll.u32 %v992, %v999
        %v1002 = vshrl.u32 %v984, %v1000
        %v1003 = vor.u32 %v1001, %v1002
        %v1004 = vsub.s32 4294967266, %v999
        %v1005 = vadd.s32 %v1004, 127
        %v1006 = vshll.u32 %v1005, 23
        %v1007 = vor.u32 4788187, %v1006
        %v1008 = vand.u32 2147483647, %v1007
        %v1010 = vcvt.s32.f32 %v1003
        %v1011 = vmul.f32 %v1010, %v1008
        %v1012 = vxor.u32 %v1011, 2147483648
        %v1013 = vsel %vm930, %v1012, %v1011
        %v1014 = vsub.s32 4, %v990
        %v1015 = vsel %vm930, %v1014, %v990
        %v1016 = vsel %vm929, %v278, %v1013
        %v1017 = vsel %vm929, 0, %v1015
        %v1018 = vcosq.f32.pop %v1016
        %v1019 = vsinq.f32.pop %v1016
        %vm1020 = vweird.f32 %v278
        %v1021 = vadd.s32 %v1017, 3
        %v1022 = vand.u32 %v1021, 3
        %vm1023 = vcmp.lt.s32.totalorder %v1022, 2
        %vm1024 = vcmp.eq.s32.totalorder %v1022, 0
        %v1025 = vxor.u32 %v1019, 2147483648
        %v1026 = vsel %vm1024, %v1018, %v1025
        %vm1027 = vcmp.eq.s32.totalorder %v1022, 2
        %v1028 = vxor.u32 %v1018, 2147483648
        %v1029 = vsel %vm1027, %v1028, %v1019
        %v1030 = vsel %vm1023, %v1026, %v1029
        %v1031 = vsel %vm1020, nan, %v1030
        %v1032 = vand.u32 2147483647, %v279
        %vm1033 = vcmp.le.f32.partialorder %v1032, 0.7853982
        %vm1034 = vcmp.lt.s32.totalorder %v279, 0
        %v1035 = vand.u32 %v279, 2139095040
        %v1036 = vshrl.u32 %v1035, 23
        %v1037 = vsub.s32 %v1036, 127
        %v1038 = vand.u32 2147483647, %v279
        %v1039 = vand.u32 %v1038, 8388607
        %v1040 = vor.u32 %v1039, 8388608
        %v1041 = vsub.s32 0, %v1040
        %v1042 = vadd.s32 %v1037, 1
        %vm1043 = vcmp.gt.s32.totalorder %v1042, 0
        %v1044 = vsel %vm1043, %v1042, 0
        %v1045 = vshrl.u32 %v1044, 5
        %v1046 = vand.u32 %v1044, 31
        %v1047 = vsub.s32 32, %v1046
        %v1048 = vshrl.u32 683565275, %v1047
        %v1049 = vshll.u32 683565275, %v1046
        %v1050 = vshrl.u32 2475754826, %v1047
        %v1051 = vor.u32 %v1049, %v1050
        %v1052 = vshll.u32 2475754826, %v1046
        %v1053 = vshrl.u32 2131351028, %v1047
        %v1054 = vor.u32 %v1052, %v1053
        %v1055 = vshll.u32 2131351028, %v1046
        %v1056 = vshrl.u32 2102212464, %v1047
        %v1057 = vor.u32 %v1055, %v1056
        %v1058 = vshll.u32 2102212464, %v1046
        %v1059 = vshrl.u32 920167782, %v1047
        %v1060 = vor.u32 %v1058, %v1059
        %v1061 = vshll.u32 920167782, %v1046
        %v1062 = vshrl.u32 1326507024, %v1047
        %v1063 = vor.u32 %v1061, %v1062
        %vm1064 = vcmp.lt.s32.totalorder %v1045, 1
        %vm1065 = vcmp.lt.s32.totalorder %v1045, 2
        %vm1066 = vcmp.lt.s32.totalorder %v1045, 3
        %vm1067 = vcmp.lt.s32.totalorder %v1045, 4
        %v1068 = vsel %vm1064, %v1048, %v1051
        %v1069 = vsel %vm1067, %v1057, 2102212464
        %v1070 = vsel %vm1066, %v1054, %v1069
        %v1071 = vsel %vm1065, %v1068, %v1070
        %v1072 = vsel %vm1064, %v1051, %v1054
        %v1073 = vsel %vm1067, %v1060, 920167782
        %v1074 = vsel %vm1066, %v1057, %v1073
        %v1075 = vsel %vm1065, %v1072, %v1074
        %v1076 = vsel %vm1064, %v1054, %v1057
        %v1077 = vsel %vm1067, %v1063, 1326507024
        %v1078 = vsel %vm1066, %v1060, %v1077
        %v1079 = vsel %vm1065, %v1076, %v1078
        %v1080 = vshll.u32 %v1040, 8
        %v1081 = vmul.u32.u64.compose %v1080, %v1079
        %v1082 = vextract.low.u32 %v1081
        %v1083 = vextract.high.u32 %v1081
        %v1084 = vmul.u32.u64.compose %v1080, %v1075
        %v1085 = vextract.low.u32 %v1084
        %v1086 = vextract.high.u32 %v1084
        %v1087 = vmul.u32 %v1080, %v1071
        %v1088 = vadd.s32 %v1083, %v1085
        %vm1089 = vc.u32 %v1083, %v1085
        %v1090 = vadd.s32 %v1086, 1
        %v1091 = vsel %vm1089, %v1090, %v1086
        %v1092 = vadd.s32 %v1087, %v1091
        %v1093 = vadd.s32 %v1092, 536870912
        %v1094 = vshrl.u32 %v1093, 30
        %v1095 = vshll.u32 %v1094, 30
        %v1096 = vsub.s32 %v1092, %v1095
        %vm1097 = vcmp.lt.s32.totalorder %v1096, 0
        %v1098 = vsub.s32 0, %v1096
        %v1099 = vsel %vm1097, %v1098, %v1096
        %v1100 = vclz %v1099
        %v1101 = vsub.s32 %v1100, 2
        %vm1102 = vcmp.gt.s32.totalorder 0, %v1101
        %v1103 = vsel %vm1102, 0, %v1101
        %v1104 = vsub.s32 32, %v1103
        %v1105 = vshll.u32 %v1096, %v1103
        %v1106 = vshrl.u32 %v1088, %v1104
        %v1107 = vor.u32 %v1105, %v1106
        %v1108 = vsub.s32 4294967266, %v1103
        %v1109 = vadd.s32 %v1108, 127
        %v1110 = vshll.u32 %v1109, 23
        %v1111 = vor.u32 4788187, %v1110
        %v1112 = vand.u32 2147483647, %v1111
        %v1114 = vcvt.s32.f32 %v1107
        %v1115 = vmul.f32 %v1114, %v1112
        %v1116 = vxor.u32 %v1115, 2147483648
        %v1117 = vsel %vm1034, %v1116, %v1115
        %v1118 = vsub.s32 4, %v1094
        %v1119 = vsel %vm1034, %v1118, %v1094
        %v1120 = vsel %vm1033, %v279, %v1117
        %v1121 = vsel %vm1033, 0, %v1119
        %v1122 = vcosq.f32.pop %v1120
        %v1123 = vsinq.f32.pop %v1120
        %vm1124 = vweird.f32 %v279
        %v1125 = vadd.s32 %v1121, 3
        %v1126 = vand.u32 %v1125, 3
        %vm1127 = vcmp.lt.s32.totalorder %v1126, 2
        %vm1128 = vcmp.eq.s32.totalorder %v1126, 0
        %v1129 = vxor.u32 %v1123, 2147483648
        %v1130 = vsel %vm1128, %v1122, %v1129
        %vm1131 = vcmp.eq.s32.totalorder %v1126, 2
        %v1132 = vxor.u32 %v1122, 2147483648
        %v1133 = vsel %vm1131, %v1132, %v1123
        %v1134 = vsel %vm1127, %v1130, %v1133
        %v1135 = vsel %vm1124, nan, %v1134
        %v1136 = vand.u32 2147483647, %v280
        %vm1137 = vcmp.le.f32.partialorder %v1136, 0.7853982
        %vm1138 = vcmp.lt.s32.totalorder %v280, 0
        %v1139 = vand.u32 %v280, 2139095040
        %v1140 = vshrl.u32 %v1139, 23
        %v1141 = vsub.s32 %v1140, 127
        %v1142 = vand.u32 2147483647, %v280
        %v1143 = vand.u32 %v1142, 8388607
        %v1144 = vor.u32 %v1143, 8388608
        %v1145 = vsub.s32 0, %v1144
        %v1146 = vadd.s32 %v1141, 1
        %vm1147 = vcmp.gt.s32.totalorder %v1146, 0
        %v1148 = vsel %vm1147, %v1146, 0
        %v1149 = vshrl.u32 %v1148, 5
        %v1150 = vand.u32 %v1148, 31
        %v1151 = vsub.s32 32, %v1150
        %v1152 = vshrl.u32 683565275, %v1151
        %v1153 = vshll.u32 683565275, %v1150
        %v1154 = vshrl.u32 2475754826, %v1151
        %v1155 = vor.u32 %v1153, %v1154
        %v1156 = vshll.u32 2475754826, %v1150
        %v1157 = vshrl.u32 2131351028, %v1151
        %v1158 = vor.u32 %v1156, %v1157
        %v1159 = vshll.u32 2131351028, %v1150
        %v1160 = vshrl.u32 2102212464, %v1151
        %v1161 = vor.u32 %v1159, %v1160
        %v1162 = vshll.u32 2102212464, %v1150
        %v1163 = vshrl.u32 920167782, %v1151
        %v1164 = vor.u32 %v1162, %v1163
        %v1165 = vshll.u32 920167782, %v1150
        %v1166 = vshrl.u32 1326507024, %v1151
        %v1167 = vor.u32 %v1165, %v1166
        %vm1168 = vcmp.lt.s32.totalorder %v1149, 1
        %vm1169 = vcmp.lt.s32.totalorder %v1149, 2
        %vm1170 = vcmp.lt.s32.totalorder %v1149, 3
        %vm1171 = vcmp.lt.s32.totalorder %v1149, 4
        %v1172 = vsel %vm1168, %v1152, %v1155
        %v1173 = vsel %vm1171, %v1161, 2102212464
        %v1174 = vsel %vm1170, %v1158, %v1173
        %v1175 = vsel %vm1169, %v1172, %v1174
        %v1176 = vsel %vm1168, %v1155, %v1158
        %v1177 = vsel %vm1171, %v1164, 920167782
        %v1178 = vsel %vm1170, %v1161, %v1177
        %v1179 = vsel %vm1169, %v1176, %v1178
        %v1180 = vsel %vm1168, %v1158, %v1161
        %v1181 = vsel %vm1171, %v1167, 1326507024
        %v1182 = vsel %vm1170, %v1164, %v1181
        %v1183 = vsel %vm1169, %v1180, %v1182
        %v1184 = vshll.u32 %v1144, 8
        %v1185 = vmul.u32.u64.compose %v1184, %v1183
        %v1186 = vextract.low.u32 %v1185
        %v1187 = vextract.high.u32 %v1185
        %v1188 = vmul.u32.u64.compose %v1184, %v1179
        %v1189 = vextract.low.u32 %v1188
        %v1190 = vextract.high.u32 %v1188
        %v1191 = vmul.u32 %v1184, %v1175
        %v1192 = vadd.s32 %v1187, %v1189
        %vm1193 = vc.u32 %v1187, %v1189
        %v1194 = vadd.s32 %v1190, 1
        %v1195 = vsel %vm1193, %v1194, %v1190
        %v1196 = vadd.s32 %v1191, %v1195
        %v1197 = vadd.s32 %v1196, 536870912
        %v1198 = vshrl.u32 %v1197, 30
        %v1199 = vshll.u32 %v1198, 30
        %v1200 = vsub.s32 %v1196, %v1199
        %vm1201 = vcmp.lt.s32.totalorder %v1200, 0
        %v1202 = vsub.s32 0, %v1200
        %v1203 = vsel %vm1201, %v1202, %v1200
        %v1204 = vclz %v1203
        %v1205 = vsub.s32 %v1204, 2
        %vm1206 = vcmp.gt.s32.totalorder 0, %v1205
        %v1207 = vsel %vm1206, 0, %v1205
        %v1208 = vsub.s32 32, %v1207
        %v1209 = vshll.u32 %v1200, %v1207
        %v1210 = vshrl.u32 %v1192, %v1208
        %v1211 = vor.u32 %v1209, %v1210
        %v1212 = vsub.s32 4294967266, %v1207
        %v1213 = vadd.s32 %v1212, 127
        %v1214 = vshll.u32 %v1213, 23
        %v1215 = vor.u32 4788187, %v1214
        %v1216 = vand.u32 2147483647, %v1215
        %v1218 = vcvt.s32.f32 %v1211
        %v1219 = vmul.f32 %v1218, %v1216
        %v1220 = vxor.u32 %v1219, 2147483648
        %v1221 = vsel %vm1138, %v1220, %v1219
        %v1222 = vsub.s32 4, %v1198
        %v1223 = vsel %vm1138, %v1222, %v1198
        %v1224 = vsel %vm1137, %v280, %v1221
        %v1225 = vsel %vm1137, 0, %v1223
        %v1226 = vcosq.f32.pop %v1224
        %v1227 = vsinq.f32.pop %v1224
        %vm1228 = vweird.f32 %v280
        %v1229 = vadd.s32 %v1225, 3
        %v1230 = vand.u32 %v1229, 3
        %vm1231 = vcmp.lt.s32.totalorder %v1230, 2
        %vm1232 = vcmp.eq.s32.totalorder %v1230, 0
        %v1233 = vxor.u32 %v1227, 2147483648
        %v1234 = vsel %vm1232, %v1226, %v1233
        %vm1235 = vcmp.eq.s32.totalorder %v1230, 2
        %v1236 = vxor.u32 %v1226, 2147483648
        %v1237 = vsel %vm1235, %v1236, %v1227
        %v1238 = vsel %vm1231, %v1234, %v1237
        %v1239 = vsel %vm1228, nan, %v1238
        %v1240 = vand.u32 2147483647, %v281
        %vm1241 = vcmp.le.f32.partialorder %v1240, 0.7853982
        %vm1242 = vcmp.lt.s32.totalorder %v281, 0
        %v1243 = vand.u32 %v281, 2139095040
        %v1244 = vshrl.u32 %v1243, 23
        %v1245 = vsub.s32 %v1244, 127
        %v1246 = vand.u32 2147483647, %v281
        %v1247 = vand.u32 %v1246, 8388607
        %v1248 = vor.u32 %v1247, 8388608
        %v1249 = vsub.s32 0, %v1248
        %v1250 = vadd.s32 %v1245, 1
        %vm1251 = vcmp.gt.s32.totalorder %v1250, 0
        %v1252 = vsel %vm1251, %v1250, 0
        %v1253 = vshrl.u32 %v1252, 5
        %v1254 = vand.u32 %v1252, 31
        %v1255 = vsub.s32 32, %v1254
        %v1256 = vshrl.u32 683565275, %v1255
        %v1257 = vshll.u32 683565275, %v1254
        %v1258 = vshrl.u32 2475754826, %v1255
        %v1259 = vor.u32 %v1257, %v1258
        %v1260 = vshll.u32 2475754826, %v1254
        %v1261 = vshrl.u32 2131351028, %v1255
        %v1262 = vor.u32 %v1260, %v1261
        %v1263 = vshll.u32 2131351028, %v1254
        %v1264 = vshrl.u32 2102212464, %v1255
        %v1265 = vor.u32 %v1263, %v1264
        %v1266 = vshll.u32 2102212464, %v1254
        %v1267 = vshrl.u32 920167782, %v1255
        %v1268 = vor.u32 %v1266, %v1267
        %v1269 = vshll.u32 920167782, %v1254
        %v1270 = vshrl.u32 1326507024, %v1255
        %v1271 = vor.u32 %v1269, %v1270
        %vm1272 = vcmp.lt.s32.totalorder %v1253, 1
        %vm1273 = vcmp.lt.s32.totalorder %v1253, 2
        %vm1274 = vcmp.lt.s32.totalorder %v1253, 3
        %vm1275 = vcmp.lt.s32.totalorder %v1253, 4
        %v1276 = vsel %vm1272, %v1256, %v1259
        %v1277 = vsel %vm1275, %v1265, 2102212464
        %v1278 = vsel %vm1274, %v1262, %v1277
        %v1279 = vsel %vm1273, %v1276, %v1278
        %v1280 = vsel %vm1272, %v1259, %v1262
        %v1281 = vsel %vm1275, %v1268, 920167782
        %v1282 = vsel %vm1274, %v1265, %v1281
        %v1283 = vsel %vm1273, %v1280, %v1282
        %v1284 = vsel %vm1272, %v1262, %v1265
        %v1285 = vsel %vm1275, %v1271, 1326507024
        %v1286 = vsel %vm1274, %v1268, %v1285
        %v1287 = vsel %vm1273, %v1284, %v1286
        %v1288 = vshll.u32 %v1248, 8
        %v1289 = vmul.u32.u64.compose %v1288, %v1287
        %v1290 = vextract.low.u32 %v1289
        %v1291 = vextract.high.u32 %v1289
        %v1292 = vmul.u32.u64.compose %v1288, %v1283
        %v1293 = vextract.low.u32 %v1292
        %v1294 = vextract.high.u32 %v1292
        %v1295 = vmul.u32 %v1288, %v1279
        %v1296 = vadd.s32 %v1291, %v1293
        %vm1297 = vc.u32 %v1291, %v1293
        %v1298 = vadd.s32 %v1294, 1
        %v1299 = vsel %vm1297, %v1298, %v1294
        %v1300 = vadd.s32 %v1295, %v1299
        %v1301 = vadd.s32 %v1300, 536870912
        %v1302 = vshrl.u32 %v1301, 30
        %v1303 = vshll.u32 %v1302, 30
        %v1304 = vsub.s32 %v1300, %v1303
        %vm1305 = vcmp.lt.s32.totalorder %v1304, 0
        %v1306 = vsub.s32 0, %v1304
        %v1307 = vsel %vm1305, %v1306, %v1304
        %v1308 = vclz %v1307
        %v1309 = vsub.s32 %v1308, 2
        %vm1310 = vcmp.gt.s32.totalorder 0, %v1309
        %v1311 = vsel %vm1310, 0, %v1309
        %v1312 = vsub.s32 32, %v1311
        %v1313 = vshll.u32 %v1304, %v1311
        %v1314 = vshrl.u32 %v1296, %v1312
        %v1315 = vor.u32 %v1313, %v1314
        %v1316 = vsub.s32 4294967266, %v1311
        %v1317 = vadd.s32 %v1316, 127
        %v1318 = vshll.u32 %v1317, 23
        %v1319 = vor.u32 4788187, %v1318
        %v1320 = vand.u32 2147483647, %v1319
        %v1322 = vcvt.s32.f32 %v1315
        %v1323 = vmul.f32 %v1322, %v1320
        %v1324 = vxor.u32 %v1323, 2147483648
        %v1325 = vsel %vm1242, %v1324, %v1323
        %v1326 = vsub.s32 4, %v1302
        %v1327 = vsel %vm1242, %v1326, %v1302
        %v1328 = vsel %vm1241, %v281, %v1325
        %v1329 = vsel %vm1241, 0, %v1327
        %v1330 = vcosq.f32.pop %v1328
        %v1331 = vsinq.f32.pop %v1328
        %vm1332 = vweird.f32 %v281
        %v1333 = vadd.s32 %v1329, 3
        %v1334 = vand.u32 %v1333, 3
        %vm1335 = vcmp.lt.s32.totalorder %v1334, 2
        %vm1336 = vcmp.eq.s32.totalorder %v1334, 0
        %v1337 = vxor.u32 %v1331, 2147483648
        %v1338 = vsel %vm1336, %v1330, %v1337
        %vm1339 = vcmp.eq.s32.totalorder %v1334, 2
        %v1340 = vxor.u32 %v1330, 2147483648
        %v1341 = vsel %vm1339, %v1340, %v1331
        %v1342 = vsel %vm1335, %v1338, %v1341
        %v1343 = vsel %vm1332, nan, %v1342
        %v1344 = vand.u32 2147483647, %v282
        %vm1345 = vcmp.le.f32.partialorder %v1344, 0.7853982
        %vm1346 = vcmp.lt.s32.totalorder %v282, 0
        %v1347 = vand.u32 %v282, 2139095040
        %v1348 = vshrl.u32 %v1347, 23
        %v1349 = vsub.s32 %v1348, 127
        %v1350 = vand.u32 2147483647, %v282
        %v1351 = vand.u32 %v1350, 8388607
        %v1352 = vor.u32 %v1351, 8388608
        %v1353 = vsub.s32 0, %v1352
        %v1354 = vadd.s32 %v1349, 1
        %vm1355 = vcmp.gt.s32.totalorder %v1354, 0
        %v1356 = vsel %vm1355, %v1354, 0
        %v1357 = vshrl.u32 %v1356, 5
        %v1358 = vand.u32 %v1356, 31
        %v1359 = vsub.s32 32, %v1358
        %v1360 = vshrl.u32 683565275, %v1359
        %v1361 = vshll.u32 683565275, %v1358
        %v1362 = vshrl.u32 2475754826, %v1359
        %v1363 = vor.u32 %v1361, %v1362
        %v1364 = vshll.u32 2475754826, %v1358
        %v1365 = vshrl.u32 2131351028, %v1359
        %v1366 = vor.u32 %v1364, %v1365
        %v1367 = vshll.u32 2131351028, %v1358
        %v1368 = vshrl.u32 2102212464, %v1359
        %v1369 = vor.u32 %v1367, %v1368
        %v1370 = vshll.u32 2102212464, %v1358
        %v1371 = vshrl.u32 920167782, %v1359
        %v1372 = vor.u32 %v1370, %v1371
        %v1373 = vshll.u32 920167782, %v1358
        %v1374 = vshrl.u32 1326507024, %v1359
        %v1375 = vor.u32 %v1373, %v1374
        %vm1376 = vcmp.lt.s32.totalorder %v1357, 1
        %vm1377 = vcmp.lt.s32.totalorder %v1357, 2
        %vm1378 = vcmp.lt.s32.totalorder %v1357, 3
        %vm1379 = vcmp.lt.s32.totalorder %v1357, 4
        %v1380 = vsel %vm1376, %v1360, %v1363
        %v1381 = vsel %vm1379, %v1369, 2102212464
        %v1382 = vsel %vm1378, %v1366, %v1381
        %v1383 = vsel %vm1377, %v1380, %v1382
        %v1384 = vsel %vm1376, %v1363, %v1366
        %v1385 = vsel %vm1379, %v1372, 920167782
        %v1386 = vsel %vm1378, %v1369, %v1385
        %v1387 = vsel %vm1377, %v1384, %v1386
        %v1388 = vsel %vm1376, %v1366, %v1369
        %v1389 = vsel %vm1379, %v1375, 1326507024
        %v1390 = vsel %vm1378, %v1372, %v1389
        %v1391 = vsel %vm1377, %v1388, %v1390
        %v1392 = vshll.u32 %v1352, 8
        %v1393 = vmul.u32.u64.compose %v1392, %v1391
        %v1394 = vextract.low.u32 %v1393
        %v1395 = vextract.high.u32 %v1393
        %v1396 = vmul.u32.u64.compose %v1392, %v1387
        %v1397 = vextract.low.u32 %v1396
        %v1398 = vextract.high.u32 %v1396
        %v1399 = vmul.u32 %v1392, %v1383
        %v1400 = vadd.s32 %v1395, %v1397
        %vm1401 = vc.u32 %v1395, %v1397
        %v1402 = vadd.s32 %v1398, 1
        %v1403 = vsel %vm1401, %v1402, %v1398
        %v1404 = vadd.s32 %v1399, %v1403
        %v1405 = vadd.s32 %v1404, 536870912
        %v1406 = vshrl.u32 %v1405, 30
        %v1407 = vshll.u32 %v1406, 30
        %v1408 = vsub.s32 %v1404, %v1407
        %vm1409 = vcmp.lt.s32.totalorder %v1408, 0
        %v1410 = vsub.s32 0, %v1408
        %v1411 = vsel %vm1409, %v1410, %v1408
        %v1412 = vclz %v1411
        %v1413 = vsub.s32 %v1412, 2
        %vm1414 = vcmp.gt.s32.totalorder 0, %v1413
        %v1415 = vsel %vm1414, 0, %v1413
        %v1416 = vsub.s32 32, %v1415
        %v1417 = vshll.u32 %v1408, %v1415
        %v1418 = vshrl.u32 %v1400, %v1416
        %v1419 = vor.u32 %v1417, %v1418
        %v1420 = vsub.s32 4294967266, %v1415
        %v1421 = vadd.s32 %v1420, 127
        %v1422 = vshll.u32 %v1421, 23
        %v1423 = vor.u32 4788187, %v1422
        %v1424 = vand.u32 2147483647, %v1423
        %v1426 = vcvt.s32.f32 %v1419
        %v1427 = vmul.f32 %v1426, %v1424
        %v1428 = vxor.u32 %v1427, 2147483648
        %v1429 = vsel %vm1346, %v1428, %v1427
        %v1430 = vsub.s32 4, %v1406
        %v1431 = vsel %vm1346, %v1430, %v1406
        %v1432 = vsel %vm1345, %v282, %v1429
        %v1433 = vsel %vm1345, 0, %v1431
        %v1434 = vcosq.f32.pop %v1432
        %v1435 = vsinq.f32.pop %v1432
        %vm1436 = vweird.f32 %v282
        %v1437 = vadd.s32 %v1433, 3
        %v1438 = vand.u32 %v1437, 3
        %vm1439 = vcmp.lt.s32.totalorder %v1438, 2
        %vm1440 = vcmp.eq.s32.totalorder %v1438, 0
        %v1441 = vxor.u32 %v1435, 2147483648
        %v1442 = vsel %vm1440, %v1434, %v1441
        %vm1443 = vcmp.eq.s32.totalorder %v1438, 2
        %v1444 = vxor.u32 %v1434, 2147483648
        %v1445 = vsel %vm1443, %v1444, %v1435
        %v1446 = vsel %vm1439, %v1442, %v1445
        %v1447 = vsel %vm1436, nan, %v1446
        %v1448 = vand.u32 2147483647, %v283
        %vm1449 = vcmp.le.f32.partialorder %v1448, 0.7853982
        %vm1450 = vcmp.lt.s32.totalorder %v283, 0
        %v1451 = vand.u32 %v283, 2139095040
        %v1452 = vshrl.u32 %v1451, 23
        %v1453 = vsub.s32 %v1452, 127
        %v1454 = vand.u32 2147483647, %v283
        %v1455 = vand.u32 %v1454, 8388607
        %v1456 = vor.u32 %v1455, 8388608
        %v1457 = vsub.s32 0, %v1456
        %v1458 = vadd.s32 %v1453, 1
        %vm1459 = vcmp.gt.s32.totalorder %v1458, 0
        %v1460 = vsel %vm1459, %v1458, 0
        %v1461 = vshrl.u32 %v1460, 5
        %v1462 = vand.u32 %v1460, 31
        %v1463 = vsub.s32 32, %v1462
        %v1464 = vshrl.u32 683565275, %v1463
        %v1465 = vshll.u32 683565275, %v1462
        %v1466 = vshrl.u32 2475754826, %v1463
        %v1467 = vor.u32 %v1465, %v1466
        %v1468 = vshll.u32 2475754826, %v1462
        %v1469 = vshrl.u32 2131351028, %v1463
        %v1470 = vor.u32 %v1468, %v1469
        %v1471 = vshll.u32 2131351028, %v1462
        %v1472 = vshrl.u32 2102212464, %v1463
        %v1473 = vor.u32 %v1471, %v1472
        %v1474 = vshll.u32 2102212464, %v1462
        %v1475 = vshrl.u32 920167782, %v1463
        %v1476 = vor.u32 %v1474, %v1475
        %v1477 = vshll.u32 920167782, %v1462
        %v1478 = vshrl.u32 1326507024, %v1463
        %v1479 = vor.u32 %v1477, %v1478
        %vm1480 = vcmp.lt.s32.totalorder %v1461, 1
        %vm1481 = vcmp.lt.s32.totalorder %v1461, 2
        %vm1482 = vcmp.lt.s32.totalorder %v1461, 3
        %vm1483 = vcmp.lt.s32.totalorder %v1461, 4
        %v1484 = vsel %vm1480, %v1464, %v1467
        %v1485 = vsel %vm1483, %v1473, 2102212464
        %v1486 = vsel %vm1482, %v1470, %v1485
        %v1487 = vsel %vm1481, %v1484, %v1486
        %v1488 = vsel %vm1480, %v1467, %v1470
        %v1489 = vsel %vm1483, %v1476, 920167782
        %v1490 = vsel %vm1482, %v1473, %v1489
        %v1491 = vsel %vm1481, %v1488, %v1490
        %v1492 = vsel %vm1480, %v1470, %v1473
        %v1493 = vsel %vm1483, %v1479, 1326507024
        %v1494 = vsel %vm1482, %v1476, %v1493
        %v1495 = vsel %vm1481, %v1492, %v1494
        %v1496 = vshll.u32 %v1456, 8
        %v1497 = vmul.u32.u64.compose %v1496, %v1495
        %v1498 = vextract.low.u32 %v1497
        %v1499 = vextract.high.u32 %v1497
        %v1500 = vmul.u32.u64.compose %v1496, %v1491
        %v1501 = vextract.low.u32 %v1500
        %v1502 = vextract.high.u32 %v1500
        %v1503 = vmul.u32 %v1496, %v1487
        %v1504 = vadd.s32 %v1499, %v1501
        %vm1505 = vc.u32 %v1499, %v1501
        %v1506 = vadd.s32 %v1502, 1
        %v1507 = vsel %vm1505, %v1506, %v1502
        %v1508 = vadd.s32 %v1503, %v1507
        %v1509 = vadd.s32 %v1508, 536870912
        %v1510 = vshrl.u32 %v1509, 30
        %v1511 = vshll.u32 %v1510, 30
        %v1512 = vsub.s32 %v1508, %v1511
        %vm1513 = vcmp.lt.s32.totalorder %v1512, 0
        %v1514 = vsub.s32 0, %v1512
        %v1515 = vsel %vm1513, %v1514, %v1512
        %v1516 = vclz %v1515
        %v1517 = vsub.s32 %v1516, 2
        %vm1518 = vcmp.gt.s32.totalorder 0, %v1517
        %v1519 = vsel %vm1518, 0, %v1517
        %v1520 = vsub.s32 32, %v1519
        %v1521 = vshll.u32 %v1512, %v1519
        %v1522 = vshrl.u32 %v1504, %v1520
        %v1523 = vor.u32 %v1521, %v1522
        %v1524 = vsub.s32 4294967266, %v1519
        %v1525 = vadd.s32 %v1524, 127
        %v1526 = vshll.u32 %v1525, 23
        %v1527 = vor.u32 4788187, %v1526
        %v1528 = vand.u32 2147483647, %v1527
        %v1530 = vcvt.s32.f32 %v1523
        %v1531 = vmul.f32 %v1530, %v1528
        %v1532 = vxor.u32 %v1531, 2147483648
        %v1533 = vsel %vm1450, %v1532, %v1531
        %v1534 = vsub.s32 4, %v1510
        %v1535 = vsel %vm1450, %v1534, %v1510
        %v1536 = vsel %vm1449, %v283, %v1533
        %v1537 = vsel %vm1449, 0, %v1535
        %v1538 = vcosq.f32.pop %v1536
        %v1539 = vsinq.f32.pop %v1536
        %vm1540 = vweird.f32 %v283
        %v1541 = vadd.s32 %v1537, 3
        %v1542 = vand.u32 %v1541, 3
        %vm1543 = vcmp.lt.s32.totalorder %v1542, 2
        %vm1544 = vcmp.eq.s32.totalorder %v1542, 0
        %v1545 = vxor.u32 %v1539, 2147483648
        %v1546 = vsel %vm1544, %v1538, %v1545
        %vm1547 = vcmp.eq.s32.totalorder %v1542, 2
        %v1548 = vxor.u32 %v1538, 2147483648
        %v1549 = vsel %vm1547, %v1548, %v1539
        %v1550 = vsel %vm1543, %v1546, %v1549
        %v1551 = vsel %vm1540, nan, %v1550
        %v1552 = vand.u32 2147483647, %v284
        %vm1553 = vcmp.le.f32.partialorder %v1552, 0.7853982
        %vm1554 = vcmp.lt.s32.totalorder %v284, 0
        %v1555 = vand.u32 %v284, 2139095040
        %v1556 = vshrl.u32 %v1555, 23
        %v1557 = vsub.s32 %v1556, 127
        %v1558 = vand.u32 2147483647, %v284
        %v1559 = vand.u32 %v1558, 8388607
        %v1560 = vor.u32 %v1559, 8388608
        %v1561 = vsub.s32 0, %v1560
        %v1562 = vadd.s32 %v1557, 1
        %vm1563 = vcmp.gt.s32.totalorder %v1562, 0
        %v1564 = vsel %vm1563, %v1562, 0
        %v1565 = vshrl.u32 %v1564, 5
        %v1566 = vand.u32 %v1564, 31
        %v1567 = vsub.s32 32, %v1566
        %v1568 = vshrl.u32 683565275, %v1567
        %v1569 = vshll.u32 683565275, %v1566
        %v1570 = vshrl.u32 2475754826, %v1567
        %v1571 = vor.u32 %v1569, %v1570
        %v1572 = vshll.u32 2475754826, %v1566
        %v1573 = vshrl.u32 2131351028, %v1567
        %v1574 = vor.u32 %v1572, %v1573
        %v1575 = vshll.u32 2131351028, %v1566
        %v1576 = vshrl.u32 2102212464, %v1567
        %v1577 = vor.u32 %v1575, %v1576
        %v1578 = vshll.u32 2102212464, %v1566
        %v1579 = vshrl.u32 920167782, %v1567
        %v1580 = vor.u32 %v1578, %v1579
        %v1581 = vshll.u32 920167782, %v1566
        %v1582 = vshrl.u32 1326507024, %v1567
        %v1583 = vor.u32 %v1581, %v1582
        %vm1584 = vcmp.lt.s32.totalorder %v1565, 1
        %vm1585 = vcmp.lt.s32.totalorder %v1565, 2
        %vm1586 = vcmp.lt.s32.totalorder %v1565, 3
        %vm1587 = vcmp.lt.s32.totalorder %v1565, 4
        %v1588 = vsel %vm1584, %v1568, %v1571
        %v1589 = vsel %vm1587, %v1577, 2102212464
        %v1590 = vsel %vm1586, %v1574, %v1589
        %v1591 = vsel %vm1585, %v1588, %v1590
        %v1592 = vsel %vm1584, %v1571, %v1574
        %v1593 = vsel %vm1587, %v1580, 920167782
        %v1594 = vsel %vm1586, %v1577, %v1593
        %v1595 = vsel %vm1585, %v1592, %v1594
        %v1596 = vsel %vm1584, %v1574, %v1577
        %v1597 = vsel %vm1587, %v1583, 1326507024
        %v1598 = vsel %vm1586, %v1580, %v1597
        %v1599 = vsel %vm1585, %v1596, %v1598
        %v1600 = vshll.u32 %v1560, 8
        %v1601 = vmul.u32.u64.compose %v1600, %v1599
        %v1602 = vextract.low.u32 %v1601
        %v1603 = vextract.high.u32 %v1601
        %v1604 = vmul.u32.u64.compose %v1600, %v1595
        %v1605 = vextract.low.u32 %v1604
        %v1606 = vextract.high.u32 %v1604
        %v1607 = vmul.u32 %v1600, %v1591
        %v1608 = vadd.s32 %v1603, %v1605
        %vm1609 = vc.u32 %v1603, %v1605
        %v1610 = vadd.s32 %v1606, 1
        %v1611 = vsel %vm1609, %v1610, %v1606
        %v1612 = vadd.s32 %v1607, %v1611
        %v1613 = vadd.s32 %v1612, 536870912
        %v1614 = vshrl.u32 %v1613, 30
        %v1615 = vshll.u32 %v1614, 30
        %v1616 = vsub.s32 %v1612, %v1615
        %vm1617 = vcmp.lt.s32.totalorder %v1616, 0
        %v1618 = vsub.s32 0, %v1616
        %v1619 = vsel %vm1617, %v1618, %v1616
        %v1620 = vclz %v1619
        %v1621 = vsub.s32 %v1620, 2
        %vm1622 = vcmp.gt.s32.totalorder 0, %v1621
        %v1623 = vsel %vm1622, 0, %v1621
        %v1624 = vsub.s32 32, %v1623
        %v1625 = vshll.u32 %v1616, %v1623
        %v1626 = vshrl.u32 %v1608, %v1624
        %v1627 = vor.u32 %v1625, %v1626
        %v1628 = vsub.s32 4294967266, %v1623
        %v1629 = vadd.s32 %v1628, 127
        %v1630 = vshll.u32 %v1629, 23
        %v1631 = vor.u32 4788187, %v1630
        %v1632 = vand.u32 2147483647, %v1631
        %v1634 = vcvt.s32.f32 %v1627
        %v1635 = vmul.f32 %v1634, %v1632
        %v1636 = vxor.u32 %v1635, 2147483648
        %v1637 = vsel %vm1554, %v1636, %v1635
        %v1638 = vsub.s32 4, %v1614
        %v1639 = vsel %vm1554, %v1638, %v1614
        %v1640 = vsel %vm1553, %v284, %v1637
        %v1641 = vsel %vm1553, 0, %v1639
        %v1642 = vcosq.f32.pop %v1640
        %v1643 = vsinq.f32.pop %v1640
        %vm1644 = vweird.f32 %v284
        %v1645 = vadd.s32 %v1641, 3
        %v1646 = vand.u32 %v1645, 3
        %vm1647 = vcmp.lt.s32.totalorder %v1646, 2
        %vm1648 = vcmp.eq.s32.totalorder %v1646, 0
        %v1649 = vxor.u32 %v1643, 2147483648
        %v1650 = vsel %vm1648, %v1642, %v1649
        %vm1651 = vcmp.eq.s32.totalorder %v1646, 2
        %v1652 = vxor.u32 %v1642, 2147483648
        %v1653 = vsel %vm1651, %v1652, %v1643
        %v1654 = vsel %vm1647, %v1650, %v1653
        %v1655 = vsel %vm1644, nan, %v1654
        %v1656 = vand.u32 2147483647, %v285
        %vm1657 = vcmp.le.f32.partialorder %v1656, 0.7853982
        %vm1658 = vcmp.lt.s32.totalorder %v285, 0
        %v1659 = vand.u32 %v285, 2139095040
        %v1660 = vshrl.u32 %v1659, 23
        %v1661 = vsub.s32 %v1660, 127
        %v1662 = vand.u32 2147483647, %v285
        %v1663 = vand.u32 %v1662, 8388607
        %v1664 = vor.u32 %v1663, 8388608
        %v1665 = vsub.s32 0, %v1664
        %v1666 = vadd.s32 %v1661, 1
        %vm1667 = vcmp.gt.s32.totalorder %v1666, 0
        %v1668 = vsel %vm1667, %v1666, 0
        %v1669 = vshrl.u32 %v1668, 5
        %v1670 = vand.u32 %v1668, 31
        %v1671 = vsub.s32 32, %v1670
        %v1672 = vshrl.u32 683565275, %v1671
        %v1673 = vshll.u32 683565275, %v1670
        %v1674 = vshrl.u32 2475754826, %v1671
        %v1675 = vor.u32 %v1673, %v1674
        %v1676 = vshll.u32 2475754826, %v1670
        %v1677 = vshrl.u32 2131351028, %v1671
        %v1678 = vor.u32 %v1676, %v1677
        %v1679 = vshll.u32 2131351028, %v1670
        %v1680 = vshrl.u32 2102212464, %v1671
        %v1681 = vor.u32 %v1679, %v1680
        %v1682 = vshll.u32 2102212464, %v1670
        %v1683 = vshrl.u32 920167782, %v1671
        %v1684 = vor.u32 %v1682, %v1683
        %v1685 = vshll.u32 920167782, %v1670
        %v1686 = vshrl.u32 1326507024, %v1671
        %v1687 = vor.u32 %v1685, %v1686
        %vm1688 = vcmp.lt.s32.totalorder %v1669, 1
        %vm1689 = vcmp.lt.s32.totalorder %v1669, 2
        %vm1690 = vcmp.lt.s32.totalorder %v1669, 3
        %vm1691 = vcmp.lt.s32.totalorder %v1669, 4
        %v1692 = vsel %vm1688, %v1672, %v1675
        %v1693 = vsel %vm1691, %v1681, 2102212464
        %v1694 = vsel %vm1690, %v1678, %v1693
        %v1695 = vsel %vm1689, %v1692, %v1694
        %v1696 = vsel %vm1688, %v1675, %v1678
        %v1697 = vsel %vm1691, %v1684, 920167782
        %v1698 = vsel %vm1690, %v1681, %v1697
        %v1699 = vsel %vm1689, %v1696, %v1698
        %v1700 = vsel %vm1688, %v1678, %v1681
        %v1701 = vsel %vm1691, %v1687, 1326507024
        %v1702 = vsel %vm1690, %v1684, %v1701
        %v1703 = vsel %vm1689, %v1700, %v1702
        %v1704 = vshll.u32 %v1664, 8
        %v1705 = vmul.u32.u64.compose %v1704, %v1703
        %v1706 = vextract.low.u32 %v1705
        %v1707 = vextract.high.u32 %v1705
        %v1708 = vmul.u32.u64.compose %v1704, %v1699
        %v1709 = vextract.low.u32 %v1708
        %v1710 = vextract.high.u32 %v1708
        %v1711 = vmul.u32 %v1704, %v1695
        %v1712 = vadd.s32 %v1707, %v1709
        %vm1713 = vc.u32 %v1707, %v1709
        %v1714 = vadd.s32 %v1710, 1
        %v1715 = vsel %vm1713, %v1714, %v1710
        %v1716 = vadd.s32 %v1711, %v1715
        %v1717 = vadd.s32 %v1716, 536870912
        %v1718 = vshrl.u32 %v1717, 30
        %v1719 = vshll.u32 %v1718, 30
        %v1720 = vsub.s32 %v1716, %v1719
        %vm1721 = vcmp.lt.s32.totalorder %v1720, 0
        %v1722 = vsub.s32 0, %v1720
        %v1723 = vsel %vm1721, %v1722, %v1720
        %v1724 = vclz %v1723
        %v1725 = vsub.s32 %v1724, 2
        %vm1726 = vcmp.gt.s32.totalorder 0, %v1725
        %v1727 = vsel %vm1726, 0, %v1725
        %v1728 = vsub.s32 32, %v1727
        %v1729 = vshll.u32 %v1720, %v1727
        %v1730 = vshrl.u32 %v1712, %v1728
        %v1731 = vor.u32 %v1729, %v1730
        %v1732 = vsub.s32 4294967266, %v1727
        %v1733 = vadd.s32 %v1732, 127
        %v1734 = vshll.u32 %v1733, 23
        %v1735 = vor.u32 4788187, %v1734
        %v1736 = vand.u32 2147483647, %v1735
        %v1738 = vcvt.s32.f32 %v1731
        %v1739 = vmul.f32 %v1738, %v1736
        %v1740 = vxor.u32 %v1739, 2147483648
        %v1741 = vsel %vm1658, %v1740, %v1739
        %v1742 = vsub.s32 4, %v1718
        %v1743 = vsel %vm1658, %v1742, %v1718
        %v1744 = vsel %vm1657, %v285, %v1741
        %v1745 = vsel %vm1657, 0, %v1743
        %v1746 = vcosq.f32.pop %v1744
        %v1747 = vsinq.f32.pop %v1744
        %vm1748 = vweird.f32 %v285
        %v1749 = vadd.s32 %v1745, 3
        %v1750 = vand.u32 %v1749, 3
        %vm1751 = vcmp.lt.s32.totalorder %v1750, 2
        %vm1752 = vcmp.eq.s32.totalorder %v1750, 0
        %v1753 = vxor.u32 %v1747, 2147483648
        %v1754 = vsel %vm1752, %v1746, %v1753
        %vm1755 = vcmp.eq.s32.totalorder %v1750, 2
        %v1756 = vxor.u32 %v1746, 2147483648
        %v1757 = vsel %vm1755, %v1756, %v1747
        %v1758 = vsel %vm1751, %v1754, %v1757
        %v1759 = vsel %vm1748, nan, %v1758
        %v1760 = vand.u32 2147483647, %v286
        %vm1761 = vcmp.le.f32.partialorder %v1760, 0.7853982
        %vm1762 = vcmp.lt.s32.totalorder %v286, 0
        %v1763 = vand.u32 %v286, 2139095040
        %v1764 = vshrl.u32 %v1763, 23
        %v1765 = vsub.s32 %v1764, 127
        %v1766 = vand.u32 2147483647, %v286
        %v1767 = vand.u32 %v1766, 8388607
        %v1768 = vor.u32 %v1767, 8388608
        %v1769 = vsub.s32 0, %v1768
        %v1770 = vadd.s32 %v1765, 1
        %vm1771 = vcmp.gt.s32.totalorder %v1770, 0
        %v1772 = vsel %vm1771, %v1770, 0
        %v1773 = vshrl.u32 %v1772, 5
        %v1774 = vand.u32 %v1772, 31
        %v1775 = vsub.s32 32, %v1774
        %v1776 = vshrl.u32 683565275, %v1775
        %v1777 = vshll.u32 683565275, %v1774
        %v1778 = vshrl.u32 2475754826, %v1775
        %v1779 = vor.u32 %v1777, %v1778
        %v1780 = vshll.u32 2475754826, %v1774
        %v1781 = vshrl.u32 2131351028, %v1775
        %v1782 = vor.u32 %v1780, %v1781
        %v1783 = vshll.u32 2131351028, %v1774
        %v1784 = vshrl.u32 2102212464, %v1775
        %v1785 = vor.u32 %v1783, %v1784
        %v1786 = vshll.u32 2102212464, %v1774
        %v1787 = vshrl.u32 920167782, %v1775
        %v1788 = vor.u32 %v1786, %v1787
        %v1789 = vshll.u32 920167782, %v1774
        %v1790 = vshrl.u32 1326507024, %v1775
        %v1791 = vor.u32 %v1789, %v1790
        %vm1792 = vcmp.lt.s32.totalorder %v1773, 1
        %vm1793 = vcmp.lt.s32.totalorder %v1773, 2
        %vm1794 = vcmp.lt.s32.totalorder %v1773, 3
        %vm1795 = vcmp.lt.s32.totalorder %v1773, 4
        %v1796 = vsel %vm1792, %v1776, %v1779
        %v1797 = vsel %vm1795, %v1785, 2102212464
        %v1798 = vsel %vm1794, %v1782, %v1797
        %v1799 = vsel %vm1793, %v1796, %v1798
        %v1800 = vsel %vm1792, %v1779, %v1782
        %v1801 = vsel %vm1795, %v1788, 920167782
        %v1802 = vsel %vm1794, %v1785, %v1801
        %v1803 = vsel %vm1793, %v1800, %v1802
        %v1804 = vsel %vm1792, %v1782, %v1785
        %v1805 = vsel %vm1795, %v1791, 1326507024
        %v1806 = vsel %vm1794, %v1788, %v1805
        %v1807 = vsel %vm1793, %v1804, %v1806
        %v1808 = vshll.u32 %v1768, 8
        %v1809 = vmul.u32.u64.compose %v1808, %v1807
        %v1810 = vextract.low.u32 %v1809
        %v1811 = vextract.high.u32 %v1809
        %v1812 = vmul.u32.u64.compose %v1808, %v1803
        %v1813 = vextract.low.u32 %v1812
        %v1814 = vextract.high.u32 %v1812
        %v1815 = vmul.u32 %v1808, %v1799
        %v1816 = vadd.s32 %v1811, %v1813
        %vm1817 = vc.u32 %v1811, %v1813
        %v1818 = vadd.s32 %v1814, 1
        %v1819 = vsel %vm1817, %v1818, %v1814
        %v1820 = vadd.s32 %v1815, %v1819
        %v1821 = vadd.s32 %v1820, 536870912
        %v1822 = vshrl.u32 %v1821, 30
        %v1823 = vshll.u32 %v1822, 30
        %v1824 = vsub.s32 %v1820, %v1823
        %vm1825 = vcmp.lt.s32.totalorder %v1824, 0
        %v1826 = vsub.s32 0, %v1824
        %v1827 = vsel %vm1825, %v1826, %v1824
        %v1828 = vclz %v1827
        %v1829 = vsub.s32 %v1828, 2
        %vm1830 = vcmp.gt.s32.totalorder 0, %v1829
        %v1831 = vsel %vm1830, 0, %v1829
        %v1832 = vsub.s32 32, %v1831
        %v1833 = vshll.u32 %v1824, %v1831
        %v1834 = vshrl.u32 %v1816, %v1832
        %v1835 = vor.u32 %v1833, %v1834
        %v1836 = vsub.s32 4294967266, %v1831
        %v1837 = vadd.s32 %v1836, 127
        %v1838 = vshll.u32 %v1837, 23
        %v1839 = vor.u32 4788187, %v1838
        %v1840 = vand.u32 2147483647, %v1839
        %v1842 = vcvt.s32.f32 %v1835
        %v1843 = vmul.f32 %v1842, %v1840
        %v1844 = vxor.u32 %v1843, 2147483648
        %v1845 = vsel %vm1762, %v1844, %v1843
        %v1846 = vsub.s32 4, %v1822
        %v1847 = vsel %vm1762, %v1846, %v1822
        %v1848 = vsel %vm1761, %v286, %v1845
        %v1849 = vsel %vm1761, 0, %v1847
        %v1850 = vcosq.f32.pop %v1848
        %v1851 = vsinq.f32.pop %v1848
        %vm1852 = vweird.f32 %v286
        %v1853 = vadd.s32 %v1849, 3
        %v1854 = vand.u32 %v1853, 3
        %vm1855 = vcmp.lt.s32.totalorder %v1854, 2
        %vm1856 = vcmp.eq.s32.totalorder %v1854, 0
        %v1857 = vxor.u32 %v1851, 2147483648
        %v1858 = vsel %vm1856, %v1850, %v1857
        %vm1859 = vcmp.eq.s32.totalorder %v1854, 2
        %v1860 = vxor.u32 %v1850, 2147483648
        %v1861 = vsel %vm1859, %v1860, %v1851
        %v1862 = vsel %vm1855, %v1858, %v1861
        %v1863 = vsel %vm1852, nan, %v1862
        %v1864 = vand.u32 2147483647, %v287
        %vm1865 = vcmp.le.f32.partialorder %v1864, 0.7853982
        %vm1866 = vcmp.lt.s32.totalorder %v287, 0
        %v1867 = vand.u32 %v287, 2139095040
        %v1868 = vshrl.u32 %v1867, 23
        %v1869 = vsub.s32 %v1868, 127
        %v1870 = vand.u32 2147483647, %v287
        %v1871 = vand.u32 %v1870, 8388607
        %v1872 = vor.u32 %v1871, 8388608
        %v1873 = vsub.s32 0, %v1872
        %v1874 = vadd.s32 %v1869, 1
        %vm1875 = vcmp.gt.s32.totalorder %v1874, 0
        %v1876 = vsel %vm1875, %v1874, 0
        %v1877 = vshrl.u32 %v1876, 5
        %v1878 = vand.u32 %v1876, 31
        %v1879 = vsub.s32 32, %v1878
        %v1880 = vshrl.u32 683565275, %v1879
        %v1881 = vshll.u32 683565275, %v1878
        %v1882 = vshrl.u32 2475754826, %v1879
        %v1883 = vor.u32 %v1881, %v1882
        %v1884 = vshll.u32 2475754826, %v1878
        %v1885 = vshrl.u32 2131351028, %v1879
        %v1886 = vor.u32 %v1884, %v1885
        %v1887 = vshll.u32 2131351028, %v1878
        %v1888 = vshrl.u32 2102212464, %v1879
        %v1889 = vor.u32 %v1887, %v1888
        %v1890 = vshll.u32 2102212464, %v1878
        %v1891 = vshrl.u32 920167782, %v1879
        %v1892 = vor.u32 %v1890, %v1891
        %v1893 = vshll.u32 920167782, %v1878
        %v1894 = vshrl.u32 1326507024, %v1879
        %v1895 = vor.u32 %v1893, %v1894
        %vm1896 = vcmp.lt.s32.totalorder %v1877, 1
        %vm1897 = vcmp.lt.s32.totalorder %v1877, 2
        %vm1898 = vcmp.lt.s32.totalorder %v1877, 3
        %vm1899 = vcmp.lt.s32.totalorder %v1877, 4
        %v1900 = vsel %vm1896, %v1880, %v1883
        %v1901 = vsel %vm1899, %v1889, 2102212464
        %v1902 = vsel %vm1898, %v1886, %v1901
        %v1903 = vsel %vm1897, %v1900, %v1902
        %v1904 = vsel %vm1896, %v1883, %v1886
        %v1905 = vsel %vm1899, %v1892, 920167782
        %v1906 = vsel %vm1898, %v1889, %v1905
        %v1907 = vsel %vm1897, %v1904, %v1906
        %v1908 = vsel %vm1896, %v1886, %v1889
        %v1909 = vsel %vm1899, %v1895, 1326507024
        %v1910 = vsel %vm1898, %v1892, %v1909
        %v1911 = vsel %vm1897, %v1908, %v1910
        %v1912 = vshll.u32 %v1872, 8
        %v1913 = vmul.u32.u64.compose %v1912, %v1911
        %v1914 = vextract.low.u32 %v1913
        %v1915 = vextract.high.u32 %v1913
        %v1916 = vmul.u32.u64.compose %v1912, %v1907
        %v1917 = vextract.low.u32 %v1916
        %v1918 = vextract.high.u32 %v1916
        %v1919 = vmul.u32 %v1912, %v1903
        %v1920 = vadd.s32 %v1915, %v1917
        %vm1921 = vc.u32 %v1915, %v1917
        %v1922 = vadd.s32 %v1918, 1
        %v1923 = vsel %vm1921, %v1922, %v1918
        %v1924 = vadd.s32 %v1919, %v1923
        %v1925 = vadd.s32 %v1924, 536870912
        %v1926 = vshrl.u32 %v1925, 30
        %v1927 = vshll.u32 %v1926, 30
        %v1928 = vsub.s32 %v1924, %v1927
        %vm1929 = vcmp.lt.s32.totalorder %v1928, 0
        %v1930 = vsub.s32 0, %v1928
        %v1931 = vsel %vm1929, %v1930, %v1928
        %v1932 = vclz %v1931
        %v1933 = vsub.s32 %v1932, 2
        %vm1934 = vcmp.gt.s32.totalorder 0, %v1933
        %v1935 = vsel %vm1934, 0, %v1933
        %v1936 = vsub.s32 32, %v1935
        %v1937 = vshll.u32 %v1928, %v1935
        %v1938 = vshrl.u32 %v1920, %v1936
        %v1939 = vor.u32 %v1937, %v1938
        %v1940 = vsub.s32 4294967266, %v1935
        %v1941 = vadd.s32 %v1940, 127
        %v1942 = vshll.u32 %v1941, 23
        %v1943 = vor.u32 4788187, %v1942
        %v1944 = vand.u32 2147483647, %v1943
        %v1946 = vcvt.s32.f32 %v1939
        %v1947 = vmul.f32 %v1946, %v1944
        %v1948 = vxor.u32 %v1947, 2147483648
        %v1949 = vsel %vm1866, %v1948, %v1947
        %v1950 = vsub.s32 4, %v1926
        %v1951 = vsel %vm1866, %v1950, %v1926
        %v1952 = vsel %vm1865, %v287, %v1949
        %v1953 = vsel %vm1865, 0, %v1951
        %v1954 = vcosq.f32.pop %v1952
        %v1955 = vsinq.f32.pop %v1952
        %vm1956 = vweird.f32 %v287
        %v1957 = vadd.s32 %v1953, 3
        %v1958 = vand.u32 %v1957, 3
        %vm1959 = vcmp.lt.s32.totalorder %v1958, 2
        %vm1960 = vcmp.eq.s32.totalorder %v1958, 0
        %v1961 = vxor.u32 %v1955, 2147483648
        %v1962 = vsel %vm1960, %v1954, %v1961
        %vm1963 = vcmp.eq.s32.totalorder %v1958, 2
        %v1964 = vxor.u32 %v1954, 2147483648
        %v1965 = vsel %vm1963, %v1964, %v1955
        %v1966 = vsel %vm1959, %v1962, %v1965
        %v1967 = vsel %vm1956, nan, %v1966
        %v1968 = vsel %vm288, 1.0, %v272
        %v1969 = vsel %vm289, 1.0, %v273
        %v1970 = vsel %vm290, 1.0, %v274
        %v1971 = vsel %vm291, 1.0, %v275
        %v1972 = vsel %vm292, 1.0, %v276
        %v1973 = vsel %vm293, 1.0, %v277
        %v1974 = vsel %vm294, 1.0, %v278
        %v1975 = vsel %vm295, 1.0, %v279
        %v1976 = vsel %vm296, 1.0, %v280
        %v1977 = vsel %vm297, 1.0, %v281
        %v1978 = vsel %vm298, 1.0, %v282
        %v1979 = vsel %vm299, 1.0, %v283
        %v1980 = vsel %vm300, 1.0, %v284
        %v1981 = vsel %vm301, 1.0, %v285
        %v1982 = vsel %vm302, 1.0, %v286
        %v1983 = vsel %vm303, 1.0, %v287
        %v1984 = vrcp.pop %v1968
        %v1985 = vmul.f32 %v407, %v1984
        %v1986 = vrcp.pop %v1969
        %v1987 = vmul.f32 %v511, %v1986
        %v1988 = vrcp.pop %v1970
        %v1989 = vmul.f32 %v615, %v1988
        %v1990 = vrcp.pop %v1971
        %v1991 = vmul.f32 %v719, %v1990
        %v1992 = vrcp.pop %v1972
        %v1993 = vmul.f32 %v823, %v1992
        %v1994 = vrcp.pop %v1973
        %v1995 = vmul.f32 %v927, %v1994
        %v1996 = vrcp.pop %v1974
        %v1997 = vmul.f32 %v1031, %v1996
        %v1998 = vrcp.pop %v1975
        %v1999 = vmul.f32 %v1135, %v1998
        %v2000 = vrcp.pop %v1976
        %v2001 = vmul.f32 %v1239, %v2000
        %v2002 = vrcp.pop %v1977
        %v2003 = vmul.f32 %v1343, %v2002
        %v2004 = vrcp.pop %v1978
        %v2005 = vmul.f32 %v1447, %v2004
        %v2006 = vrcp.pop %v1979
        %v2007 = vmul.f32 %v1551, %v2006
        %v2008 = vrcp.pop %v1980
        %v2009 = vmul.f32 %v1655, %v2008
        %v2010 = vrcp.pop %v1981
        %v2011 = vmul.f32 %v1759, %v2010
        %v2012 = vrcp.pop %v1982
        %v2013 = vmul.f32 %v1863, %v2012
        %v2014 = vrcp.pop %v1983
        %v2015 = vmul.f32 %v1967, %v2014
        %v2016 = vsel %vm288, 1.0, %v1985
        %v2017 = vsel %vm289, 1.0, %v1987
        %v2018 = vsel %vm290, 1.0, %v1989
        %v2019 = vsel %vm291, 1.0, %v1991
        %v2020 = vsel %vm292, 1.0, %v1993
        %v2021 = vsel %vm293, 1.0, %v1995
        %v2022 = vsel %vm294, 1.0, %v1997
        %v2023 = vsel %vm295, 1.0, %v1999
        %v2024 = vsel %vm296, 1.0, %v2001
        %v2025 = vsel %vm297, 1.0, %v2003
        %v2026 = vsel %vm298, 1.0, %v2005
        %v2027 = vsel %vm299, 1.0, %v2007
        %v2028 = vsel %vm300, 1.0, %v2009
        %v2029 = vsel %vm301, 1.0, %v2011
        %v2030 = vsel %vm302, 1.0, %v2013
        %v2031 = vsel %vm303, 1.0, %v2015
        %vm2032 = vcmp.lt.f32.partialorder %v256, 16.0
        %vm2033 = vcmp.lt.f32.partialorder %v257, 16.0
        %vm2034 = vcmp.lt.f32.partialorder %v258, 16.0
        %vm2035 = vcmp.lt.f32.partialorder %v259, 16.0
        %vm2036 = vcmp.lt.f32.partialorder %v260, 16.0
        %vm2037 = vcmp.lt.f32.partialorder %v261, 16.0
        %vm2038 = vcmp.lt.f32.partialorder %v262, 16.0
        %vm2039 = vcmp.lt.f32.partialorder %v263, 16.0
        %vm2040 = vcmp.lt.f32.partialorder %v264, 16.0
        %vm2041 = vcmp.lt.f32.partialorder %v265, 16.0
        %vm2042 = vcmp.lt.f32.partialorder %v266, 16.0
        %vm2043 = vcmp.lt.f32.partialorder %v267, 16.0
        %vm2044 = vcmp.lt.f32.partialorder %v268, 16.0
        %vm2045 = vcmp.lt.f32.partialorder %v269, 16.0
        %vm2046 = vcmp.lt.f32.partialorder %v270, 16.0
        %vm2047 = vcmp.lt.f32.partialorder %v271, 16.0
        %v2048 = vmul.f32 %v240, 0.19634955
        %v2049 = vmul.f32 %v241, 0.19634955
        %v2050 = vmul.f32 %v242, 0.19634955
        %v2051 = vmul.f32 %v243, 0.19634955
        %v2052 = vmul.f32 %v244, 0.19634955
        %v2053 = vmul.f32 %v245, 0.19634955
        %v2054 = vmul.f32 %v246, 0.19634955
        %v2055 = vmul.f32 %v247, 0.19634955
        %v2056 = vmul.f32 %v248, 0.19634955
        %v2057 = vmul.f32 %v249, 0.19634955
        %v2058 = vmul.f32 %v250, 0.19634955
        %v2059 = vmul.f32 %v251, 0.19634955
        %v2060 = vmul.f32 %v252, 0.19634955
        %v2061 = vmul.f32 %v253, 0.19634955
        %v2062 = vmul.f32 %v254, 0.19634955
        %v2063 = vmul.f32 %v255, 0.19634955
        %v2064 = vand.u32 2147483647, %v2048
        %vm2065 = vcmp.le.f32.partialorder %v2064, 0.7853982
        %vm2066 = vcmp.lt.s32.totalorder %v2048, 0
        %v2067 = vand.u32 %v2048, 2139095040
        %v2068 = vshrl.u32 %v2067, 23
        %v2069 = vsub.s32 %v2068, 127
        %v2070 = vand.u32 2147483647, %v2048
        %v2071 = vand.u32 %v2070, 8388607
        %v2072 = vor.u32 %v2071, 8388608
        %v2073 = vsub.s32 0, %v2072
        %v2074 = vadd.s32 %v2069, 1
        %vm2075 = vcmp.gt.s32.totalorder %v2074, 0
        %v2076 = vsel %vm2075, %v2074, 0
        %v2077 = vshrl.u32 %v2076, 5
        %v2078 = vand.u32 %v2076, 31
        %v2079 = vsub.s32 32, %v2078
        %v2080 = vshrl.u32 683565275, %v2079
        %v2081 = vshll.u32 683565275, %v2078
        %v2082 = vshrl.u32 2475754826, %v2079
        %v2083 = vor.u32 %v2081, %v2082
        %v2084 = vshll.u32 2475754826, %v2078
        %v2085 = vshrl.u32 2131351028, %v2079
        %v2086 = vor.u32 %v2084, %v2085
        %v2087 = vshll.u32 2131351028, %v2078
        %v2088 = vshrl.u32 2102212464, %v2079
        %v2089 = vor.u32 %v2087, %v2088
        %v2090 = vshll.u32 2102212464, %v2078
        %v2091 = vshrl.u32 920167782, %v2079
        %v2092 = vor.u32 %v2090, %v2091
        %v2093 = vshll.u32 920167782, %v2078
        %v2094 = vshrl.u32 1326507024, %v2079
        %v2095 = vor.u32 %v2093, %v2094
        %vm2096 = vcmp.lt.s32.totalorder %v2077, 1
        %vm2097 = vcmp.lt.s32.totalorder %v2077, 2
        %vm2098 = vcmp.lt.s32.totalorder %v2077, 3
        %vm2099 = vcmp.lt.s32.totalorder %v2077, 4
        %v2100 = vsel %vm2096, %v2080, %v2083
        %v2101 = vsel %vm2099, %v2089, 2102212464
        %v2102 = vsel %vm2098, %v2086, %v2101
        %v2103 = vsel %vm2097, %v2100, %v2102
        %v2104 = vsel %vm2096, %v2083, %v2086
        %v2105 = vsel %vm2099, %v2092, 920167782
        %v2106 = vsel %vm2098, %v2089, %v2105
        %v2107 = vsel %vm2097, %v2104, %v2106
        %v2108 = vsel %vm2096, %v2086, %v2089
        %v2109 = vsel %vm2099, %v2095, 1326507024
        %v2110 = vsel %vm2098, %v2092, %v2109
        %v2111 = vsel %vm2097, %v2108, %v2110
        %v2112 = vshll.u32 %v2072, 8
        %v2113 = vmul.u32.u64.compose %v2112, %v2111
        %v2114 = vextract.low.u32 %v2113
        %v2115 = vextract.high.u32 %v2113
        %v2116 = vmul.u32.u64.compose %v2112, %v2107
        %v2117 = vextract.low.u32 %v2116
        %v2118 = vextract.high.u32 %v2116
        %v2119 = vmul.u32 %v2112, %v2103
        %v2120 = vadd.s32 %v2115, %v2117
        %vm2121 = vc.u32 %v2115, %v2117
        %v2122 = vadd.s32 %v2118, 1
        %v2123 = vsel %vm2121, %v2122, %v2118
        %v2124 = vadd.s32 %v2119, %v2123
        %v2125 = vadd.s32 %v2124, 536870912
        %v2126 = vshrl.u32 %v2125, 30
        %v2127 = vshll.u32 %v2126, 30
        %v2128 = vsub.s32 %v2124, %v2127
        %vm2129 = vcmp.lt.s32.totalorder %v2128, 0
        %v2130 = vsub.s32 0, %v2128
        %v2131 = vsel %vm2129, %v2130, %v2128
        %v2132 = vclz %v2131
        %v2133 = vsub.s32 %v2132, 2
        %vm2134 = vcmp.gt.s32.totalorder 0, %v2133
        %v2135 = vsel %vm2134, 0, %v2133
        %v2136 = vsub.s32 32, %v2135
        %v2137 = vshll.u32 %v2128, %v2135
        %v2138 = vshrl.u32 %v2120, %v2136
        %v2139 = vor.u32 %v2137, %v2138
        %v2140 = vsub.s32 4294967266, %v2135
        %v2141 = vadd.s32 %v2140, 127
        %v2142 = vshll.u32 %v2141, 23
        %v2143 = vor.u32 4788187, %v2142
        %v2144 = vand.u32 2147483647, %v2143
        %v2146 = vcvt.s32.f32 %v2139
        %v2147 = vmul.f32 %v2146, %v2144
        %v2148 = vxor.u32 %v2147, 2147483648
        %v2149 = vsel %vm2066, %v2148, %v2147
        %v2150 = vsub.s32 4, %v2126
        %v2151 = vsel %vm2066, %v2150, %v2126
        %v2152 = vsel %vm2065, %v2048, %v2149
        %v2153 = vsel %vm2065, 0, %v2151
        %v2154 = vcosq.f32.pop %v2152
        %v2155 = vsinq.f32.pop %v2152
        %vm2156 = vweird.f32 %v2048
        %v2157 = vand.u32 %v2153, 3
        %vm2158 = vcmp.lt.s32.totalorder %v2157, 2
        %vm2159 = vcmp.eq.s32.totalorder %v2157, 0
        %v2160 = vxor.u32 %v2155, 2147483648
        %v2161 = vsel %vm2159, %v2154, %v2160
        %vm2162 = vcmp.eq.s32.totalorder %v2157, 2
        %v2163 = vxor.u32 %v2154, 2147483648
        %v2164 = vsel %vm2162, %v2163, %v2155
        %v2165 = vsel %vm2158, %v2161, %v2164
        %v2166 = vsel %vm2156, nan, %v2165
        %v2167 = vand.u32 2147483647, %v2049
        %vm2168 = vcmp.le.f32.partialorder %v2167, 0.7853982
        %vm2169 = vcmp.lt.s32.totalorder %v2049, 0
        %v2170 = vand.u32 %v2049, 2139095040
        %v2171 = vshrl.u32 %v2170, 23
        %v2172 = vsub.s32 %v2171, 127
        %v2173 = vand.u32 2147483647, %v2049
        %v2174 = vand.u32 %v2173, 8388607
        %v2175 = vor.u32 %v2174, 8388608
        %v2176 = vsub.s32 0, %v2175
        %v2177 = vadd.s32 %v2172, 1
        %vm2178 = vcmp.gt.s32.totalorder %v2177, 0
        %v2179 = vsel %vm2178, %v2177, 0
        %v2180 = vshrl.u32 %v2179, 5
        %v2181 = vand.u32 %v2179, 31
        %v2182 = vsub.s32 32, %v2181
        %v2183 = vshrl.u32 683565275, %v2182
        %v2184 = vshll.u32 683565275, %v2181
        %v2185 = vshrl.u32 2475754826, %v2182
        %v2186 = vor.u32 %v2184, %v2185
        %v2187 = vshll.u32 2475754826, %v2181
        %v2188 = vshrl.u32 2131351028, %v2182
        %v2189 = vor.u32 %v2187, %v2188
        %v2190 = vshll.u32 2131351028, %v2181
        %v2191 = vshrl.u32 2102212464, %v2182
        %v2192 = vor.u32 %v2190, %v2191
        %v2193 = vshll.u32 2102212464, %v2181
        %v2194 = vshrl.u32 920167782, %v2182
        %v2195 = vor.u32 %v2193, %v2194
        %v2196 = vshll.u32 920167782, %v2181
        %v2197 = vshrl.u32 1326507024, %v2182
        %v2198 = vor.u32 %v2196, %v2197
        %vm2199 = vcmp.lt.s32.totalorder %v2180, 1
        %vm2200 = vcmp.lt.s32.totalorder %v2180, 2
        %vm2201 = vcmp.lt.s32.totalorder %v2180, 3
        %vm2202 = vcmp.lt.s32.totalorder %v2180, 4
        %v2203 = vsel %vm2199, %v2183, %v2186
        %v2204 = vsel %vm2202, %v2192, 2102212464
        %v2205 = vsel %vm2201, %v2189, %v2204
        %v2206 = vsel %vm2200, %v2203, %v2205
        %v2207 = vsel %vm2199, %v2186, %v2189
        %v2208 = vsel %vm2202, %v2195, 920167782
        %v2209 = vsel %vm2201, %v2192, %v2208
        %v2210 = vsel %vm2200, %v2207, %v2209
        %v2211 = vsel %vm2199, %v2189, %v2192
        %v2212 = vsel %vm2202, %v2198, 1326507024
        %v2213 = vsel %vm2201, %v2195, %v2212
        %v2214 = vsel %vm2200, %v2211, %v2213
        %v2215 = vshll.u32 %v2175, 8
        %v2216 = vmul.u32.u64.compose %v2215, %v2214
        %v2217 = vextract.low.u32 %v2216
        %v2218 = vextract.high.u32 %v2216
        %v2219 = vmul.u32.u64.compose %v2215, %v2210
        %v2220 = vextract.low.u32 %v2219
        %v2221 = vextract.high.u32 %v2219
        %v2222 = vmul.u32 %v2215, %v2206
        %v2223 = vadd.s32 %v2218, %v2220
        %vm2224 = vc.u32 %v2218, %v2220
        %v2225 = vadd.s32 %v2221, 1
        %v2226 = vsel %vm2224, %v2225, %v2221
        %v2227 = vadd.s32 %v2222, %v2226
        %v2228 = vadd.s32 %v2227, 536870912
        %v2229 = vshrl.u32 %v2228, 30
        %v2230 = vshll.u32 %v2229, 30
        %v2231 = vsub.s32 %v2227, %v2230
        %vm2232 = vcmp.lt.s32.totalorder %v2231, 0
        %v2233 = vsub.s32 0, %v2231
        %v2234 = vsel %vm2232, %v2233, %v2231
        %v2235 = vclz %v2234
        %v2236 = vsub.s32 %v2235, 2
        %vm2237 = vcmp.gt.s32.totalorder 0, %v2236
        %v2238 = vsel %vm2237, 0, %v2236
        %v2239 = vsub.s32 32, %v2238
        %v2240 = vshll.u32 %v2231, %v2238
        %v2241 = vshrl.u32 %v2223, %v2239
        %v2242 = vor.u32 %v2240, %v2241
        %v2243 = vsub.s32 4294967266, %v2238
        %v2244 = vadd.s32 %v2243, 127
        %v2245 = vshll.u32 %v2244, 23
        %v2246 = vor.u32 4788187, %v2245
        %v2247 = vand.u32 2147483647, %v2246
        %v2249 = vcvt.s32.f32 %v2242
        %v2250 = vmul.f32 %v2249, %v2247
        %v2251 = vxor.u32 %v2250, 2147483648
        %v2252 = vsel %vm2169, %v2251, %v2250
        %v2253 = vsub.s32 4, %v2229
        %v2254 = vsel %vm2169, %v2253, %v2229
        %v2255 = vsel %vm2168, %v2049, %v2252
        %v2256 = vsel %vm2168, 0, %v2254
        %v2257 = vcosq.f32.pop %v2255
        %v2258 = vsinq.f32.pop %v2255
        %vm2259 = vweird.f32 %v2049
        %v2260 = vand.u32 %v2256, 3
        %vm2261 = vcmp.lt.s32.totalorder %v2260, 2
        %vm2262 = vcmp.eq.s32.totalorder %v2260, 0
        %v2263 = vxor.u32 %v2258, 2147483648
        %v2264 = vsel %vm2262, %v2257, %v2263
        %vm2265 = vcmp.eq.s32.totalorder %v2260, 2
        %v2266 = vxor.u32 %v2257, 2147483648
        %v2267 = vsel %vm2265, %v2266, %v2258
        %v2268 = vsel %vm2261, %v2264, %v2267
        %v2269 = vsel %vm2259, nan, %v2268
        %v2270 = vand.u32 2147483647, %v2050
        %vm2271 = vcmp.le.f32.partialorder %v2270, 0.7853982
        %vm2272 = vcmp.lt.s32.totalorder %v2050, 0
        %v2273 = vand.u32 %v2050, 2139095040
        %v2274 = vshrl.u32 %v2273, 23
        %v2275 = vsub.s32 %v2274, 127
        %v2276 = vand.u32 2147483647, %v2050
        %v2277 = vand.u32 %v2276, 8388607
        %v2278 = vor.u32 %v2277, 8388608
        %v2279 = vsub.s32 0, %v2278
        %v2280 = vadd.s32 %v2275, 1
        %vm2281 = vcmp.gt.s32.totalorder %v2280, 0
        %v2282 = vsel %vm2281, %v2280, 0
        %v2283 = vshrl.u32 %v2282, 5
        %v2284 = vand.u32 %v2282, 31
        %v2285 = vsub.s32 32, %v2284
        %v2286 = vshrl.u32 683565275, %v2285
        %v2287 = vshll.u32 683565275, %v2284
        %v2288 = vshrl.u32 2475754826, %v2285
        %v2289 = vor.u32 %v2287, %v2288
        %v2290 = vshll.u32 2475754826, %v2284
        %v2291 = vshrl.u32 2131351028, %v2285
        %v2292 = vor.u32 %v2290, %v2291
        %v2293 = vshll.u32 2131351028, %v2284
        %v2294 = vshrl.u32 2102212464, %v2285
        %v2295 = vor.u32 %v2293, %v2294
        %v2296 = vshll.u32 2102212464, %v2284
        %v2297 = vshrl.u32 920167782, %v2285
        %v2298 = vor.u32 %v2296, %v2297
        %v2299 = vshll.u32 920167782, %v2284
        %v2300 = vshrl.u32 1326507024, %v2285
        %v2301 = vor.u32 %v2299, %v2300
        %vm2302 = vcmp.lt.s32.totalorder %v2283, 1
        %vm2303 = vcmp.lt.s32.totalorder %v2283, 2
        %vm2304 = vcmp.lt.s32.totalorder %v2283, 3
        %vm2305 = vcmp.lt.s32.totalorder %v2283, 4
        %v2306 = vsel %vm2302, %v2286, %v2289
        %v2307 = vsel %vm2305, %v2295, 2102212464
        %v2308 = vsel %vm2304, %v2292, %v2307
        %v2309 = vsel %vm2303, %v2306, %v2308
        %v2310 = vsel %vm2302, %v2289, %v2292
        %v2311 = vsel %vm2305, %v2298, 920167782
        %v2312 = vsel %vm2304, %v2295, %v2311
        %v2313 = vsel %vm2303, %v2310, %v2312
        %v2314 = vsel %vm2302, %v2292, %v2295
        %v2315 = vsel %vm2305, %v2301, 1326507024
        %v2316 = vsel %vm2304, %v2298, %v2315
        %v2317 = vsel %vm2303, %v2314, %v2316
        %v2318 = vshll.u32 %v2278, 8
        %v2319 = vmul.u32.u64.compose %v2318, %v2317
        %v2320 = vextract.low.u32 %v2319
        %v2321 = vextract.high.u32 %v2319
        %v2322 = vmul.u32.u64.compose %v2318, %v2313
        %v2323 = vextract.low.u32 %v2322
        %v2324 = vextract.high.u32 %v2322
        %v2325 = vmul.u32 %v2318, %v2309
        %v2326 = vadd.s32 %v2321, %v2323
        %vm2327 = vc.u32 %v2321, %v2323
        %v2328 = vadd.s32 %v2324, 1
        %v2329 = vsel %vm2327, %v2328, %v2324
        %v2330 = vadd.s32 %v2325, %v2329
        %v2331 = vadd.s32 %v2330, 536870912
        %v2332 = vshrl.u32 %v2331, 30
        %v2333 = vshll.u32 %v2332, 30
        %v2334 = vsub.s32 %v2330, %v2333
        %vm2335 = vcmp.lt.s32.totalorder %v2334, 0
        %v2336 = vsub.s32 0, %v2334
        %v2337 = vsel %vm2335, %v2336, %v2334
        %v2338 = vclz %v2337
        %v2339 = vsub.s32 %v2338, 2
        %vm2340 = vcmp.gt.s32.totalorder 0, %v2339
        %v2341 = vsel %vm2340, 0, %v2339
        %v2342 = vsub.s32 32, %v2341
        %v2343 = vshll.u32 %v2334, %v2341
        %v2344 = vshrl.u32 %v2326, %v2342
        %v2345 = vor.u32 %v2343, %v2344
        %v2346 = vsub.s32 4294967266, %v2341
        %v2347 = vadd.s32 %v2346, 127
        %v2348 = vshll.u32 %v2347, 23
        %v2349 = vor.u32 4788187, %v2348
        %v2350 = vand.u32 2147483647, %v2349
        %v2352 = vcvt.s32.f32 %v2345
        %v2353 = vmul.f32 %v2352, %v2350
        %v2354 = vxor.u32 %v2353, 2147483648
        %v2355 = vsel %vm2272, %v2354, %v2353
        %v2356 = vsub.s32 4, %v2332
        %v2357 = vsel %vm2272, %v2356, %v2332
        %v2358 = vsel %vm2271, %v2050, %v2355
        %v2359 = vsel %vm2271, 0, %v2357
        %v2360 = vcosq.f32.pop %v2358
        %v2361 = vsinq.f32.pop %v2358
        %vm2362 = vweird.f32 %v2050
        %v2363 = vand.u32 %v2359, 3
        %vm2364 = vcmp.lt.s32.totalorder %v2363, 2
        %vm2365 = vcmp.eq.s32.totalorder %v2363, 0
        %v2366 = vxor.u32 %v2361, 2147483648
        %v2367 = vsel %vm2365, %v2360, %v2366
        %vm2368 = vcmp.eq.s32.totalorder %v2363, 2
        %v2369 = vxor.u32 %v2360, 2147483648
        %v2370 = vsel %vm2368, %v2369, %v2361
        %v2371 = vsel %vm2364, %v2367, %v2370
        %v2372 = vsel %vm2362, nan, %v2371
        %v2373 = vand.u32 2147483647, %v2051
        %vm2374 = vcmp.le.f32.partialorder %v2373, 0.7853982
        %vm2375 = vcmp.lt.s32.totalorder %v2051, 0
        %v2376 = vand.u32 %v2051, 2139095040
        %v2377 = vshrl.u32 %v2376, 23
        %v2378 = vsub.s32 %v2377, 127
        %v2379 = vand.u32 2147483647, %v2051
        %v2380 = vand.u32 %v2379, 8388607
        %v2381 = vor.u32 %v2380, 8388608
        %v2382 = vsub.s32 0, %v2381
        %v2383 = vadd.s32 %v2378, 1
        %vm2384 = vcmp.gt.s32.totalorder %v2383, 0
        %v2385 = vsel %vm2384, %v2383, 0
        %v2386 = vshrl.u32 %v2385, 5
        %v2387 = vand.u32 %v2385, 31
        %v2388 = vsub.s32 32, %v2387
        %v2389 = vshrl.u32 683565275, %v2388
        %v2390 = vshll.u32 683565275, %v2387
        %v2391 = vshrl.u32 2475754826, %v2388
        %v2392 = vor.u32 %v2390, %v2391
        %v2393 = vshll.u32 2475754826, %v2387
        %v2394 = vshrl.u32 2131351028, %v2388
        %v2395 = vor.u32 %v2393, %v2394
        %v2396 = vshll.u32 2131351028, %v2387
        %v2397 = vshrl.u32 2102212464, %v2388
        %v2398 = vor.u32 %v2396, %v2397
        %v2399 = vshll.u32 2102212464, %v2387
        %v2400 = vshrl.u32 920167782, %v2388
        %v2401 = vor.u32 %v2399, %v2400
        %v2402 = vshll.u32 920167782, %v2387
        %v2403 = vshrl.u32 1326507024, %v2388
        %v2404 = vor.u32 %v2402, %v2403
        %vm2405 = vcmp.lt.s32.totalorder %v2386, 1
        %vm2406 = vcmp.lt.s32.totalorder %v2386, 2
        %vm2407 = vcmp.lt.s32.totalorder %v2386, 3
        %vm2408 = vcmp.lt.s32.totalorder %v2386, 4
        %v2409 = vsel %vm2405, %v2389, %v2392
        %v2410 = vsel %vm2408, %v2398, 2102212464
        %v2411 = vsel %vm2407, %v2395, %v2410
        %v2412 = vsel %vm2406, %v2409, %v2411
        %v2413 = vsel %vm2405, %v2392, %v2395
        %v2414 = vsel %vm2408, %v2401, 920167782
        %v2415 = vsel %vm2407, %v2398, %v2414
        %v2416 = vsel %vm2406, %v2413, %v2415
        %v2417 = vsel %vm2405, %v2395, %v2398
        %v2418 = vsel %vm2408, %v2404, 1326507024
        %v2419 = vsel %vm2407, %v2401, %v2418
        %v2420 = vsel %vm2406, %v2417, %v2419
        %v2421 = vshll.u32 %v2381, 8
        %v2422 = vmul.u32.u64.compose %v2421, %v2420
        %v2423 = vextract.low.u32 %v2422
        %v2424 = vextract.high.u32 %v2422
        %v2425 = vmul.u32.u64.compose %v2421, %v2416
        %v2426 = vextract.low.u32 %v2425
        %v2427 = vextract.high.u32 %v2425
        %v2428 = vmul.u32 %v2421, %v2412
        %v2429 = vadd.s32 %v2424, %v2426
        %vm2430 = vc.u32 %v2424, %v2426
        %v2431 = vadd.s32 %v2427, 1
        %v2432 = vsel %vm2430, %v2431, %v2427
        %v2433 = vadd.s32 %v2428, %v2432
        %v2434 = vadd.s32 %v2433, 536870912
        %v2435 = vshrl.u32 %v2434, 30
        %v2436 = vshll.u32 %v2435, 30
        %v2437 = vsub.s32 %v2433, %v2436
        %vm2438 = vcmp.lt.s32.totalorder %v2437, 0
        %v2439 = vsub.s32 0, %v2437
        %v2440 = vsel %vm2438, %v2439, %v2437
        %v2441 = vclz %v2440
        %v2442 = vsub.s32 %v2441, 2
        %vm2443 = vcmp.gt.s32.totalorder 0, %v2442
        %v2444 = vsel %vm2443, 0, %v2442
        %v2445 = vsub.s32 32, %v2444
        %v2446 = vshll.u32 %v2437, %v2444
        %v2447 = vshrl.u32 %v2429, %v2445
        %v2448 = vor.u32 %v2446, %v2447
        %v2449 = vsub.s32 4294967266, %v2444
        %v2450 = vadd.s32 %v2449, 127
        %v2451 = vshll.u32 %v2450, 23
        %v2452 = vor.u32 4788187, %v2451
        %v2453 = vand.u32 2147483647, %v2452
        %v2455 = vcvt.s32.f32 %v2448
        %v2456 = vmul.f32 %v2455, %v2453
        %v2457 = vxor.u32 %v2456, 2147483648
        %v2458 = vsel %vm2375, %v2457, %v2456
        %v2459 = vsub.s32 4, %v2435
        %v2460 = vsel %vm2375, %v2459, %v2435
        %v2461 = vsel %vm2374, %v2051, %v2458
        %v2462 = vsel %vm2374, 0, %v2460
        %v2463 = vcosq.f32.pop %v2461
        %v2464 = vsinq.f32.pop %v2461
        %vm2465 = vweird.f32 %v2051
        %v2466 = vand.u32 %v2462, 3
        %vm2467 = vcmp.lt.s32.totalorder %v2466, 2
        %vm2468 = vcmp.eq.s32.totalorder %v2466, 0
        %v2469 = vxor.u32 %v2464, 2147483648
        %v2470 = vsel %vm2468, %v2463, %v2469
        %vm2471 = vcmp.eq.s32.totalorder %v2466, 2
        %v2472 = vxor.u32 %v2463, 2147483648
        %v2473 = vsel %vm2471, %v2472, %v2464
        %v2474 = vsel %vm2467, %v2470, %v2473
        %v2475 = vsel %vm2465, nan, %v2474
        %v2476 = vand.u32 2147483647, %v2052
        %vm2477 = vcmp.le.f32.partialorder %v2476, 0.7853982
        %vm2478 = vcmp.lt.s32.totalorder %v2052, 0
        %v2479 = vand.u32 %v2052, 2139095040
        %v2480 = vshrl.u32 %v2479, 23
        %v2481 = vsub.s32 %v2480, 127
        %v2482 = vand.u32 2147483647, %v2052
        %v2483 = vand.u32 %v2482, 8388607
        %v2484 = vor.u32 %v2483, 8388608
        %v2485 = vsub.s32 0, %v2484
        %v2486 = vadd.s32 %v2481, 1
        %vm2487 = vcmp.gt.s32.totalorder %v2486, 0
        %v2488 = vsel %vm2487, %v2486, 0
        %v2489 = vshrl.u32 %v2488, 5
        %v2490 = vand.u32 %v2488, 31
        %v2491 = vsub.s32 32, %v2490
        %v2492 = vshrl.u32 683565275, %v2491
        %v2493 = vshll.u32 683565275, %v2490
        %v2494 = vshrl.u32 2475754826, %v2491
        %v2495 = vor.u32 %v2493, %v2494
        %v2496 = vshll.u32 2475754826, %v2490
        %v2497 = vshrl.u32 2131351028, %v2491
        %v2498 = vor.u32 %v2496, %v2497
        %v2499 = vshll.u32 2131351028, %v2490
        %v2500 = vshrl.u32 2102212464, %v2491
        %v2501 = vor.u32 %v2499, %v2500
        %v2502 = vshll.u32 2102212464, %v2490
        %v2503 = vshrl.u32 920167782, %v2491
        %v2504 = vor.u32 %v2502, %v2503
        %v2505 = vshll.u32 920167782, %v2490
        %v2506 = vshrl.u32 1326507024, %v2491
        %v2507 = vor.u32 %v2505, %v2506
        %vm2508 = vcmp.lt.s32.totalorder %v2489, 1
        %vm2509 = vcmp.lt.s32.totalorder %v2489, 2
        %vm2510 = vcmp.lt.s32.totalorder %v2489, 3
        %vm2511 = vcmp.lt.s32.totalorder %v2489, 4
        %v2512 = vsel %vm2508, %v2492, %v2495
        %v2513 = vsel %vm2511, %v2501, 2102212464
        %v2514 = vsel %vm2510, %v2498, %v2513
        %v2515 = vsel %vm2509, %v2512, %v2514
        %v2516 = vsel %vm2508, %v2495, %v2498
        %v2517 = vsel %vm2511, %v2504, 920167782
        %v2518 = vsel %vm2510, %v2501, %v2517
        %v2519 = vsel %vm2509, %v2516, %v2518
        %v2520 = vsel %vm2508, %v2498, %v2501
        %v2521 = vsel %vm2511, %v2507, 1326507024
        %v2522 = vsel %vm2510, %v2504, %v2521
        %v2523 = vsel %vm2509, %v2520, %v2522
        %v2524 = vshll.u32 %v2484, 8
        %v2525 = vmul.u32.u64.compose %v2524, %v2523
        %v2526 = vextract.low.u32 %v2525
        %v2527 = vextract.high.u32 %v2525
        %v2528 = vmul.u32.u64.compose %v2524, %v2519
        %v2529 = vextract.low.u32 %v2528
        %v2530 = vextract.high.u32 %v2528
        %v2531 = vmul.u32 %v2524, %v2515
        %v2532 = vadd.s32 %v2527, %v2529
        %vm2533 = vc.u32 %v2527, %v2529
        %v2534 = vadd.s32 %v2530, 1
        %v2535 = vsel %vm2533, %v2534, %v2530
        %v2536 = vadd.s32 %v2531, %v2535
        %v2537 = vadd.s32 %v2536, 536870912
        %v2538 = vshrl.u32 %v2537, 30
        %v2539 = vshll.u32 %v2538, 30
        %v2540 = vsub.s32 %v2536, %v2539
        %vm2541 = vcmp.lt.s32.totalorder %v2540, 0
        %v2542 = vsub.s32 0, %v2540
        %v2543 = vsel %vm2541, %v2542, %v2540
        %v2544 = vclz %v2543
        %v2545 = vsub.s32 %v2544, 2
        %vm2546 = vcmp.gt.s32.totalorder 0, %v2545
        %v2547 = vsel %vm2546, 0, %v2545
        %v2548 = vsub.s32 32, %v2547
        %v2549 = vshll.u32 %v2540, %v2547
        %v2550 = vshrl.u32 %v2532, %v2548
        %v2551 = vor.u32 %v2549, %v2550
        %v2552 = vsub.s32 4294967266, %v2547
        %v2553 = vadd.s32 %v2552, 127
        %v2554 = vshll.u32 %v2553, 23
        %v2555 = vor.u32 4788187, %v2554
        %v2556 = vand.u32 2147483647, %v2555
        %v2558 = vcvt.s32.f32 %v2551
        %v2559 = vmul.f32 %v2558, %v2556
        %v2560 = vxor.u32 %v2559, 2147483648
        %v2561 = vsel %vm2478, %v2560, %v2559
        %v2562 = vsub.s32 4, %v2538
        %v2563 = vsel %vm2478, %v2562, %v2538
        %v2564 = vsel %vm2477, %v2052, %v2561
        %v2565 = vsel %vm2477, 0, %v2563
        %v2566 = vcosq.f32.pop %v2564
        %v2567 = vsinq.f32.pop %v2564
        %vm2568 = vweird.f32 %v2052
        %v2569 = vand.u32 %v2565, 3
        %vm2570 = vcmp.lt.s32.totalorder %v2569, 2
        %vm2571 = vcmp.eq.s32.totalorder %v2569, 0
        %v2572 = vxor.u32 %v2567, 2147483648
        %v2573 = vsel %vm2571, %v2566, %v2572
        %vm2574 = vcmp.eq.s32.totalorder %v2569, 2
        %v2575 = vxor.u32 %v2566, 2147483648
        %v2576 = vsel %vm2574, %v2575, %v2567
        %v2577 = vsel %vm2570, %v2573, %v2576
        %v2578 = vsel %vm2568, nan, %v2577
        %v2579 = vand.u32 2147483647, %v2053
        %vm2580 = vcmp.le.f32.partialorder %v2579, 0.7853982
        %vm2581 = vcmp.lt.s32.totalorder %v2053, 0
        %v2582 = vand.u32 %v2053, 2139095040
        %v2583 = vshrl.u32 %v2582, 23
        %v2584 = vsub.s32 %v2583, 127
        %v2585 = vand.u32 2147483647, %v2053
        %v2586 = vand.u32 %v2585, 8388607
        %v2587 = vor.u32 %v2586, 8388608
        %v2588 = vsub.s32 0, %v2587
        %v2589 = vadd.s32 %v2584, 1
        %vm2590 = vcmp.gt.s32.totalorder %v2589, 0
        %v2591 = vsel %vm2590, %v2589, 0
        %v2592 = vshrl.u32 %v2591, 5
        %v2593 = vand.u32 %v2591, 31
        %v2594 = vsub.s32 32, %v2593
        %v2595 = vshrl.u32 683565275, %v2594
        %v2596 = vshll.u32 683565275, %v2593
        %v2597 = vshrl.u32 2475754826, %v2594
        %v2598 = vor.u32 %v2596, %v2597
        %v2599 = vshll.u32 2475754826, %v2593
        %v2600 = vshrl.u32 2131351028, %v2594
        %v2601 = vor.u32 %v2599, %v2600
        %v2602 = vshll.u32 2131351028, %v2593
        %v2603 = vshrl.u32 2102212464, %v2594
        %v2604 = vor.u32 %v2602, %v2603
        %v2605 = vshll.u32 2102212464, %v2593
        %v2606 = vshrl.u32 920167782, %v2594
        %v2607 = vor.u32 %v2605, %v2606
        %v2608 = vshll.u32 920167782, %v2593
        %v2609 = vshrl.u32 1326507024, %v2594
        %v2610 = vor.u32 %v2608, %v2609
        %vm2611 = vcmp.lt.s32.totalorder %v2592, 1
        %vm2612 = vcmp.lt.s32.totalorder %v2592, 2
        %vm2613 = vcmp.lt.s32.totalorder %v2592, 3
        %vm2614 = vcmp.lt.s32.totalorder %v2592, 4
        %v2615 = vsel %vm2611, %v2595, %v2598
        %v2616 = vsel %vm2614, %v2604, 2102212464
        %v2617 = vsel %vm2613, %v2601, %v2616
        %v2618 = vsel %vm2612, %v2615, %v2617
        %v2619 = vsel %vm2611, %v2598, %v2601
        %v2620 = vsel %vm2614, %v2607, 920167782
        %v2621 = vsel %vm2613, %v2604, %v2620
        %v2622 = vsel %vm2612, %v2619, %v2621
        %v2623 = vsel %vm2611, %v2601, %v2604
        %v2624 = vsel %vm2614, %v2610, 1326507024
        %v2625 = vsel %vm2613, %v2607, %v2624
        %v2626 = vsel %vm2612, %v2623, %v2625
        %v2627 = vshll.u32 %v2587, 8
        %v2628 = vmul.u32.u64.compose %v2627, %v2626
        %v2629 = vextract.low.u32 %v2628
        %v2630 = vextract.high.u32 %v2628
        %v2631 = vmul.u32.u64.compose %v2627, %v2622
        %v2632 = vextract.low.u32 %v2631
        %v2633 = vextract.high.u32 %v2631
        %v2634 = vmul.u32 %v2627, %v2618
        %v2635 = vadd.s32 %v2630, %v2632
        %vm2636 = vc.u32 %v2630, %v2632
        %v2637 = vadd.s32 %v2633, 1
        %v2638 = vsel %vm2636, %v2637, %v2633
        %v2639 = vadd.s32 %v2634, %v2638
        %v2640 = vadd.s32 %v2639, 536870912
        %v2641 = vshrl.u32 %v2640, 30
        %v2642 = vshll.u32 %v2641, 30
        %v2643 = vsub.s32 %v2639, %v2642
        %vm2644 = vcmp.lt.s32.totalorder %v2643, 0
        %v2645 = vsub.s32 0, %v2643
        %v2646 = vsel %vm2644, %v2645, %v2643
        %v2647 = vclz %v2646
        %v2648 = vsub.s32 %v2647, 2
        %vm2649 = vcmp.gt.s32.totalorder 0, %v2648
        %v2650 = vsel %vm2649, 0, %v2648
        %v2651 = vsub.s32 32, %v2650
        %v2652 = vshll.u32 %v2643, %v2650
        %v2653 = vshrl.u32 %v2635, %v2651
        %v2654 = vor.u32 %v2652, %v2653
        %v2655 = vsub.s32 4294967266, %v2650
        %v2656 = vadd.s32 %v2655, 127
        %v2657 = vshll.u32 %v2656, 23
        %v2658 = vor.u32 4788187, %v2657
        %v2659 = vand.u32 2147483647, %v2658
        %v2661 = vcvt.s32.f32 %v2654
        %v2662 = vmul.f32 %v2661, %v2659
        %v2663 = vxor.u32 %v2662, 2147483648
        %v2664 = vsel %vm2581, %v2663, %v2662
        %v2665 = vsub.s32 4, %v2641
        %v2666 = vsel %vm2581, %v2665, %v2641
        %v2667 = vsel %vm2580, %v2053, %v2664
        %v2668 = vsel %vm2580, 0, %v2666
        %v2669 = vcosq.f32.pop %v2667
        %v2670 = vsinq.f32.pop %v2667
        %vm2671 = vweird.f32 %v2053
        %v2672 = vand.u32 %v2668, 3
        %vm2673 = vcmp.lt.s32.totalorder %v2672, 2
        %vm2674 = vcmp.eq.s32.totalorder %v2672, 0
        %v2675 = vxor.u32 %v2670, 2147483648
        %v2676 = vsel %vm2674, %v2669, %v2675
        %vm2677 = vcmp.eq.s32.totalorder %v2672, 2
        %v2678 = vxor.u32 %v2669, 2147483648
        %v2679 = vsel %vm2677, %v2678, %v2670
        %v2680 = vsel %vm2673, %v2676, %v2679
        %v2681 = vsel %vm2671, nan, %v2680
        %v2682 = vand.u32 2147483647, %v2054
        %vm2683 = vcmp.le.f32.partialorder %v2682, 0.7853982
        %vm2684 = vcmp.lt.s32.totalorder %v2054, 0
        %v2685 = vand.u32 %v2054, 2139095040
        %v2686 = vshrl.u32 %v2685, 23
        %v2687 = vsub.s32 %v2686, 127
        %v2688 = vand.u32 2147483647, %v2054
        %v2689 = vand.u32 %v2688, 8388607
        %v2690 = vor.u32 %v2689, 8388608
        %v2691 = vsub.s32 0, %v2690
        %v2692 = vadd.s32 %v2687, 1
        %vm2693 = vcmp.gt.s32.totalorder %v2692, 0
        %v2694 = vsel %vm2693, %v2692, 0
        %v2695 = vshrl.u32 %v2694, 5
        %v2696 = vand.u32 %v2694, 31
        %v2697 = vsub.s32 32, %v2696
        %v2698 = vshrl.u32 683565275, %v2697
        %v2699 = vshll.u32 683565275, %v2696
        %v2700 = vshrl.u32 2475754826, %v2697
        %v2701 = vor.u32 %v2699, %v2700
        %v2702 = vshll.u32 2475754826, %v2696
        %v2703 = vshrl.u32 2131351028, %v2697
        %v2704 = vor.u32 %v2702, %v2703
        %v2705 = vshll.u32 2131351028, %v2696
        %v2706 = vshrl.u32 2102212464, %v2697
        %v2707 = vor.u32 %v2705, %v2706
        %v2708 = vshll.u32 2102212464, %v2696
        %v2709 = vshrl.u32 920167782, %v2697
        %v2710 = vor.u32 %v2708, %v2709
        %v2711 = vshll.u32 920167782, %v2696
        %v2712 = vshrl.u32 1326507024, %v2697
        %v2713 = vor.u32 %v2711, %v2712
        %vm2714 = vcmp.lt.s32.totalorder %v2695, 1
        %vm2715 = vcmp.lt.s32.totalorder %v2695, 2
        %vm2716 = vcmp.lt.s32.totalorder %v2695, 3
        %vm2717 = vcmp.lt.s32.totalorder %v2695, 4
        %v2718 = vsel %vm2714, %v2698, %v2701
        %v2719 = vsel %vm2717, %v2707, 2102212464
        %v2720 = vsel %vm2716, %v2704, %v2719
        %v2721 = vsel %vm2715, %v2718, %v2720
        %v2722 = vsel %vm2714, %v2701, %v2704
        %v2723 = vsel %vm2717, %v2710, 920167782
        %v2724 = vsel %vm2716, %v2707, %v2723
        %v2725 = vsel %vm2715, %v2722, %v2724
        %v2726 = vsel %vm2714, %v2704, %v2707
        %v2727 = vsel %vm2717, %v2713, 1326507024
        %v2728 = vsel %vm2716, %v2710, %v2727
        %v2729 = vsel %vm2715, %v2726, %v2728
        %v2730 = vshll.u32 %v2690, 8
        %v2731 = vmul.u32.u64.compose %v2730, %v2729
        %v2732 = vextract.low.u32 %v2731
        %v2733 = vextract.high.u32 %v2731
        %v2734 = vmul.u32.u64.compose %v2730, %v2725
        %v2735 = vextract.low.u32 %v2734
        %v2736 = vextract.high.u32 %v2734
        %v2737 = vmul.u32 %v2730, %v2721
        %v2738 = vadd.s32 %v2733, %v2735
        %vm2739 = vc.u32 %v2733, %v2735
        %v2740 = vadd.s32 %v2736, 1
        %v2741 = vsel %vm2739, %v2740, %v2736
        %v2742 = vadd.s32 %v2737, %v2741
        %v2743 = vadd.s32 %v2742, 536870912
        %v2744 = vshrl.u32 %v2743, 30
        %v2745 = vshll.u32 %v2744, 30
        %v2746 = vsub.s32 %v2742, %v2745
        %vm2747 = vcmp.lt.s32.totalorder %v2746, 0
        %v2748 = vsub.s32 0, %v2746
        %v2749 = vsel %vm2747, %v2748, %v2746
        %v2750 = vclz %v2749
        %v2751 = vsub.s32 %v2750, 2
        %vm2752 = vcmp.gt.s32.totalorder 0, %v2751
        %v2753 = vsel %vm2752, 0, %v2751
        %v2754 = vsub.s32 32, %v2753
        %v2755 = vshll.u32 %v2746, %v2753
        %v2756 = vshrl.u32 %v2738, %v2754
        %v2757 = vor.u32 %v2755, %v2756
        %v2758 = vsub.s32 4294967266, %v2753
        %v2759 = vadd.s32 %v2758, 127
        %v2760 = vshll.u32 %v2759, 23
        %v2761 = vor.u32 4788187, %v2760
        %v2762 = vand.u32 2147483647, %v2761
        %v2764 = vcvt.s32.f32 %v2757
        %v2765 = vmul.f32 %v2764, %v2762
        %v2766 = vxor.u32 %v2765, 2147483648
        %v2767 = vsel %vm2684, %v2766, %v2765
        %v2768 = vsub.s32 4, %v2744
        %v2769 = vsel %vm2684, %v2768, %v2744
        %v2770 = vsel %vm2683, %v2054, %v2767
        %v2771 = vsel %vm2683, 0, %v2769
        %v2772 = vcosq.f32.pop %v2770
        %v2773 = vsinq.f32.pop %v2770
        %vm2774 = vweird.f32 %v2054
        %v2775 = vand.u32 %v2771, 3
        %vm2776 = vcmp.lt.s32.totalorder %v2775, 2
        %vm2777 = vcmp.eq.s32.totalorder %v2775, 0
        %v2778 = vxor.u32 %v2773, 2147483648
        %v2779 = vsel %vm2777, %v2772, %v2778
        %vm2780 = vcmp.eq.s32.totalorder %v2775, 2
        %v2781 = vxor.u32 %v2772, 2147483648
        %v2782 = vsel %vm2780, %v2781, %v2773
        %v2783 = vsel %vm2776, %v2779, %v2782
        %v2784 = vsel %vm2774, nan, %v2783
        %v2785 = vand.u32 2147483647, %v2055
        %vm2786 = vcmp.le.f32.partialorder %v2785, 0.7853982
        %vm2787 = vcmp.lt.s32.totalorder %v2055, 0
        %v2788 = vand.u32 %v2055, 2139095040
        %v2789 = vshrl.u32 %v2788, 23
        %v2790 = vsub.s32 %v2789, 127
        %v2791 = vand.u32 2147483647, %v2055
        %v2792 = vand.u32 %v2791, 8388607
        %v2793 = vor.u32 %v2792, 8388608
        %v2794 = vsub.s32 0, %v2793
        %v2795 = vadd.s32 %v2790, 1
        %vm2796 = vcmp.gt.s32.totalorder %v2795, 0
        %v2797 = vsel %vm2796, %v2795, 0
        %v2798 = vshrl.u32 %v2797, 5
        %v2799 = vand.u32 %v2797, 31
        %v2800 = vsub.s32 32, %v2799
        %v2801 = vshrl.u32 683565275, %v2800
        %v2802 = vshll.u32 683565275, %v2799
        %v2803 = vshrl.u32 2475754826, %v2800
        %v2804 = vor.u32 %v2802, %v2803
        %v2805 = vshll.u32 2475754826, %v2799
        %v2806 = vshrl.u32 2131351028, %v2800
        %v2807 = vor.u32 %v2805, %v2806
        %v2808 = vshll.u32 2131351028, %v2799
        %v2809 = vshrl.u32 2102212464, %v2800
        %v2810 = vor.u32 %v2808, %v2809
        %v2811 = vshll.u32 2102212464, %v2799
        %v2812 = vshrl.u32 920167782, %v2800
        %v2813 = vor.u32 %v2811, %v2812
        %v2814 = vshll.u32 920167782, %v2799
        %v2815 = vshrl.u32 1326507024, %v2800
        %v2816 = vor.u32 %v2814, %v2815
        %vm2817 = vcmp.lt.s32.totalorder %v2798, 1
        %vm2818 = vcmp.lt.s32.totalorder %v2798, 2
        %vm2819 = vcmp.lt.s32.totalorder %v2798, 3
        %vm2820 = vcmp.lt.s32.totalorder %v2798, 4
        %v2821 = vsel %vm2817, %v2801, %v2804
        %v2822 = vsel %vm2820, %v2810, 2102212464
        %v2823 = vsel %vm2819, %v2807, %v2822
        %v2824 = vsel %vm2818, %v2821, %v2823
        %v2825 = vsel %vm2817, %v2804, %v2807
        %v2826 = vsel %vm2820, %v2813, 920167782
        %v2827 = vsel %vm2819, %v2810, %v2826
        %v2828 = vsel %vm2818, %v2825, %v2827
        %v2829 = vsel %vm2817, %v2807, %v2810
        %v2830 = vsel %vm2820, %v2816, 1326507024
        %v2831 = vsel %vm2819, %v2813, %v2830
        %v2832 = vsel %vm2818, %v2829, %v2831
        %v2833 = vshll.u32 %v2793, 8
        %v2834 = vmul.u32.u64.compose %v2833, %v2832
        %v2835 = vextract.low.u32 %v2834
        %v2836 = vextract.high.u32 %v2834
        %v2837 = vmul.u32.u64.compose %v2833, %v2828
        %v2838 = vextract.low.u32 %v2837
        %v2839 = vextract.high.u32 %v2837
        %v2840 = vmul.u32 %v2833, %v2824
        %v2841 = vadd.s32 %v2836, %v2838
        %vm2842 = vc.u32 %v2836, %v2838
        %v2843 = vadd.s32 %v2839, 1
        %v2844 = vsel %vm2842, %v2843, %v2839
        %v2845 = vadd.s32 %v2840, %v2844
        %v2846 = vadd.s32 %v2845, 536870912
        %v2847 = vshrl.u32 %v2846, 30
        %v2848 = vshll.u32 %v2847, 30
        %v2849 = vsub.s32 %v2845, %v2848
        %vm2850 = vcmp.lt.s32.totalorder %v2849, 0
        %v2851 = vsub.s32 0, %v2849
        %v2852 = vsel %vm2850, %v2851, %v2849
        %v2853 = vclz %v2852
        %v2854 = vsub.s32 %v2853, 2
        %vm2855 = vcmp.gt.s32.totalorder 0, %v2854
        %v2856 = vsel %vm2855, 0, %v2854
        %v2857 = vsub.s32 32, %v2856
        %v2858 = vshll.u32 %v2849, %v2856
        %v2859 = vshrl.u32 %v2841, %v2857
        %v2860 = vor.u32 %v2858, %v2859
        %v2861 = vsub.s32 4294967266, %v2856
        %v2862 = vadd.s32 %v2861, 127
        %v2863 = vshll.u32 %v2862, 23
        %v2864 = vor.u32 4788187, %v2863
        %v2865 = vand.u32 2147483647, %v2864
        %v2867 = vcvt.s32.f32 %v2860
        %v2868 = vmul.f32 %v2867, %v2865
        %v2869 = vxor.u32 %v2868, 2147483648
        %v2870 = vsel %vm2787, %v2869, %v2868
        %v2871 = vsub.s32 4, %v2847
        %v2872 = vsel %vm2787, %v2871, %v2847
        %v2873 = vsel %vm2786, %v2055, %v2870
        %v2874 = vsel %vm2786, 0, %v2872
        %v2875 = vcosq.f32.pop %v2873
        %v2876 = vsinq.f32.pop %v2873
        %vm2877 = vweird.f32 %v2055
        %v2878 = vand.u32 %v2874, 3
        %vm2879 = vcmp.lt.s32.totalorder %v2878, 2
        %vm2880 = vcmp.eq.s32.totalorder %v2878, 0
        %v2881 = vxor.u32 %v2876, 2147483648
        %v2882 = vsel %vm2880, %v2875, %v2881
        %vm2883 = vcmp.eq.s32.totalorder %v2878, 2
        %v2884 = vxor.u32 %v2875, 2147483648
        %v2885 = vsel %vm2883, %v2884, %v2876
        %v2886 = vsel %vm2879, %v2882, %v2885
        %v2887 = vsel %vm2877, nan, %v2886
        %v2888 = vand.u32 2147483647, %v2056
        %vm2889 = vcmp.le.f32.partialorder %v2888, 0.7853982
        %vm2890 = vcmp.lt.s32.totalorder %v2056, 0
        %v2891 = vand.u32 %v2056, 2139095040
        %v2892 = vshrl.u32 %v2891, 23
        %v2893 = vsub.s32 %v2892, 127
        %v2894 = vand.u32 2147483647, %v2056
        %v2895 = vand.u32 %v2894, 8388607
        %v2896 = vor.u32 %v2895, 8388608
        %v2897 = vsub.s32 0, %v2896
        %v2898 = vadd.s32 %v2893, 1
        %vm2899 = vcmp.gt.s32.totalorder %v2898, 0
        %v2900 = vsel %vm2899, %v2898, 0
        %v2901 = vshrl.u32 %v2900, 5
        %v2902 = vand.u32 %v2900, 31
        %v2903 = vsub.s32 32, %v2902
        %v2904 = vshrl.u32 683565275, %v2903
        %v2905 = vshll.u32 683565275, %v2902
        %v2906 = vshrl.u32 2475754826, %v2903
        %v2907 = vor.u32 %v2905, %v2906
        %v2908 = vshll.u32 2475754826, %v2902
        %v2909 = vshrl.u32 2131351028, %v2903
        %v2910 = vor.u32 %v2908, %v2909
        %v2911 = vshll.u32 2131351028, %v2902
        %v2912 = vshrl.u32 2102212464, %v2903
        %v2913 = vor.u32 %v2911, %v2912
        %v2914 = vshll.u32 2102212464, %v2902
        %v2915 = vshrl.u32 920167782, %v2903
        %v2916 = vor.u32 %v2914, %v2915
        %v2917 = vshll.u32 920167782, %v2902
        %v2918 = vshrl.u32 1326507024, %v2903
        %v2919 = vor.u32 %v2917, %v2918
        %vm2920 = vcmp.lt.s32.totalorder %v2901, 1
        %vm2921 = vcmp.lt.s32.totalorder %v2901, 2
        %vm2922 = vcmp.lt.s32.totalorder %v2901, 3
        %vm2923 = vcmp.lt.s32.totalorder %v2901, 4
        %v2924 = vsel %vm2920, %v2904, %v2907
        %v2925 = vsel %vm2923, %v2913, 2102212464
        %v2926 = vsel %vm2922, %v2910, %v2925
        %v2927 = vsel %vm2921, %v2924, %v2926
        %v2928 = vsel %vm2920, %v2907, %v2910
        %v2929 = vsel %vm2923, %v2916, 920167782
        %v2930 = vsel %vm2922, %v2913, %v2929
        %v2931 = vsel %vm2921, %v2928, %v2930
        %v2932 = vsel %vm2920, %v2910, %v2913
        %v2933 = vsel %vm2923, %v2919, 1326507024
        %v2934 = vsel %vm2922, %v2916, %v2933
        %v2935 = vsel %vm2921, %v2932, %v2934
        %v2936 = vshll.u32 %v2896, 8
        %v2937 = vmul.u32.u64.compose %v2936, %v2935
        %v2938 = vextract.low.u32 %v2937
        %v2939 = vextract.high.u32 %v2937
        %v2940 = vmul.u32.u64.compose %v2936, %v2931
        %v2941 = vextract.low.u32 %v2940
        %v2942 = vextract.high.u32 %v2940
        %v2943 = vmul.u32 %v2936, %v2927
        %v2944 = vadd.s32 %v2939, %v2941
        %vm2945 = vc.u32 %v2939, %v2941
        %v2946 = vadd.s32 %v2942, 1
        %v2947 = vsel %vm2945, %v2946, %v2942
        %v2948 = vadd.s32 %v2943, %v2947
        %v2949 = vadd.s32 %v2948, 536870912
        %v2950 = vshrl.u32 %v2949, 30
        %v2951 = vshll.u32 %v2950, 30
        %v2952 = vsub.s32 %v2948, %v2951
        %vm2953 = vcmp.lt.s32.totalorder %v2952, 0
        %v2954 = vsub.s32 0, %v2952
        %v2955 = vsel %vm2953, %v2954, %v2952
        %v2956 = vclz %v2955
        %v2957 = vsub.s32 %v2956, 2
        %vm2958 = vcmp.gt.s32.totalorder 0, %v2957
        %v2959 = vsel %vm2958, 0, %v2957
        %v2960 = vsub.s32 32, %v2959
        %v2961 = vshll.u32 %v2952, %v2959
        %v2962 = vshrl.u32 %v2944, %v2960
        %v2963 = vor.u32 %v2961, %v2962
        %v2964 = vsub.s32 4294967266, %v2959
        %v2965 = vadd.s32 %v2964, 127
        %v2966 = vshll.u32 %v2965, 23
        %v2967 = vor.u32 4788187, %v2966
        %v2968 = vand.u32 2147483647, %v2967
        %v2970 = vcvt.s32.f32 %v2963
        %v2971 = vmul.f32 %v2970, %v2968
        %v2972 = vxor.u32 %v2971, 2147483648
        %v2973 = vsel %vm2890, %v2972, %v2971
        %v2974 = vsub.s32 4, %v2950
        %v2975 = vsel %vm2890, %v2974, %v2950
        %v2976 = vsel %vm2889, %v2056, %v2973
        %v2977 = vsel %vm2889, 0, %v2975
        %v2978 = vcosq.f32.pop %v2976
        %v2979 = vsinq.f32.pop %v2976
        %vm2980 = vweird.f32 %v2056
        %v2981 = vand.u32 %v2977, 3
        %vm2982 = vcmp.lt.s32.totalorder %v2981, 2
        %vm2983 = vcmp.eq.s32.totalorder %v2981, 0
        %v2984 = vxor.u32 %v2979, 2147483648
        %v2985 = vsel %vm2983, %v2978, %v2984
        %vm2986 = vcmp.eq.s32.totalorder %v2981, 2
        %v2987 = vxor.u32 %v2978, 2147483648
        %v2988 = vsel %vm2986, %v2987, %v2979
        %v2989 = vsel %vm2982, %v2985, %v2988
        %v2990 = vsel %vm2980, nan, %v2989
        %v2991 = vand.u32 2147483647, %v2057
        %vm2992 = vcmp.le.f32.partialorder %v2991, 0.7853982
        %vm2993 = vcmp.lt.s32.totalorder %v2057, 0
        %v2994 = vand.u32 %v2057, 2139095040
        %v2995 = vshrl.u32 %v2994, 23
        %v2996 = vsub.s32 %v2995, 127
        %v2997 = vand.u32 2147483647, %v2057
        %v2998 = vand.u32 %v2997, 8388607
        %v2999 = vor.u32 %v2998, 8388608
        %v3000 = vsub.s32 0, %v2999
        %v3001 = vadd.s32 %v2996, 1
        %vm3002 = vcmp.gt.s32.totalorder %v3001, 0
        %v3003 = vsel %vm3002, %v3001, 0
        %v3004 = vshrl.u32 %v3003, 5
        %v3005 = vand.u32 %v3003, 31
        %v3006 = vsub.s32 32, %v3005
        %v3007 = vshrl.u32 683565275, %v3006
        %v3008 = vshll.u32 683565275, %v3005
        %v3009 = vshrl.u32 2475754826, %v3006
        %v3010 = vor.u32 %v3008, %v3009
        %v3011 = vshll.u32 2475754826, %v3005
        %v3012 = vshrl.u32 2131351028, %v3006
        %v3013 = vor.u32 %v3011, %v3012
        %v3014 = vshll.u32 2131351028, %v3005
        %v3015 = vshrl.u32 2102212464, %v3006
        %v3016 = vor.u32 %v3014, %v3015
        %v3017 = vshll.u32 2102212464, %v3005
        %v3018 = vshrl.u32 920167782, %v3006
        %v3019 = vor.u32 %v3017, %v3018
        %v3020 = vshll.u32 920167782, %v3005
        %v3021 = vshrl.u32 1326507024, %v3006
        %v3022 = vor.u32 %v3020, %v3021
        %vm3023 = vcmp.lt.s32.totalorder %v3004, 1
        %vm3024 = vcmp.lt.s32.totalorder %v3004, 2
        %vm3025 = vcmp.lt.s32.totalorder %v3004, 3
        %vm3026 = vcmp.lt.s32.totalorder %v3004, 4
        %v3027 = vsel %vm3023, %v3007, %v3010
        %v3028 = vsel %vm3026, %v3016, 2102212464
        %v3029 = vsel %vm3025, %v3013, %v3028
        %v3030 = vsel %vm3024, %v3027, %v3029
        %v3031 = vsel %vm3023, %v3010, %v3013
        %v3032 = vsel %vm3026, %v3019, 920167782
        %v3033 = vsel %vm3025, %v3016, %v3032
        %v3034 = vsel %vm3024, %v3031, %v3033
        %v3035 = vsel %vm3023, %v3013, %v3016
        %v3036 = vsel %vm3026, %v3022, 1326507024
        %v3037 = vsel %vm3025, %v3019, %v3036
        %v3038 = vsel %vm3024, %v3035, %v3037
        %v3039 = vshll.u32 %v2999, 8
        %v3040 = vmul.u32.u64.compose %v3039, %v3038
        %v3041 = vextract.low.u32 %v3040
        %v3042 = vextract.high.u32 %v3040
        %v3043 = vmul.u32.u64.compose %v3039, %v3034
        %v3044 = vextract.low.u32 %v3043
        %v3045 = vextract.high.u32 %v3043
        %v3046 = vmul.u32 %v3039, %v3030
        %v3047 = vadd.s32 %v3042, %v3044
        %vm3048 = vc.u32 %v3042, %v3044
        %v3049 = vadd.s32 %v3045, 1
        %v3050 = vsel %vm3048, %v3049, %v3045
        %v3051 = vadd.s32 %v3046, %v3050
        %v3052 = vadd.s32 %v3051, 536870912
        %v3053 = vshrl.u32 %v3052, 30
        %v3054 = vshll.u32 %v3053, 30
        %v3055 = vsub.s32 %v3051, %v3054
        %vm3056 = vcmp.lt.s32.totalorder %v3055, 0
        %v3057 = vsub.s32 0, %v3055
        %v3058 = vsel %vm3056, %v3057, %v3055
        %v3059 = vclz %v3058
        %v3060 = vsub.s32 %v3059, 2
        %vm3061 = vcmp.gt.s32.totalorder 0, %v3060
        %v3062 = vsel %vm3061, 0, %v3060
        %v3063 = vsub.s32 32, %v3062
        %v3064 = vshll.u32 %v3055, %v3062
        %v3065 = vshrl.u32 %v3047, %v3063
        %v3066 = vor.u32 %v3064, %v3065
        %v3067 = vsub.s32 4294967266, %v3062
        %v3068 = vadd.s32 %v3067, 127
        %v3069 = vshll.u32 %v3068, 23
        %v3070 = vor.u32 4788187, %v3069
        %v3071 = vand.u32 2147483647, %v3070
        %v3073 = vcvt.s32.f32 %v3066
        %v3074 = vmul.f32 %v3073, %v3071
        %v3075 = vxor.u32 %v3074, 2147483648
        %v3076 = vsel %vm2993, %v3075, %v3074
        %v3077 = vsub.s32 4, %v3053
        %v3078 = vsel %vm2993, %v3077, %v3053
        %v3079 = vsel %vm2992, %v2057, %v3076
        %v3080 = vsel %vm2992, 0, %v3078
        %v3081 = vcosq.f32.pop %v3079
        %v3082 = vsinq.f32.pop %v3079
        %vm3083 = vweird.f32 %v2057
        %v3084 = vand.u32 %v3080, 3
        %vm3085 = vcmp.lt.s32.totalorder %v3084, 2
        %vm3086 = vcmp.eq.s32.totalorder %v3084, 0
        %v3087 = vxor.u32 %v3082, 2147483648
        %v3088 = vsel %vm3086, %v3081, %v3087
        %vm3089 = vcmp.eq.s32.totalorder %v3084, 2
        %v3090 = vxor.u32 %v3081, 2147483648
        %v3091 = vsel %vm3089, %v3090, %v3082
        %v3092 = vsel %vm3085, %v3088, %v3091
        %v3093 = vsel %vm3083, nan, %v3092
        %v3094 = vand.u32 2147483647, %v2058
        %vm3095 = vcmp.le.f32.partialorder %v3094, 0.7853982
        %vm3096 = vcmp.lt.s32.totalorder %v2058, 0
        %v3097 = vand.u32 %v2058, 2139095040
        %v3098 = vshrl.u32 %v3097, 23
        %v3099 = vsub.s32 %v3098, 127
        %v3100 = vand.u32 2147483647, %v2058
        %v3101 = vand.u32 %v3100, 8388607
        %v3102 = vor.u32 %v3101, 8388608
        %v3103 = vsub.s32 0, %v3102
        %v3104 = vadd.s32 %v3099, 1
        %vm3105 = vcmp.gt.s32.totalorder %v3104, 0
        %v3106 = vsel %vm3105, %v3104, 0
        %v3107 = vshrl.u32 %v3106, 5
        %v3108 = vand.u32 %v3106, 31
        %v3109 = vsub.s32 32, %v3108
        %v3110 = vshrl.u32 683565275, %v3109
        %v3111 = vshll.u32 683565275, %v3108
        %v3112 = vshrl.u32 2475754826, %v3109
        %v3113 = vor.u32 %v3111, %v3112
        %v3114 = vshll.u32 2475754826, %v3108
        %v3115 = vshrl.u32 2131351028, %v3109
        %v3116 = vor.u32 %v3114, %v3115
        %v3117 = vshll.u32 2131351028, %v3108
        %v3118 = vshrl.u32 2102212464, %v3109
        %v3119 = vor.u32 %v3117, %v3118
        %v3120 = vshll.u32 2102212464, %v3108
        %v3121 = vshrl.u32 920167782, %v3109
        %v3122 = vor.u32 %v3120, %v3121
        %v3123 = vshll.u32 920167782, %v3108
        %v3124 = vshrl.u32 1326507024, %v3109
        %v3125 = vor.u32 %v3123, %v3124
        %vm3126 = vcmp.lt.s32.totalorder %v3107, 1
        %vm3127 = vcmp.lt.s32.totalorder %v3107, 2
        %vm3128 = vcmp.lt.s32.totalorder %v3107, 3
        %vm3129 = vcmp.lt.s32.totalorder %v3107, 4
        %v3130 = vsel %vm3126, %v3110, %v3113
        %v3131 = vsel %vm3129, %v3119, 2102212464
        %v3132 = vsel %vm3128, %v3116, %v3131
        %v3133 = vsel %vm3127, %v3130, %v3132
        %v3134 = vsel %vm3126, %v3113, %v3116
        %v3135 = vsel %vm3129, %v3122, 920167782
        %v3136 = vsel %vm3128, %v3119, %v3135
        %v3137 = vsel %vm3127, %v3134, %v3136
        %v3138 = vsel %vm3126, %v3116, %v3119
        %v3139 = vsel %vm3129, %v3125, 1326507024
        %v3140 = vsel %vm3128, %v3122, %v3139
        %v3141 = vsel %vm3127, %v3138, %v3140
        %v3142 = vshll.u32 %v3102, 8
        %v3143 = vmul.u32.u64.compose %v3142, %v3141
        %v3144 = vextract.low.u32 %v3143
        %v3145 = vextract.high.u32 %v3143
        %v3146 = vmul.u32.u64.compose %v3142, %v3137
        %v3147 = vextract.low.u32 %v3146
        %v3148 = vextract.high.u32 %v3146
        %v3149 = vmul.u32 %v3142, %v3133
        %v3150 = vadd.s32 %v3145, %v3147
        %vm3151 = vc.u32 %v3145, %v3147
        %v3152 = vadd.s32 %v3148, 1
        %v3153 = vsel %vm3151, %v3152, %v3148
        %v3154 = vadd.s32 %v3149, %v3153
        %v3155 = vadd.s32 %v3154, 536870912
        %v3156 = vshrl.u32 %v3155, 30
        %v3157 = vshll.u32 %v3156, 30
        %v3158 = vsub.s32 %v3154, %v3157
        %vm3159 = vcmp.lt.s32.totalorder %v3158, 0
        %v3160 = vsub.s32 0, %v3158
        %v3161 = vsel %vm3159, %v3160, %v3158
        %v3162 = vclz %v3161
        %v3163 = vsub.s32 %v3162, 2
        %vm3164 = vcmp.gt.s32.totalorder 0, %v3163
        %v3165 = vsel %vm3164, 0, %v3163
        %v3166 = vsub.s32 32, %v3165
        %v3167 = vshll.u32 %v3158, %v3165
        %v3168 = vshrl.u32 %v3150, %v3166
        %v3169 = vor.u32 %v3167, %v3168
        %v3170 = vsub.s32 4294967266, %v3165
        %v3171 = vadd.s32 %v3170, 127
        %v3172 = vshll.u32 %v3171, 23
        %v3173 = vor.u32 4788187, %v3172
        %v3174 = vand.u32 2147483647, %v3173
        %v3176 = vcvt.s32.f32 %v3169
        %v3177 = vmul.f32 %v3176, %v3174
        %v3178 = vxor.u32 %v3177, 2147483648
        %v3179 = vsel %vm3096, %v3178, %v3177
        %v3180 = vsub.s32 4, %v3156
        %v3181 = vsel %vm3096, %v3180, %v3156
        %v3182 = vsel %vm3095, %v2058, %v3179
        %v3183 = vsel %vm3095, 0, %v3181
        %v3184 = vcosq.f32.pop %v3182
        %v3185 = vsinq.f32.pop %v3182
        %vm3186 = vweird.f32 %v2058
        %v3187 = vand.u32 %v3183, 3
        %vm3188 = vcmp.lt.s32.totalorder %v3187, 2
        %vm3189 = vcmp.eq.s32.totalorder %v3187, 0
        %v3190 = vxor.u32 %v3185, 2147483648
        %v3191 = vsel %vm3189, %v3184, %v3190
        %vm3192 = vcmp.eq.s32.totalorder %v3187, 2
        %v3193 = vxor.u32 %v3184, 2147483648
        %v3194 = vsel %vm3192, %v3193, %v3185
        %v3195 = vsel %vm3188, %v3191, %v3194
        %v3196 = vsel %vm3186, nan, %v3195
        %v3197 = vand.u32 2147483647, %v2059
        %vm3198 = vcmp.le.f32.partialorder %v3197, 0.7853982
        %vm3199 = vcmp.lt.s32.totalorder %v2059, 0
        %v3200 = vand.u32 %v2059, 2139095040
        %v3201 = vshrl.u32 %v3200, 23
        %v3202 = vsub.s32 %v3201, 127
        %v3203 = vand.u32 2147483647, %v2059
        %v3204 = vand.u32 %v3203, 8388607
        %v3205 = vor.u32 %v3204, 8388608
        %v3206 = vsub.s32 0, %v3205
        %v3207 = vadd.s32 %v3202, 1
        %vm3208 = vcmp.gt.s32.totalorder %v3207, 0
        %v3209 = vsel %vm3208, %v3207, 0
        %v3210 = vshrl.u32 %v3209, 5
        %v3211 = vand.u32 %v3209, 31
        %v3212 = vsub.s32 32, %v3211
        %v3213 = vshrl.u32 683565275, %v3212
        %v3214 = vshll.u32 683565275, %v3211
        %v3215 = vshrl.u32 2475754826, %v3212
        %v3216 = vor.u32 %v3214, %v3215
        %v3217 = vshll.u32 2475754826, %v3211
        %v3218 = vshrl.u32 2131351028, %v3212
        %v3219 = vor.u32 %v3217, %v3218
        %v3220 = vshll.u32 2131351028, %v3211
        %v3221 = vshrl.u32 2102212464, %v3212
        %v3222 = vor.u32 %v3220, %v3221
        %v3223 = vshll.u32 2102212464, %v3211
        %v3224 = vshrl.u32 920167782, %v3212
        %v3225 = vor.u32 %v3223, %v3224
        %v3226 = vshll.u32 920167782, %v3211
        %v3227 = vshrl.u32 1326507024, %v3212
        %v3228 = vor.u32 %v3226, %v3227
        %vm3229 = vcmp.lt.s32.totalorder %v3210, 1
        %vm3230 = vcmp.lt.s32.totalorder %v3210, 2
        %vm3231 = vcmp.lt.s32.totalorder %v3210, 3
        %vm3232 = vcmp.lt.s32.totalorder %v3210, 4
        %v3233 = vsel %vm3229, %v3213, %v3216
        %v3234 = vsel %vm3232, %v3222, 2102212464
        %v3235 = vsel %vm3231, %v3219, %v3234
        %v3236 = vsel %vm3230, %v3233, %v3235
        %v3237 = vsel %vm3229, %v3216, %v3219
        %v3238 = vsel %vm3232, %v3225, 920167782
        %v3239 = vsel %vm3231, %v3222, %v3238
        %v3240 = vsel %vm3230, %v3237, %v3239
        %v3241 = vsel %vm3229, %v3219, %v3222
        %v3242 = vsel %vm3232, %v3228, 1326507024
        %v3243 = vsel %vm3231, %v3225, %v3242
        %v3244 = vsel %vm3230, %v3241, %v3243
        %v3245 = vshll.u32 %v3205, 8
        %v3246 = vmul.u32.u64.compose %v3245, %v3244
        %v3247 = vextract.low.u32 %v3246
        %v3248 = vextract.high.u32 %v3246
        %v3249 = vmul.u32.u64.compose %v3245, %v3240
        %v3250 = vextract.low.u32 %v3249
        %v3251 = vextract.high.u32 %v3249
        %v3252 = vmul.u32 %v3245, %v3236
        %v3253 = vadd.s32 %v3248, %v3250
        %vm3254 = vc.u32 %v3248, %v3250
        %v3255 = vadd.s32 %v3251, 1
        %v3256 = vsel %vm3254, %v3255, %v3251
        %v3257 = vadd.s32 %v3252, %v3256
        %v3258 = vadd.s32 %v3257, 536870912
        %v3259 = vshrl.u32 %v3258, 30
        %v3260 = vshll.u32 %v3259, 30
        %v3261 = vsub.s32 %v3257, %v3260
        %vm3262 = vcmp.lt.s32.totalorder %v3261, 0
        %v3263 = vsub.s32 0, %v3261
        %v3264 = vsel %vm3262, %v3263, %v3261
        %v3265 = vclz %v3264
        %v3266 = vsub.s32 %v3265, 2
        %vm3267 = vcmp.gt.s32.totalorder 0, %v3266
        %v3268 = vsel %vm3267, 0, %v3266
        %v3269 = vsub.s32 32, %v3268
        %v3270 = vshll.u32 %v3261, %v3268
        %v3271 = vshrl.u32 %v3253, %v3269
        %v3272 = vor.u32 %v3270, %v3271
        %v3273 = vsub.s32 4294967266, %v3268
        %v3274 = vadd.s32 %v3273, 127
        %v3275 = vshll.u32 %v3274, 23
        %v3276 = vor.u32 4788187, %v3275
        %v3277 = vand.u32 2147483647, %v3276
        %v3279 = vcvt.s32.f32 %v3272
        %v3280 = vmul.f32 %v3279, %v3277
        %v3281 = vxor.u32 %v3280, 2147483648
        %v3282 = vsel %vm3199, %v3281, %v3280
        %v3283 = vsub.s32 4, %v3259
        %v3284 = vsel %vm3199, %v3283, %v3259
        %v3285 = vsel %vm3198, %v2059, %v3282
        %v3286 = vsel %vm3198, 0, %v3284
        %v3287 = vcosq.f32.pop %v3285
        %v3288 = vsinq.f32.pop %v3285
        %vm3289 = vweird.f32 %v2059
        %v3290 = vand.u32 %v3286, 3
        %vm3291 = vcmp.lt.s32.totalorder %v3290, 2
        %vm3292 = vcmp.eq.s32.totalorder %v3290, 0
        %v3293 = vxor.u32 %v3288, 2147483648
        %v3294 = vsel %vm3292, %v3287, %v3293
        %vm3295 = vcmp.eq.s32.totalorder %v3290, 2
        %v3296 = vxor.u32 %v3287, 2147483648
        %v3297 = vsel %vm3295, %v3296, %v3288
        %v3298 = vsel %vm3291, %v3294, %v3297
        %v3299 = vsel %vm3289, nan, %v3298
        %v3300 = vand.u32 2147483647, %v2060
        %vm3301 = vcmp.le.f32.partialorder %v3300, 0.7853982
        %vm3302 = vcmp.lt.s32.totalorder %v2060, 0
        %v3303 = vand.u32 %v2060, 2139095040
        %v3304 = vshrl.u32 %v3303, 23
        %v3305 = vsub.s32 %v3304, 127
        %v3306 = vand.u32 2147483647, %v2060
        %v3307 = vand.u32 %v3306, 8388607
        %v3308 = vor.u32 %v3307, 8388608
        %v3309 = vsub.s32 0, %v3308
        %v3310 = vadd.s32 %v3305, 1
        %vm3311 = vcmp.gt.s32.totalorder %v3310, 0
        %v3312 = vsel %vm3311, %v3310, 0
        %v3313 = vshrl.u32 %v3312, 5
        %v3314 = vand.u32 %v3312, 31
        %v3315 = vsub.s32 32, %v3314
        %v3316 = vshrl.u32 683565275, %v3315
        %v3317 = vshll.u32 683565275, %v3314
        %v3318 = vshrl.u32 2475754826, %v3315
        %v3319 = vor.u32 %v3317, %v3318
        %v3320 = vshll.u32 2475754826, %v3314
        %v3321 = vshrl.u32 2131351028, %v3315
        %v3322 = vor.u32 %v3320, %v3321
        %v3323 = vshll.u32 2131351028, %v3314
        %v3324 = vshrl.u32 2102212464, %v3315
        %v3325 = vor.u32 %v3323, %v3324
        %v3326 = vshll.u32 2102212464, %v3314
        %v3327 = vshrl.u32 920167782, %v3315
        %v3328 = vor.u32 %v3326, %v3327
        %v3329 = vshll.u32 920167782, %v3314
        %v3330 = vshrl.u32 1326507024, %v3315
        %v3331 = vor.u32 %v3329, %v3330
        %vm3332 = vcmp.lt.s32.totalorder %v3313, 1
        %vm3333 = vcmp.lt.s32.totalorder %v3313, 2
        %vm3334 = vcmp.lt.s32.totalorder %v3313, 3
        %vm3335 = vcmp.lt.s32.totalorder %v3313, 4
        %v3336 = vsel %vm3332, %v3316, %v3319
        %v3337 = vsel %vm3335, %v3325, 2102212464
        %v3338 = vsel %vm3334, %v3322, %v3337
        %v3339 = vsel %vm3333, %v3336, %v3338
        %v3340 = vsel %vm3332, %v3319, %v3322
        %v3341 = vsel %vm3335, %v3328, 920167782
        %v3342 = vsel %vm3334, %v3325, %v3341
        %v3343 = vsel %vm3333, %v3340, %v3342
        %v3344 = vsel %vm3332, %v3322, %v3325
        %v3345 = vsel %vm3335, %v3331, 1326507024
        %v3346 = vsel %vm3334, %v3328, %v3345
        %v3347 = vsel %vm3333, %v3344, %v3346
        %v3348 = vshll.u32 %v3308, 8
        %v3349 = vmul.u32.u64.compose %v3348, %v3347
        %v3350 = vextract.low.u32 %v3349
        %v3351 = vextract.high.u32 %v3349
        %v3352 = vmul.u32.u64.compose %v3348, %v3343
        %v3353 = vextract.low.u32 %v3352
        %v3354 = vextract.high.u32 %v3352
        %v3355 = vmul.u32 %v3348, %v3339
        %v3356 = vadd.s32 %v3351, %v3353
        %vm3357 = vc.u32 %v3351, %v3353
        %v3358 = vadd.s32 %v3354, 1
        %v3359 = vsel %vm3357, %v3358, %v3354
        %v3360 = vadd.s32 %v3355, %v3359
        %v3361 = vadd.s32 %v3360, 536870912
        %v3362 = vshrl.u32 %v3361, 30
        %v3363 = vshll.u32 %v3362, 30
        %v3364 = vsub.s32 %v3360, %v3363
        %vm3365 = vcmp.lt.s32.totalorder %v3364, 0
        %v3366 = vsub.s32 0, %v3364
        %v3367 = vsel %vm3365, %v3366, %v3364
        %v3368 = vclz %v3367
        %v3369 = vsub.s32 %v3368, 2
        %vm3370 = vcmp.gt.s32.totalorder 0, %v3369
        %v3371 = vsel %vm3370, 0, %v3369
        %v3372 = vsub.s32 32, %v3371
        %v3373 = vshll.u32 %v3364, %v3371
        %v3374 = vshrl.u32 %v3356, %v3372
        %v3375 = vor.u32 %v3373, %v3374
        %v3376 = vsub.s32 4294967266, %v3371
        %v3377 = vadd.s32 %v3376, 127
        %v3378 = vshll.u32 %v3377, 23
        %v3379 = vor.u32 4788187, %v3378
        %v3380 = vand.u32 2147483647, %v3379
        %v3382 = vcvt.s32.f32 %v3375
        %v3383 = vmul.f32 %v3382, %v3380
        %v3384 = vxor.u32 %v3383, 2147483648
        %v3385 = vsel %vm3302, %v3384, %v3383
        %v3386 = vsub.s32 4, %v3362
        %v3387 = vsel %vm3302, %v3386, %v3362
        %v3388 = vsel %vm3301, %v2060, %v3385
        %v3389 = vsel %vm3301, 0, %v3387
        %v3390 = vcosq.f32.pop %v3388
        %v3391 = vsinq.f32.pop %v3388
        %vm3392 = vweird.f32 %v2060
        %v3393 = vand.u32 %v3389, 3
        %vm3394 = vcmp.lt.s32.totalorder %v3393, 2
        %vm3395 = vcmp.eq.s32.totalorder %v3393, 0
        %v3396 = vxor.u32 %v3391, 2147483648
        %v3397 = vsel %vm3395, %v3390, %v3396
        %vm3398 = vcmp.eq.s32.totalorder %v3393, 2
        %v3399 = vxor.u32 %v3390, 2147483648
        %v3400 = vsel %vm3398, %v3399, %v3391
        %v3401 = vsel %vm3394, %v3397, %v3400
        %v3402 = vsel %vm3392, nan, %v3401
        %v3403 = vand.u32 2147483647, %v2061
        %vm3404 = vcmp.le.f32.partialorder %v3403, 0.7853982
        %vm3405 = vcmp.lt.s32.totalorder %v2061, 0
        %v3406 = vand.u32 %v2061, 2139095040
        %v3407 = vshrl.u32 %v3406, 23
        %v3408 = vsub.s32 %v3407, 127
        %v3409 = vand.u32 2147483647, %v2061
        %v3410 = vand.u32 %v3409, 8388607
        %v3411 = vor.u32 %v3410, 8388608
        %v3412 = vsub.s32 0, %v3411
        %v3413 = vadd.s32 %v3408, 1
        %vm3414 = vcmp.gt.s32.totalorder %v3413, 0
        %v3415 = vsel %vm3414, %v3413, 0
        %v3416 = vshrl.u32 %v3415, 5
        %v3417 = vand.u32 %v3415, 31
        %v3418 = vsub.s32 32, %v3417
        %v3419 = vshrl.u32 683565275, %v3418
        %v3420 = vshll.u32 683565275, %v3417
        %v3421 = vshrl.u32 2475754826, %v3418
        %v3422 = vor.u32 %v3420, %v3421
        %v3423 = vshll.u32 2475754826, %v3417
        %v3424 = vshrl.u32 2131351028, %v3418
        %v3425 = vor.u32 %v3423, %v3424
        %v3426 = vshll.u32 2131351028, %v3417
        %v3427 = vshrl.u32 2102212464, %v3418
        %v3428 = vor.u32 %v3426, %v3427
        %v3429 = vshll.u32 2102212464, %v3417
        %v3430 = vshrl.u32 920167782, %v3418
        %v3431 = vor.u32 %v3429, %v3430
        %v3432 = vshll.u32 920167782, %v3417
        %v3433 = vshrl.u32 1326507024, %v3418
        %v3434 = vor.u32 %v3432, %v3433
        %vm3435 = vcmp.lt.s32.totalorder %v3416, 1
        %vm3436 = vcmp.lt.s32.totalorder %v3416, 2
        %vm3437 = vcmp.lt.s32.totalorder %v3416, 3
        %vm3438 = vcmp.lt.s32.totalorder %v3416, 4
        %v3439 = vsel %vm3435, %v3419, %v3422
        %v3440 = vsel %vm3438, %v3428, 2102212464
        %v3441 = vsel %vm3437, %v3425, %v3440
        %v3442 = vsel %vm3436, %v3439, %v3441
        %v3443 = vsel %vm3435, %v3422, %v3425
        %v3444 = vsel %vm3438, %v3431, 920167782
        %v3445 = vsel %vm3437, %v3428, %v3444
        %v3446 = vsel %vm3436, %v3443, %v3445
        %v3447 = vsel %vm3435, %v3425, %v3428
        %v3448 = vsel %vm3438, %v3434, 1326507024
        %v3449 = vsel %vm3437, %v3431, %v3448
        %v3450 = vsel %vm3436, %v3447, %v3449
        %v3451 = vshll.u32 %v3411, 8
        %v3452 = vmul.u32.u64.compose %v3451, %v3450
        %v3453 = vextract.low.u32 %v3452
        %v3454 = vextract.high.u32 %v3452
        %v3455 = vmul.u32.u64.compose %v3451, %v3446
        %v3456 = vextract.low.u32 %v3455
        %v3457 = vextract.high.u32 %v3455
        %v3458 = vmul.u32 %v3451, %v3442
        %v3459 = vadd.s32 %v3454, %v3456
        %vm3460 = vc.u32 %v3454, %v3456
        %v3461 = vadd.s32 %v3457, 1
        %v3462 = vsel %vm3460, %v3461, %v3457
        %v3463 = vadd.s32 %v3458, %v3462
        %v3464 = vadd.s32 %v3463, 536870912
        %v3465 = vshrl.u32 %v3464, 30
        %v3466 = vshll.u32 %v3465, 30
        %v3467 = vsub.s32 %v3463, %v3466
        %vm3468 = vcmp.lt.s32.totalorder %v3467, 0
        %v3469 = vsub.s32 0, %v3467
        %v3470 = vsel %vm3468, %v3469, %v3467
        %v3471 = vclz %v3470
        %v3472 = vsub.s32 %v3471, 2
        %vm3473 = vcmp.gt.s32.totalorder 0, %v3472
        %v3474 = vsel %vm3473, 0, %v3472
        %v3475 = vsub.s32 32, %v3474
        %v3476 = vshll.u32 %v3467, %v3474
        %v3477 = vshrl.u32 %v3459, %v3475
        %v3478 = vor.u32 %v3476, %v3477
        %v3479 = vsub.s32 4294967266, %v3474
        %v3480 = vadd.s32 %v3479, 127
        %v3481 = vshll.u32 %v3480, 23
        %v3482 = vor.u32 4788187, %v3481
        %v3483 = vand.u32 2147483647, %v3482
        %v3485 = vcvt.s32.f32 %v3478
        %v3486 = vmul.f32 %v3485, %v3483
        %v3487 = vxor.u32 %v3486, 2147483648
        %v3488 = vsel %vm3405, %v3487, %v3486
        %v3489 = vsub.s32 4, %v3465
        %v3490 = vsel %vm3405, %v3489, %v3465
        %v3491 = vsel %vm3404, %v2061, %v3488
        %v3492 = vsel %vm3404, 0, %v3490
        %v3493 = vcosq.f32.pop %v3491
        %v3494 = vsinq.f32.pop %v3491
        %vm3495 = vweird.f32 %v2061
        %v3496 = vand.u32 %v3492, 3
        %vm3497 = vcmp.lt.s32.totalorder %v3496, 2
        %vm3498 = vcmp.eq.s32.totalorder %v3496, 0
        %v3499 = vxor.u32 %v3494, 2147483648
        %v3500 = vsel %vm3498, %v3493, %v3499
        %vm3501 = vcmp.eq.s32.totalorder %v3496, 2
        %v3502 = vxor.u32 %v3493, 2147483648
        %v3503 = vsel %vm3501, %v3502, %v3494
        %v3504 = vsel %vm3497, %v3500, %v3503
        %v3505 = vsel %vm3495, nan, %v3504
        %v3506 = vand.u32 2147483647, %v2062
        %vm3507 = vcmp.le.f32.partialorder %v3506, 0.7853982
        %vm3508 = vcmp.lt.s32.totalorder %v2062, 0
        %v3509 = vand.u32 %v2062, 2139095040
        %v3510 = vshrl.u32 %v3509, 23
        %v3511 = vsub.s32 %v3510, 127
        %v3512 = vand.u32 2147483647, %v2062
        %v3513 = vand.u32 %v3512, 8388607
        %v3514 = vor.u32 %v3513, 8388608
        %v3515 = vsub.s32 0, %v3514
        %v3516 = vadd.s32 %v3511, 1
        %vm3517 = vcmp.gt.s32.totalorder %v3516, 0
        %v3518 = vsel %vm3517, %v3516, 0
        %v3519 = vshrl.u32 %v3518, 5
        %v3520 = vand.u32 %v3518, 31
        %v3521 = vsub.s32 32, %v3520
        %v3522 = vshrl.u32 683565275, %v3521
        %v3523 = vshll.u32 683565275, %v3520
        %v3524 = vshrl.u32 2475754826, %v3521
        %v3525 = vor.u32 %v3523, %v3524
        %v3526 = vshll.u32 2475754826, %v3520
        %v3527 = vshrl.u32 2131351028, %v3521
        %v3528 = vor.u32 %v3526, %v3527
        %v3529 = vshll.u32 2131351028, %v3520
        %v3530 = vshrl.u32 2102212464, %v3521
        %v3531 = vor.u32 %v3529, %v3530
        %v3532 = vshll.u32 2102212464, %v3520
        %v3533 = vshrl.u32 920167782, %v3521
        %v3534 = vor.u32 %v3532, %v3533
        %v3535 = vshll.u32 920167782, %v3520
        %v3536 = vshrl.u32 1326507024, %v3521
        %v3537 = vor.u32 %v3535, %v3536
        %vm3538 = vcmp.lt.s32.totalorder %v3519, 1
        %vm3539 = vcmp.lt.s32.totalorder %v3519, 2
        %vm3540 = vcmp.lt.s32.totalorder %v3519, 3
        %vm3541 = vcmp.lt.s32.totalorder %v3519, 4
        %v3542 = vsel %vm3538, %v3522, %v3525
        %v3543 = vsel %vm3541, %v3531, 2102212464
        %v3544 = vsel %vm3540, %v3528, %v3543
        %v3545 = vsel %vm3539, %v3542, %v3544
        %v3546 = vsel %vm3538, %v3525, %v3528
        %v3547 = vsel %vm3541, %v3534, 920167782
        %v3548 = vsel %vm3540, %v3531, %v3547
        %v3549 = vsel %vm3539, %v3546, %v3548
        %v3550 = vsel %vm3538, %v3528, %v3531
        %v3551 = vsel %vm3541, %v3537, 1326507024
        %v3552 = vsel %vm3540, %v3534, %v3551
        %v3553 = vsel %vm3539, %v3550, %v3552
        %v3554 = vshll.u32 %v3514, 8
        %v3555 = vmul.u32.u64.compose %v3554, %v3553
        %v3556 = vextract.low.u32 %v3555
        %v3557 = vextract.high.u32 %v3555
        %v3558 = vmul.u32.u64.compose %v3554, %v3549
        %v3559 = vextract.low.u32 %v3558
        %v3560 = vextract.high.u32 %v3558
        %v3561 = vmul.u32 %v3554, %v3545
        %v3562 = vadd.s32 %v3557, %v3559
        %vm3563 = vc.u32 %v3557, %v3559
        %v3564 = vadd.s32 %v3560, 1
        %v3565 = vsel %vm3563, %v3564, %v3560
        %v3566 = vadd.s32 %v3561, %v3565
        %v3567 = vadd.s32 %v3566, 536870912
        %v3568 = vshrl.u32 %v3567, 30
        %v3569 = vshll.u32 %v3568, 30
        %v3570 = vsub.s32 %v3566, %v3569
        %vm3571 = vcmp.lt.s32.totalorder %v3570, 0
        %v3572 = vsub.s32 0, %v3570
        %v3573 = vsel %vm3571, %v3572, %v3570
        %v3574 = vclz %v3573
        %v3575 = vsub.s32 %v3574, 2
        %vm3576 = vcmp.gt.s32.totalorder 0, %v3575
        %v3577 = vsel %vm3576, 0, %v3575
        %v3578 = vsub.s32 32, %v3577
        %v3579 = vshll.u32 %v3570, %v3577
        %v3580 = vshrl.u32 %v3562, %v3578
        %v3581 = vor.u32 %v3579, %v3580
        %v3582 = vsub.s32 4294967266, %v3577
        %v3583 = vadd.s32 %v3582, 127
        %v3584 = vshll.u32 %v3583, 23
        %v3585 = vor.u32 4788187, %v3584
        %v3586 = vand.u32 2147483647, %v3585
        %v3588 = vcvt.s32.f32 %v3581
        %v3589 = vmul.f32 %v3588, %v3586
        %v3590 = vxor.u32 %v3589, 2147483648
        %v3591 = vsel %vm3508, %v3590, %v3589
        %v3592 = vsub.s32 4, %v3568
        %v3593 = vsel %vm3508, %v3592, %v3568
        %v3594 = vsel %vm3507, %v2062, %v3591
        %v3595 = vsel %vm3507, 0, %v3593
        %v3596 = vcosq.f32.pop %v3594
        %v3597 = vsinq.f32.pop %v3594
        %vm3598 = vweird.f32 %v2062
        %v3599 = vand.u32 %v3595, 3
        %vm3600 = vcmp.lt.s32.totalorder %v3599, 2
        %vm3601 = vcmp.eq.s32.totalorder %v3599, 0
        %v3602 = vxor.u32 %v3597, 2147483648
        %v3603 = vsel %vm3601, %v3596, %v3602
        %vm3604 = vcmp.eq.s32.totalorder %v3599, 2
        %v3605 = vxor.u32 %v3596, 2147483648
        %v3606 = vsel %vm3604, %v3605, %v3597
        %v3607 = vsel %vm3600, %v3603, %v3606
        %v3608 = vsel %vm3598, nan, %v3607
        %v3609 = vand.u32 2147483647, %v2063
        %vm3610 = vcmp.le.f32.partialorder %v3609, 0.7853982
        %vm3611 = vcmp.lt.s32.totalorder %v2063, 0
        %v3612 = vand.u32 %v2063, 2139095040
        %v3613 = vshrl.u32 %v3612, 23
        %v3614 = vsub.s32 %v3613, 127
        %v3615 = vand.u32 2147483647, %v2063
        %v3616 = vand.u32 %v3615, 8388607
        %v3617 = vor.u32 %v3616, 8388608
        %v3618 = vsub.s32 0, %v3617
        %v3619 = vadd.s32 %v3614, 1
        %vm3620 = vcmp.gt.s32.totalorder %v3619, 0
        %v3621 = vsel %vm3620, %v3619, 0
        %v3622 = vshrl.u32 %v3621, 5
        %v3623 = vand.u32 %v3621, 31
        %v3624 = vsub.s32 32, %v3623
        %v3625 = vshrl.u32 683565275, %v3624
        %v3626 = vshll.u32 683565275, %v3623
        %v3627 = vshrl.u32 2475754826, %v3624
        %v3628 = vor.u32 %v3626, %v3627
        %v3629 = vshll.u32 2475754826, %v3623
        %v3630 = vshrl.u32 2131351028, %v3624
        %v3631 = vor.u32 %v3629, %v3630
        %v3632 = vshll.u32 2131351028, %v3623
        %v3633 = vshrl.u32 2102212464, %v3624
        %v3634 = vor.u32 %v3632, %v3633
        %v3635 = vshll.u32 2102212464, %v3623
        %v3636 = vshrl.u32 920167782, %v3624
        %v3637 = vor.u32 %v3635, %v3636
        %v3638 = vshll.u32 920167782, %v3623
        %v3639 = vshrl.u32 1326507024, %v3624
        %v3640 = vor.u32 %v3638, %v3639
        %vm3641 = vcmp.lt.s32.totalorder %v3622, 1
        %vm3642 = vcmp.lt.s32.totalorder %v3622, 2
        %vm3643 = vcmp.lt.s32.totalorder %v3622, 3
        %vm3644 = vcmp.lt.s32.totalorder %v3622, 4
        %v3645 = vsel %vm3641, %v3625, %v3628
        %v3646 = vsel %vm3644, %v3634, 2102212464
        %v3647 = vsel %vm3643, %v3631, %v3646
        %v3648 = vsel %vm3642, %v3645, %v3647
        %v3649 = vsel %vm3641, %v3628, %v3631
        %v3650 = vsel %vm3644, %v3637, 920167782
        %v3651 = vsel %vm3643, %v3634, %v3650
        %v3652 = vsel %vm3642, %v3649, %v3651
        %v3653 = vsel %vm3641, %v3631, %v3634
        %v3654 = vsel %vm3644, %v3640, 1326507024
        %v3655 = vsel %vm3643, %v3637, %v3654
        %v3656 = vsel %vm3642, %v3653, %v3655
        %v3657 = vshll.u32 %v3617, 8
        %v3658 = vmul.u32.u64.compose %v3657, %v3656
        %v3659 = vextract.low.u32 %v3658
        %v3660 = vextract.high.u32 %v3658
        %v3661 = vmul.u32.u64.compose %v3657, %v3652
        %v3662 = vextract.low.u32 %v3661
        %v3663 = vextract.high.u32 %v3661
        %v3664 = vmul.u32 %v3657, %v3648
        %v3665 = vadd.s32 %v3660, %v3662
        %vm3666 = vc.u32 %v3660, %v3662
        %v3667 = vadd.s32 %v3663, 1
        %v3668 = vsel %vm3666, %v3667, %v3663
        %v3669 = vadd.s32 %v3664, %v3668
        %v3670 = vadd.s32 %v3669, 536870912
        %v3671 = vshrl.u32 %v3670, 30
        %v3672 = vshll.u32 %v3671, 30
        %v3673 = vsub.s32 %v3669, %v3672
        %vm3674 = vcmp.lt.s32.totalorder %v3673, 0
        %v3675 = vsub.s32 0, %v3673
        %v3676 = vsel %vm3674, %v3675, %v3673
        %v3677 = vclz %v3676
        %v3678 = vsub.s32 %v3677, 2
        %vm3679 = vcmp.gt.s32.totalorder 0, %v3678
        %v3680 = vsel %vm3679, 0, %v3678
        %v3681 = vsub.s32 32, %v3680
        %v3682 = vshll.u32 %v3673, %v3680
        %v3683 = vshrl.u32 %v3665, %v3681
        %v3684 = vor.u32 %v3682, %v3683
        %v3685 = vsub.s32 4294967266, %v3680
        %v3686 = vadd.s32 %v3685, 127
        %v3687 = vshll.u32 %v3686, 23
        %v3688 = vor.u32 4788187, %v3687
        %v3689 = vand.u32 2147483647, %v3688
        %v3691 = vcvt.s32.f32 %v3684
        %v3692 = vmul.f32 %v3691, %v3689
        %v3693 = vxor.u32 %v3692, 2147483648
        %v3694 = vsel %vm3611, %v3693, %v3692
        %v3695 = vsub.s32 4, %v3671
        %v3696 = vsel %vm3611, %v3695, %v3671
        %v3697 = vsel %vm3610, %v2063, %v3694
        %v3698 = vsel %vm3610, 0, %v3696
        %v3699 = vcosq.f32.pop %v3697
        %v3700 = vsinq.f32.pop %v3697
        %vm3701 = vweird.f32 %v2063
        %v3702 = vand.u32 %v3698, 3
        %vm3703 = vcmp.lt.s32.totalorder %v3702, 2
        %vm3704 = vcmp.eq.s32.totalorder %v3702, 0
        %v3705 = vxor.u32 %v3700, 2147483648
        %v3706 = vsel %vm3704, %v3699, %v3705
        %vm3707 = vcmp.eq.s32.totalorder %v3702, 2
        %v3708 = vxor.u32 %v3699, 2147483648
        %v3709 = vsel %vm3707, %v3708, %v3700
        %v3710 = vsel %vm3703, %v3706, %v3709
        %v3711 = vsel %vm3701, nan, %v3710
        %v3712 = vadd.f32 %v2166, 1.0
        %v3713 = vadd.f32 %v2269, 1.0
        %v3714 = vadd.f32 %v2372, 1.0
        %v3715 = vadd.f32 %v2475, 1.0
        %v3716 = vadd.f32 %v2578, 1.0
        %v3717 = vadd.f32 %v2681, 1.0
        %v3718 = vadd.f32 %v2784, 1.0
        %v3719 = vadd.f32 %v2887, 1.0
        %v3720 = vadd.f32 %v2990, 1.0
        %v3721 = vadd.f32 %v3093, 1.0
        %v3722 = vadd.f32 %v3196, 1.0
        %v3723 = vadd.f32 %v3299, 1.0
        %v3724 = vadd.f32 %v3402, 1.0
        %v3725 = vadd.f32 %v3505, 1.0
        %v3726 = vadd.f32 %v3608, 1.0
        %v3727 = vadd.f32 %v3711, 1.0
        %v3728 = vmul.f32 %v3712, 0.5
        %v3729 = vmul.f32 %v3713, 0.5
        %v3730 = vmul.f32 %v3714, 0.5
        %v3731 = vmul.f32 %v3715, 0.5
        %v3732 = vmul.f32 %v3716, 0.5
        %v3733 = vmul.f32 %v3717, 0.5
        %v3734 = vmul.f32 %v3718, 0.5
        %v3735 = vmul.f32 %v3719, 0.5
        %v3736 = vmul.f32 %v3720, 0.5
        %v3737 = vmul.f32 %v3721, 0.5
        %v3738 = vmul.f32 %v3722, 0.5
        %v3739 = vmul.f32 %v3723, 0.5
        %v3740 = vmul.f32 %v3724, 0.5
        %v3741 = vmul.f32 %v3725, 0.5
        %v3742 = vmul.f32 %v3726, 0.5
        %v3743 = vmul.f32 %v3727, 0.5
        %v3744 = vsel %vm2032, %v3728, 0.0
        %v3745 = vsel %vm2033, %v3729, 0.0
        %v3746 = vsel %vm2034, %v3730, 0.0
        %v3747 = vsel %vm2035, %v3731, 0.0
        %v3748 = vsel %vm2036, %v3732, 0.0
        %v3749 = vsel %vm2037, %v3733, 0.0
        %v3750 = vsel %vm2038, %v3734, 0.0
        %v3751 = vsel %vm2039, %v3735, 0.0
        %v3752 = vsel %vm2040, %v3736, 0.0
        %v3753 = vsel %vm2041, %v3737, 0.0
        %v3754 = vsel %vm2042, %v3738, 0.0
        %v3755 = vsel %vm2043, %v3739, 0.0
        %v3756 = vsel %vm2044, %v3740, 0.0
        %v3757 = vsel %vm2045, %v3741, 0.0
        %v3758 = vsel %vm2046, %v3742, 0.0
        %v3759 = vsel %vm2047, %v3743, 0.0
        %v3760 = vmul.f32 %v2016, %v3744
        %v3761 = vmul.f32 %v2017, %v3745
        %v3762 = vmul.f32 %v2018, %v3746
        %v3763 = vmul.f32 %v2019, %v3747
        %v3764 = vmul.f32 %v2020, %v3748
        %v3765 = vmul.f32 %v2021, %v3749
        %v3766 = vmul.f32 %v2022, %v3750
        %v3767 = vmul.f32 %v2023, %v3751
        %v3768 = vmul.f32 %v2024, %v3752
        %v3769 = vmul.f32 %v2025, %v3753
        %v3770 = vmul.f32 %v2026, %v3754
        %v3771 = vmul.f32 %v2027, %v3755
        %v3772 = vmul.f32 %v2028, %v3756
        %v3773 = vmul.f32 %v2029, %v3757
        %v3774 = vmul.f32 %v2030, %v3758
        %v3775 = vmul.f32 %v2031, %v3759
        %v3776 = vld [vmem:[#allocation2] sm:$0x3]
        %v3777 = vld [vmem:[%s141] sm:$0x3]
        %3778 = vmatprep.subr.mxu0 0.0
        %3779 = vmatpush1.msra.mxu0 %v3760
        %3780 = vmatprep.subr.mxu0 0.0
        %3781 = vmatpush1.msra.mxu0 %v3761
        %3782 = vmatprep.subr.mxu0 0.0
        %3783 = vmatpush1.msra.mxu0 %v3762
        %3784 = vmatprep.subr.mxu0 0.0
        %3785 = vmatpush1.msra.mxu0 %v3763
        %3786 = vmatprep.subr.mxu0 0.0
        %3787 = vmatpush1.msra.mxu0 %v3764
        %3788 = vmatprep.subr.mxu0 0.0
        %3789 = vmatpush1.msra.mxu0 %v3765
        %3790 = vmatprep.subr.mxu0 0.0
        %3791 = vmatpush1.msra.mxu0 %v3766
        %3792 = vmatprep.subr.mxu0 0.0
        %3793 = vmatpush1.msra.mxu0 %v3767
        %3794 = vmatprep.subr.mxu0 0.0
        %3795 = vmatpush1.msra.mxu0 %v3768
        %3796 = vmatprep.subr.mxu0 0.0
        %3797 = vmatpush1.msra.mxu0 %v3769
        %3798 = vmatprep.subr.mxu0 0.0
        %3799 = vmatpush1.msra.mxu0 %v3770
        %3800 = vmatprep.subr.mxu0 0.0
        %3801 = vmatpush1.msra.mxu0 %v3771
        %3802 = vmatprep.subr.mxu0 0.0
        %3803 = vmatpush1.msra.mxu0 %v3772
        %3804 = vmatprep.subr.mxu0 0.0
        %3805 = vmatpush1.msra.mxu0 %v3773
        %3806 = vmatprep.subr.mxu0 0.0
        %3807 = vmatpush1.msra.mxu0 %v3774
        %3808 = vmatprep.subr.mxu0 0.0
        %3809 = vmatpush1.msra.mxu0 %v3775
        %3810 = vmatprep.subr.mxu0 0.0
        %3811 = vmatpush1.msra.mxu0 0.0
        %3812 = vmatprep.subr.mxu0 0.0
        %3813 = vmatpush1.msra.mxu0 0.0
        %3814 = vmatprep.subr.mxu0 0.0
        %3815 = vmatpush1.msra.mxu0 0.0
        %3816 = vmatprep.subr.mxu0 0.0
        %3817 = vmatpush1.msra.mxu0 0.0
        %3818 = vmatprep.subr.mxu0 0.0
        %3819 = vmatpush1.msra.mxu0 0.0
        %3820 = vmatprep.subr.mxu0 0.0
        %3821 = vmatpush1.msra.mxu0 0.0
        %3822 = vmatprep.subr.mxu0 0.0
        %3823 = vmatpush1.msra.mxu0 0.0
        %3824 = vmatprep.subr.mxu0 0.0
        %3825 = vmatpush1.msra.mxu0 0.0
        %3826 = vmatprep.subr.mxu0 0.0
        %3827 = vmatpush1.msra.mxu0 0.0
        %3828 = vmatprep.subr.mxu0 0.0
        %3829 = vmatpush1.msra.mxu0 0.0
        %3830 = vmatprep.subr.mxu0 0.0
        %3831 = vmatpush1.msra.mxu0 0.0
        %3832 = vmatprep.subr.mxu0 0.0
        %3833 = vmatpush1.msra.mxu0 0.0
        %3834 = vmatprep.subr.mxu0 0.0
        %3835 = vmatpush1.msra.mxu0 0.0
        %3836 = vmatprep.subr.mxu0 0.0
        %3837 = vmatpush1.msra.mxu0 0.0
        %3838 = vmatprep.subr.mxu0 0.0
        %3839 = vmatpush1.msra.mxu0 0.0
        %3840 = vmatprep.subr.mxu0 0.0
        %3841 = vmatpush1.msra.mxu0 0.0
        %3842 = vmatprep.mubr.f32.mxu0 0.0
        %3843 = vmatmul.mubr.f32.gmra.mrb[0].mxu0 %v3777
        %v3844 = vpop.f32.mrb[0].mxu0
        %v3845 = vadd.f32 0.0, %v3844
        %v3846 = vpop.f32.mrb[0].mxu0
        %3847 = vdwg.mxu0
        %v3848 = vadd.f32 %v3776, %v3845
        %3849 = vst [vmem:[#allocation2] sm:$0x3] %v3848
        %p3850 = scmp.eq.s32.totalorder %s33, 1
        // Predicated region
        $region33: #{tpu_custom_call.1} parent=23 // pred_check
          %p3851 = pneg %p3850
        $region34: #{tpu_custom_call.1} parent=23 // pred_check_branch
          %3853 = sbr.rel (%p3851) target = $region36
        $region35: #{tpu_custom_call.1} parent=23 // pred_region
          %v3854 = vld [vmem:[#allocation2] sm:$0x3]
          %3855 = vst [vmem:[%s159] sm:$0x3] %v3854
        $region36: #{tpu_custom_call.1} parent=23 // pred_fallthru
          _
        %s3856 = sand.u32 %s78, 1
        %s3857 = scalar_lea.sflag [#allocation8], %s3856
        %s3858 = sand.u32 %s78, 1
        %s3859 = smul.addr %s3858, 2
        %s3860 = scalar_lea.vmem [#allocation9], %s3859
        // Predicated region
        $region37: #{tpu_custom_call.1} parent=23 // pred_check
          %p3861 = pneg %p88
        $region38: #{tpu_custom_call.1} parent=23 // pred_check_branch
          %3863 = sbr.rel (%p3861) target = $region40
        $region39: #{tpu_custom_call.1} parent=23 // pred_region
          %s3865 = ssub.s32 32, 32
          %3866 = vsyncadd %s3857, %s3865
          %s3867 = smul.addr %s32, 32
          %s3868 = scalar_lea.hbm %s3, %s3867
          %s3870 = sshll.u32 %s3860, 4
          %s3871 = int_to_ptr.vmem [resolvable:$true] %s3870
          %3873 = dma.vmem_to_hbm [thread:$0]  %s3871, 32, %s3868, %s3857
        $region40: #{tpu_custom_call.1} parent=23 // pred_fallthru
          _
      $region24: #{tpu_custom_call.1} parent=5 // pred_fallthru
        _
      %p3874 = scmp.le.s32.totalorder 2, %s23
      // Predicated region
      $region41: #{tpu_custom_call.1} parent=5 // pred_check
        %p3875 = pneg %p3874
      $region42: #{tpu_custom_call.1} parent=5 // pred_check_branch
        %3877 = sbr.rel (%p3875) target = $region44
      $region43: #{tpu_custom_call.1} parent=5 // pred_region
        %s3878 = ssub.s32 %s23, 2
        // Predicated region
        $region45: #{tpu_custom_call.1} parent=43 // pred_check
          %p3879 = pneg %p94
        $region46: #{tpu_custom_call.1} parent=43 // pred_check_branch
          %3881 = sbr.rel (%p3879) target = $region48
        $region47: #{tpu_custom_call.1} parent=43 // pred_region
          %s3882 = sand.u32 %s79, 1
          %s3883 = scalar_lea.sflag [#allocation8], %s3882
          %s3884 = sand.u32 %s79, 1
          %s3885 = smul.addr %s3884, 2
          %s3886 = scalar_lea.vmem [#allocation9], %s3885
          %3887 = dma.done %s3883, 32
        $region48: #{tpu_custom_call.1} parent=43 // pred_fallthru
          _
      $region44: #{tpu_custom_call.1} parent=5 // pred_fallthru
        _
    $region6: #{tpu_custom_call.1} parent=1 // loop_footer
      %s27 = sadd.s32 1, %s23
    $region7: #{tpu_custom_call.1} parent=1 // loop_footer_branch
      %22 = sbr.rel target = $region3
    $region8: #{tpu_custom_call.1} parent=1 // loop_exit
      _
    %3888 = vsyncpa [#allocation7], 1
    %s3889 = scalar_lea.sflag [#allocation7], 1
    %3890 = vsyncpa %s3889, 1
    %3891 = vsyncpa [#allocation8], 1
    %s3892 = scalar_lea.sflag [#allocation8], 1
    %3893 = vsyncpa %s3892, 1

</llo_original>
